<compile_context>
chip_gen: v7x
topology: tpu7x:2x2x1
jax: 0.10.0
libtpu: 0.0.40
codegen_flags: <defaults>
</compile_context>

<pallas_src>
import functools
import jax
import jax.numpy as jnp
from jax import lax
from jax.experimental import pallas as pl
from jax.experimental.pallas import tpu as pltpu

# ---------------- model hyper-params (small, deterministic) ----------------
N, C, H, W = 8, 4, 16, 16      # 8 instance images, NCHW
HW = H * W
C_PAD = 8                      # channels zero-padded to the f32 sublane tile
K_CONV = 9 * C_PAD             # contraction dim of the shifted-tap conv matmul
W_SHIFT = 4                    # log2(W)
HW_SHIFT = 8                   # log2(HW)
NF = 64                        # self.nf (encoder feature dim)
NUM_CLASSES = 1
FEAT_DIM = 128
INS_HID = 256                  # ins_classifier hidden width
PROJ_HID1 = 512                # projector first hidden width
PROJ_HID2 = 256                # projector second hidden width
BN_EPS = 1e-5


# =========================== Pallas kernel ==================================

def fused_forward_kernel(x_ref, wconv_ref, cb_ref, w1_ref, b1_ref,
                         iw2_ref, ib2_ref, pw2_ref, pb2_ref, pw3_ref, pb3_ref,
                         out_ref):
    """Fully fused forward: conv3x3(+bias,ReLU) + global-avg-pool + both heads.

    x_ref:  (C_PAD, N*HW) f32     channels-major image, rows C..C_PAD-1 are zero
    wconv_ref: (NF, 9*C_PAD) bf16 conv weights, column order (dy, dx, c_pad)
    cb_ref: (NF, 1) f32           conv bias
    w1_ref: (NF, INS_HID+PROJ_HID1) bf16, b1_ref: (1, 768) f32   [BN folded, heads fused]
    iw2_ref: (1, INS_HID) f32, ib2_ref: (1, 1) f32               ins tail (VPU)
    pw2_ref: (PROJ_HID1, PROJ_HID2) bf16, pb2_ref: (1, 256) f32  [BN folded]
    pw3_ref: (PROJ_HID2, FEAT_DIM) bf16,  pb3_ref: (1, 128) f32
    out_ref: (N, 2*FEAT_DIM) f32  [:, :128] = proj, [:, 128:] = instance logit (broadcast)
    """
    x = x_ref[...]                                   # (C_PAD, N*HW) f32
    npix = x.shape[1]
    n_img = npix // HW

    # ---- im2col built in VMEM via lane rolls + masks (no HBM patches array) ----
    lane = lax.broadcasted_iota(jnp.int32, x.shape, 1)
    p = lane & (HW - 1)                              # pixel index within an image
    w = p & (W - 1)                                  # pixel column
    h = p >> W_SHIFT                                 # pixel row

    pieces = []
    for dy in range(3):
        for dx in range(3):
            off = (dy - 1) * W + (dx - 1)
            rolled = x if off == 0 else pltpu.roll(x, shift=(-off) % npix, axis=1)
            hh = h + (dy - 1)
            ww = w + (dx - 1)
            valid = (hh >= 0) & (hh < H) & (ww >= 0) & (ww < W)
            pieces.append(jnp.where(valid, rolled, 0.0))
    # 8-row (tile-aligned) pieces -> clean sublane concat, then one bf16 cast
    xall = jnp.concatenate(pieces, axis=0).astype(jnp.bfloat16)     # (72, N*HW)

    # ---- encoder conv (+bias, ReLU) as a single MXU matmul, f32 accumulation ----
    yt = jnp.dot(wconv_ref[...], xall, preferred_element_type=jnp.float32)
    yt = jnp.maximum(yt + cb_ref[...], 0.0)          # (NF, N*HW)

    # ---- AdaptiveAvgPool2d((1,1)): in-kernel 1/HW mask from iota, contract pixels ----
    row = lax.broadcasted_iota(jnp.int32, (n_img, npix), 0)
    col = lax.broadcasted_iota(jnp.int32, (n_img, npix), 1)
    pool = jnp.where((col >> HW_SHIFT) == row, 1.0 / HW, 0.0)       # (N, N*HW)
    feats = lax.dot_general(pool, yt, (((1,), (1,)), ((), ())),
                            preferred_element_type=jnp.float32)     # (N, NF)

    # ---- fused first layers of ins_classifier + projector (BN folded) ----
    h1 = jnp.dot(feats.astype(jnp.bfloat16), w1_ref[...],
                 preferred_element_type=jnp.float32) + b1_ref[...]
    h1 = jnp.maximum(h1, 0.0)                        # (N, 768)
    h_ins = h1[:, :INS_HID]                          # (N, 256)
    h_proj = h1[:, INS_HID:]                         # (N, 512)

    # ---- ins_classifier tail: Dropout(eval)=id -> Linear(256, 1) on the VPU ----
    ins = jnp.sum(h_ins * iw2_ref[...], axis=1, keepdims=True) + ib2_ref[...]   # (N, 1)

    # ---- projector tail: Linear->(BN folded)->ReLU->Linear, then F.normalize ----
    g = jnp.dot(h_proj.astype(jnp.bfloat16), pw2_ref[...],
                preferred_element_type=jnp.float32) + pb2_ref[...]
    g = jnp.maximum(g, 0.0)
    z = jnp.dot(g.astype(jnp.bfloat16), pw3_ref[...],
                preferred_element_type=jnp.float32) + pb3_ref[...]
    sumsq = jnp.sum(z * z, axis=1, keepdims=True)
    # F.normalize eps=1e-12 on the norm  <=>  clamp sumsq at 1e-24
    proj = z * lax.rsqrt(jnp.maximum(sumsq, 1e-24))

    # ---- single lane-dense store: no (N,1) masked stores ----
    out_ref[...] = jnp.concatenate(
        [proj, jnp.broadcast_to(ins, (n_img, FEAT_DIM))], axis=1)


# ============================ wrappers ======================================

def _vmem():
    return pl.BlockSpec(memory_space=pltpu.MemorySpace.VMEM)


def _fold_bn(w, b, gamma, beta, mean, var):
    """Fold eval-mode BatchNorm1d into the preceding Linear.  w: (din, dout)."""
    scale = gamma * lax.rsqrt(var + BN_EPS)                    # (1, dout)
    return w * scale, (b - mean) * scale + beta


def prepare_params(params):
    """Hoisted parameter prep (call ONCE, reuse across forwards):
    fold BNs, fuse the two first-layer GEMMs, lay out conv weights for the
    in-kernel shifted-tap matmul, cast matmul weights to bf16 (biases stay f32)."""
    conv_w, conv_b = params["conv_w"], params["conv_b"]
    # (NF, C, 3, 3) -> (NF, 3, 3, C_PAD) -> (NF, 9*C_PAD), column order (dy, dx, c_pad)
    wk = jnp.transpose(conv_w, (0, 2, 3, 1))
    wk = jnp.pad(wk, ((0, 0), (0, 0), (0, 0), (0, C_PAD - C)))
    wconv = wk.reshape(NF, K_CONV).astype(jnp.bfloat16)
    cb = conv_b.reshape(NF, 1).astype(jnp.float32)

    iw1, ib1, ig1, ibe1, im1, iv1, iw2, ib2 = params["ins"]
    (pw1, pb1, pg1, pbe1, pm1, pv1,
     pw2, pb2, pg2, pbe2, pm2, pv2, pw3, pb3) = params["proj"]

    iw1f, ib1f = _fold_bn(iw1, ib1, ig1, ibe1, im1, iv1)
    pw1f, pb1f = _fold_bn(pw1, pb1, pg1, pbe1, pm1, pv1)
    pw2f, pb2f = _fold_bn(pw2, pb2, pg2, pbe2, pm2, pv2)

    w1c = jnp.concatenate([iw1f, pw1f], axis=1).astype(jnp.bfloat16)   # (NF, 768)
    b1c = jnp.concatenate([ib1f, pb1f], axis=1).astype(jnp.float32)    # (1, 768)
    iw2row = iw2.reshape(1, INS_HID).astype(jnp.float32)               # (1, 256)
    ib2s = ib2.reshape(1, 1).astype(jnp.float32)

    return (wconv, cb, w1c, b1c, iw2row, ib2s,
            pw2f.astype(jnp.bfloat16), pb2f.astype(jnp.float32),
            pw3.astype(jnp.bfloat16), pb3.astype(jnp.float32))


@functools.partial(jax.jit, static_argnames=("projector", "pred_on"))
def embedding_model_forward(bags, prepped, projector=True, pred_on=False):
    """Mirrors Embeddingmodel.forward(bags, projector, pred_on) for pred_on=False."""
    del pred_on  # pred_on=True (Linear_Classifier aggregation) not implemented
    n = bags.shape[0]

    # channels-major, sublane-padded layout: (C_PAD, N*H*W) — exactly what the kernel rolls
    x = jnp.transpose(bags, (1, 0, 2, 3)).reshape(C, n * H * W)
    x = jnp.pad(x, ((0, C_PAD - C), (0, 0)))

    out = pl.pallas_call(
        fused_forward_kernel,
        out_shape=jax.ShapeDtypeStruct((n, 2 * FEAT_DIM), jnp.float32),
        in_specs=[_vmem()] * 11,
        out_specs=_vmem(),
    )(x, *prepped)

    instance_pred = out[:, FEAT_DIM]            # (N,) == instance_predictions.squeeze()
    proj = out[:, :FEAT_DIM] if projector else None
    bag_pred = None
    bag_instance_predictions = None
    return (bag_pred, bag_instance_predictions, instance_pred, proj)


# ============================ param init ====================================

def init_params(key):
    ks = jax.random.split(key, 16)

    def lin(k, din, dout, scale=0.05):
        kw, kb = jax.random.split(k)
        return (jax.random.normal(kw, (din, dout), jnp.float32) * scale,
                jax.random.normal(kb, (1, dout), jnp.float32) * scale)

    def bn(k, d):
        k1, k2, k3, k4 = jax.random.split(k, 4)
        gamma = 1.0 + 0.1 * jax.random.normal(k1, (1, d), jnp.float32)
        beta = 0.1 * jax.random.normal(k2, (1, d), jnp.float32)
        rmean = 0.1 * jax.random.normal(k3, (1, d), jnp.float32)
        rvar = jax.random.uniform(k4, (1, d), jnp.float32, 0.5, 1.5)
        return gamma, beta, rmean, rvar

    conv_w = jax.random.normal(ks[0], (NF, C, 3, 3), jnp.float32) * 0.1
    conv_b = jax.random.normal(ks[1], (NF,), jnp.float32) * 0.05

    iw1, ib1 = lin(ks[2], NF, INS_HID)
    ig1, ibe1, im1, iv1 = bn(ks[3], INS_HID)
    iw2, ib2 = lin(ks[4], INS_HID, NUM_CLASSES)
    ins = (iw1, ib1, ig1, ibe1, im1, iv1, iw2, ib2)

    pw1, pb1 = lin(ks[5], NF, PROJ_HID1)
    pg1, pbe1, pm1, pv1 = bn(ks[6], PROJ_HID1)
    pw2, pb2 = lin(ks[7], PROJ_HID1, PROJ_HID2)
    pg2, pbe2, pm2, pv2 = bn(ks[8], PROJ_HID2)
    pw3, pb3 = lin(ks[9], PROJ_HID2, FEAT_DIM)
    proj = (pw1, pb1, pg1, pbe1, pm1, pv1,
            pw2, pb2, pg2, pbe2, pm2, pv2,
            pw3, pb3)

    return {"conv_w": conv_w, "conv_b": conv_b, "ins": ins, "proj": proj}


# ======================== pure-JAX reference (sanity) =======================

def reference_forward(x, params):
    # encoder via lax.conv (independent of the shifted-tap path used in the kernel)
    y = lax.conv_general_dilated(x, params["conv_w"], (1, 1), "SAME",
                                 dimension_numbers=("NCHW", "OIHW", "NCHW"))
    y = jnp.maximum(y + params["conv_b"][None, :, None, None], 0.0)
    feats = jnp.mean(y, axis=(2, 3))                           # (N, NF)

    def bn_apply(h, g, b, m, v):
        return g * (h - m) / jnp.sqrt(v + BN_EPS) + b

    iw1, ib1, ig1, ibe1, im1, iv1, iw2, ib2 = params["ins"]
    h = jnp.maximum(bn_apply(feats @ iw1 + ib1, ig1, ibe1, im1, iv1), 0.0)
    ins_pred = h @ iw2 + ib2

    (pw1, pb1, pg1, pbe1, pm1, pv1,
     pw2, pb2, pg2, pbe2, pm2, pv2, pw3, pb3) = params["proj"]
    h = jnp.maximum(bn_apply(feats @ pw1 + pb1, pg1, pbe1, pm1, pv1), 0.0)
    h = jnp.maximum(bn_apply(h @ pw2 + pb2, pg2, pbe2, pm2, pv2), 0.0)
    z = h @ pw3 + pb3
    proj = z / jnp.maximum(jnp.linalg.norm(z, axis=1, keepdims=True), 1e-12)
    return jnp.squeeze(ins_pred), proj


# ================================ main ======================================

if __name__ == "__main__":
    bags = jax.random.normal(jax.random.PRNGKey(0), (N, C, H, W), jnp.float32)
    params = init_params(jax.random.PRNGKey(42))
    prepped = prepare_params(params)            # hoisted: runs once, not per forward

    bag_pred, bag_ins_pred, instance_pred, proj = embedding_model_forward(
        bags, prepped, projector=True, pred_on=False)
    jax.block_until_ready((instance_pred, proj))

    assert bag_pred is None and bag_ins_pred is None
    assert instance_pred.shape == (N,)
    assert proj.shape == (N, FEAT_DIM)

    ref_ins, ref_proj = reference_forward(bags, params)
    # bf16 matmul operands (f32 accumulation) -> relaxed tolerance vs the f32 reference
    assert jnp.allclose(instance_pred, ref_ins, atol=2e-2, rtol=2e-2)
    assert jnp.allclose(proj, ref_proj, atol=2e-2, rtol=2e-2)

    print("KERNEL_OK")
</pallas_src>

<mosaic_0001>
module attributes {stable_mosaic.version = 11 : i64} {
  func.func @fused_forward_kernel(%arg0: memref<8x2048xf32, #tpu.memory_space<vmem>>, %arg1: memref<64x72xbf16, #tpu.memory_space<vmem>>, %arg2: memref<64x1xf32, #tpu.memory_space<vmem>>, %arg3: memref<64x768xbf16, #tpu.memory_space<vmem>>, %arg4: memref<1x768xf32, #tpu.memory_space<vmem>>, %arg5: memref<1x256xf32, #tpu.memory_space<vmem>>, %arg6: memref<1x1xf32, #tpu.memory_space<vmem>>, %arg7: memref<512x256xbf16, #tpu.memory_space<vmem>>, %arg8: memref<1x256xf32, #tpu.memory_space<vmem>>, %arg9: memref<256x128xbf16, #tpu.memory_space<vmem>>, %arg10: memref<1x128xf32, #tpu.memory_space<vmem>>, %arg11: memref<8x256xf32, #tpu.memory_space<vmem>>) attributes {dimension_semantics = [], scalar_prefetch = 0 : i64, scratch_operands = 0 : i64, tpu.core_type = #tpu.core_type<tc>} {
    %c0 = arith.constant 0 : index
    %c0_0 = arith.constant 0 : index
    %0 = vector.load %arg0[%c0, %c0_0] : memref<8x2048xf32, #tpu.memory_space<vmem>>, vector<8x2048xf32>
    %1 = tpu.iota {dimensions = array<i32: 1>} : vector<8x2048xi32>
    %c255_i32 = arith.constant 255 : i32
    %2 = vector.broadcast %c255_i32 : i32 to vector<8x2048xi32>
    %3 = arith.andi %1, %2 : vector<8x2048xi32>
    %c15_i32 = arith.constant 15 : i32
    %4 = vector.broadcast %c15_i32 : i32 to vector<8x2048xi32>
    %5 = arith.andi %3, %4 : vector<8x2048xi32>
    %c4_i32 = arith.constant 4 : i32
    %6 = vector.broadcast %c4_i32 : i32 to vector<8x2048xi32>
    %7 = arith.shrsi %3, %6 : vector<8x2048xi32>
    %c17_i32 = arith.constant 17 : i32
    %8 = tpu.dynamic_rotate %0 by %c17_i32 dim 1 : vector<8x2048xf32>, i32 -> vector<8x2048xf32>
    %c-1_i32 = arith.constant -1 : i32
    %9 = vector.broadcast %c-1_i32 : i32 to vector<8x2048xi32>
    %10 = arith.addi %7, %9 : vector<8x2048xi32>
    %c-1_i32_1 = arith.constant -1 : i32
    %11 = vector.broadcast %c-1_i32_1 : i32 to vector<8x2048xi32>
    %12 = arith.addi %5, %11 : vector<8x2048xi32>
    %c0_i32 = arith.constant 0 : i32
    %13 = vector.broadcast %c0_i32 : i32 to vector<8x2048xi32>
    %14 = arith.cmpi sge, %10, %13 : vector<8x2048xi32>
    %c16_i32 = arith.constant 16 : i32
    %15 = vector.broadcast %c16_i32 : i32 to vector<8x2048xi32>
    %16 = arith.cmpi slt, %10, %15 : vector<8x2048xi32>
    %17 = arith.andi %14, %16 : vector<8x2048xi1>
    %c0_i32_2 = arith.constant 0 : i32
    %18 = vector.broadcast %c0_i32_2 : i32 to vector<8x2048xi32>
    %19 = arith.cmpi sge, %12, %18 : vector<8x2048xi32>
    %20 = arith.andi %17, %19 : vector<8x2048xi1>
    %c16_i32_3 = arith.constant 16 : i32
    %21 = vector.broadcast %c16_i32_3 : i32 to vector<8x2048xi32>
    %22 = arith.cmpi slt, %12, %21 : vector<8x2048xi32>
    %23 = arith.andi %20, %22 : vector<8x2048xi1>
    %cst = arith.constant 0.000000e+00 : f32
    %24 = vector.broadcast %cst : f32 to vector<8x2048xf32>
    %25 = arith.select %23, %8, %24 : vector<8x2048xi1>, vector<8x2048xf32>
    %c16_i32_4 = arith.constant 16 : i32
    %26 = tpu.dynamic_rotate %0 by %c16_i32_4 dim 1 : vector<8x2048xf32>, i32 -> vector<8x2048xf32>
    %c-1_i32_5 = arith.constant -1 : i32
    %27 = vector.broadcast %c-1_i32_5 : i32 to vector<8x2048xi32>
    %28 = arith.addi %7, %27 : vector<8x2048xi32>
    %c0_i32_6 = arith.constant 0 : i32
    %29 = vector.broadcast %c0_i32_6 : i32 to vector<8x2048xi32>
    %30 = arith.addi %5, %29 : vector<8x2048xi32>
    %c0_i32_7 = arith.constant 0 : i32
    %31 = vector.broadcast %c0_i32_7 : i32 to vector<8x2048xi32>
    %32 = arith.cmpi sge, %28, %31 : vector<8x2048xi32>
    %c16_i32_8 = arith.constant 16 : i32
    %33 = vector.broadcast %c16_i32_8 : i32 to vector<8x2048xi32>
    %34 = arith.cmpi slt, %28, %33 : vector<8x2048xi32>
    %35 = arith.andi %32, %34 : vector<8x2048xi1>
    %c0_i32_9 = arith.constant 0 : i32
    %36 = vector.broadcast %c0_i32_9 : i32 to vector<8x2048xi32>
    %37 = arith.cmpi sge, %30, %36 : vector<8x2048xi32>
    %38 = arith.andi %35, %37 : vector<8x2048xi1>
    %c16_i32_10 = arith.constant 16 : i32
    %39 = vector.broadcast %c16_i32_10 : i32 to vector<8x2048xi32>
    %40 = arith.cmpi slt, %30, %39 : vector<8x2048xi32>
    %41 = arith.andi %38, %40 : vector<8x2048xi1>
    %cst_11 = arith.constant 0.000000e+00 : f32
    %42 = vector.broadcast %cst_11 : f32 to vector<8x2048xf32>
    %43 = arith.select %41, %26, %42 : vector<8x2048xi1>, vector<8x2048xf32>
    %c15_i32_12 = arith.constant 15 : i32
    %44 = tpu.dynamic_rotate %0 by %c15_i32_12 dim 1 : vector<8x2048xf32>, i32 -> vector<8x2048xf32>
    %c-1_i32_13 = arith.constant -1 : i32
    %45 = vector.broadcast %c-1_i32_13 : i32 to vector<8x2048xi32>
    %46 = arith.addi %7, %45 : vector<8x2048xi32>
    %c1_i32 = arith.constant 1 : i32
    %47 = vector.broadcast %c1_i32 : i32 to vector<8x2048xi32>
    %48 = arith.addi %5, %47 : vector<8x2048xi32>
    %c0_i32_14 = arith.constant 0 : i32
    %49 = vector.broadcast %c0_i32_14 : i32 to vector<8x2048xi32>
    %50 = arith.cmpi sge, %46, %49 : vector<8x2048xi32>
    %c16_i32_15 = arith.constant 16 : i32
    %51 = vector.broadcast %c16_i32_15 : i32 to vector<8x2048xi32>
    %52 = arith.cmpi slt, %46, %51 : vector<8x2048xi32>
    %53 = arith.andi %50, %52 : vector<8x2048xi1>
    %c0_i32_16 = arith.constant 0 : i32
    %54 = vector.broadcast %c0_i32_16 : i32 to vector<8x2048xi32>
    %55 = arith.cmpi sge, %48, %54 : vector<8x2048xi32>
    %56 = arith.andi %53, %55 : vector<8x2048xi1>
    %c16_i32_17 = arith.constant 16 : i32
    %57 = vector.broadcast %c16_i32_17 : i32 to vector<8x2048xi32>
    %58 = arith.cmpi slt, %48, %57 : vector<8x2048xi32>
    %59 = arith.andi %56, %58 : vector<8x2048xi1>
    %cst_18 = arith.constant 0.000000e+00 : f32
    %60 = vector.broadcast %cst_18 : f32 to vector<8x2048xf32>
    %61 = arith.select %59, %44, %60 : vector<8x2048xi1>, vector<8x2048xf32>
    %c1_i32_19 = arith.constant 1 : i32
    %62 = tpu.dynamic_rotate %0 by %c1_i32_19 dim 1 : vector<8x2048xf32>, i32 -> vector<8x2048xf32>
    %c0_i32_20 = arith.constant 0 : i32
    %63 = vector.broadcast %c0_i32_20 : i32 to vector<8x2048xi32>
    %64 = arith.addi %7, %63 : vector<8x2048xi32>
    %c-1_i32_21 = arith.constant -1 : i32
    %65 = vector.broadcast %c-1_i32_21 : i32 to vector<8x2048xi32>
    %66 = arith.addi %5, %65 : vector<8x2048xi32>
    %c0_i32_22 = arith.constant 0 : i32
    %67 = vector.broadcast %c0_i32_22 : i32 to vector<8x2048xi32>
    %68 = arith.cmpi sge, %64, %67 : vector<8x2048xi32>
    %c16_i32_23 = arith.constant 16 : i32
    %69 = vector.broadcast %c16_i32_23 : i32 to vector<8x2048xi32>
    %70 = arith.cmpi slt, %64, %69 : vector<8x2048xi32>
    %71 = arith.andi %68, %70 : vector<8x2048xi1>
    %c0_i32_24 = arith.constant 0 : i32
    %72 = vector.broadcast %c0_i32_24 : i32 to vector<8x2048xi32>
    %73 = arith.cmpi sge, %66, %72 : vector<8x2048xi32>
    %74 = arith.andi %71, %73 : vector<8x2048xi1>
    %c16_i32_25 = arith.constant 16 : i32
    %75 = vector.broadcast %c16_i32_25 : i32 to vector<8x2048xi32>
    %76 = arith.cmpi slt, %66, %75 : vector<8x2048xi32>
    %77 = arith.andi %74, %76 : vector<8x2048xi1>
    %cst_26 = arith.constant 0.000000e+00 : f32
    %78 = vector.broadcast %cst_26 : f32 to vector<8x2048xf32>
    %79 = arith.select %77, %62, %78 : vector<8x2048xi1>, vector<8x2048xf32>
    %c0_i32_27 = arith.constant 0 : i32
    %80 = vector.broadcast %c0_i32_27 : i32 to vector<8x2048xi32>
    %81 = arith.addi %7, %80 : vector<8x2048xi32>
    %c0_i32_28 = arith.constant 0 : i32
    %82 = vector.broadcast %c0_i32_28 : i32 to vector<8x2048xi32>
    %83 = arith.addi %5, %82 : vector<8x2048xi32>
    %c0_i32_29 = arith.constant 0 : i32
    %84 = vector.broadcast %c0_i32_29 : i32 to vector<8x2048xi32>
    %85 = arith.cmpi sge, %81, %84 : vector<8x2048xi32>
    %c16_i32_30 = arith.constant 16 : i32
    %86 = vector.broadcast %c16_i32_30 : i32 to vector<8x2048xi32>
    %87 = arith.cmpi slt, %81, %86 : vector<8x2048xi32>
    %88 = arith.andi %85, %87 : vector<8x2048xi1>
    %c0_i32_31 = arith.constant 0 : i32
    %89 = vector.broadcast %c0_i32_31 : i32 to vector<8x2048xi32>
    %90 = arith.cmpi sge, %83, %89 : vector<8x2048xi32>
    %91 = arith.andi %88, %90 : vector<8x2048xi1>
    %c16_i32_32 = arith.constant 16 : i32
    %92 = vector.broadcast %c16_i32_32 : i32 to vector<8x2048xi32>
    %93 = arith.cmpi slt, %83, %92 : vector<8x2048xi32>
    %94 = arith.andi %91, %93 : vector<8x2048xi1>
    %cst_33 = arith.constant 0.000000e+00 : f32
    %95 = vector.broadcast %cst_33 : f32 to vector<8x2048xf32>
    %96 = arith.select %94, %0, %95 : vector<8x2048xi1>, vector<8x2048xf32>
    %c2047_i32 = arith.constant 2047 : i32
    %97 = tpu.dynamic_rotate %0 by %c2047_i32 dim 1 : vector<8x2048xf32>, i32 -> vector<8x2048xf32>
    %c0_i32_34 = arith.constant 0 : i32
    %98 = vector.broadcast %c0_i32_34 : i32 to vector<8x2048xi32>
    %99 = arith.addi %7, %98 : vector<8x2048xi32>
    %c1_i32_35 = arith.constant 1 : i32
    %100 = vector.broadcast %c1_i32_35 : i32 to vector<8x2048xi32>
    %101 = arith.addi %5, %100 : vector<8x2048xi32>
    %c0_i32_36 = arith.constant 0 : i32
    %102 = vector.broadcast %c0_i32_36 : i32 to vector<8x2048xi32>
    %103 = arith.cmpi sge, %99, %102 : vector<8x2048xi32>
    %c16_i32_37 = arith.constant 16 : i32
    %104 = vector.broadcast %c16_i32_37 : i32 to vector<8x2048xi32>
    %105 = arith.cmpi slt, %99, %104 : vector<8x2048xi32>
    %106 = arith.andi %103, %105 : vector<8x2048xi1>
    %c0_i32_38 = arith.constant 0 : i32
    %107 = vector.broadcast %c0_i32_38 : i32 to vector<8x2048xi32>
    %108 = arith.cmpi sge, %101, %107 : vector<8x2048xi32>
    %109 = arith.andi %106, %108 : vector<8x2048xi1>
    %c16_i32_39 = arith.constant 16 : i32
    %110 = vector.broadcast %c16_i32_39 : i32 to vector<8x2048xi32>
    %111 = arith.cmpi slt, %101, %110 : vector<8x2048xi32>
    %112 = arith.andi %109, %111 : vector<8x2048xi1>
    %cst_40 = arith.constant 0.000000e+00 : f32
    %113 = vector.broadcast %cst_40 : f32 to vector<8x2048xf32>
    %114 = arith.select %112, %97, %113 : vector<8x2048xi1>, vector<8x2048xf32>
    %c2033_i32 = arith.constant 2033 : i32
    %115 = tpu.dynamic_rotate %0 by %c2033_i32 dim 1 : vector<8x2048xf32>, i32 -> vector<8x2048xf32>
    %c1_i32_41 = arith.constant 1 : i32
    %116 = vector.broadcast %c1_i32_41 : i32 to vector<8x2048xi32>
    %117 = arith.addi %7, %116 : vector<8x2048xi32>
    %c-1_i32_42 = arith.constant -1 : i32
    %118 = vector.broadcast %c-1_i32_42 : i32 to vector<8x2048xi32>
    %119 = arith.addi %5, %118 : vector<8x2048xi32>
    %c0_i32_43 = arith.constant 0 : i32
    %120 = vector.broadcast %c0_i32_43 : i32 to vector<8x2048xi32>
    %121 = arith.cmpi sge, %117, %120 : vector<8x2048xi32>
    %c16_i32_44 = arith.constant 16 : i32
    %122 = vector.broadcast %c16_i32_44 : i32 to vector<8x2048xi32>
    %123 = arith.cmpi slt, %117, %122 : vector<8x2048xi32>
    %124 = arith.andi %121, %123 : vector<8x2048xi1>
    %c0_i32_45 = arith.constant 0 : i32
    %125 = vector.broadcast %c0_i32_45 : i32 to vector<8x2048xi32>
    %126 = arith.cmpi sge, %119, %125 : vector<8x2048xi32>
    %127 = arith.andi %124, %126 : vector<8x2048xi1>
    %c16_i32_46 = arith.constant 16 : i32
    %128 = vector.broadcast %c16_i32_46 : i32 to vector<8x2048xi32>
    %129 = arith.cmpi slt, %119, %128 : vector<8x2048xi32>
    %130 = arith.andi %127, %129 : vector<8x2048xi1>
    %cst_47 = arith.constant 0.000000e+00 : f32
    %131 = vector.broadcast %cst_47 : f32 to vector<8x2048xf32>
    %132 = arith.select %130, %115, %131 : vector<8x2048xi1>, vector<8x2048xf32>
    %c2032_i32 = arith.constant 2032 : i32
    %133 = tpu.dynamic_rotate %0 by %c2032_i32 dim 1 : vector<8x2048xf32>, i32 -> vector<8x2048xf32>
    %c1_i32_48 = arith.constant 1 : i32
    %134 = vector.broadcast %c1_i32_48 : i32 to vector<8x2048xi32>
    %135 = arith.addi %7, %134 : vector<8x2048xi32>
    %c0_i32_49 = arith.constant 0 : i32
    %136 = vector.broadcast %c0_i32_49 : i32 to vector<8x2048xi32>
    %137 = arith.addi %5, %136 : vector<8x2048xi32>
    %c0_i32_50 = arith.constant 0 : i32
    %138 = vector.broadcast %c0_i32_50 : i32 to vector<8x2048xi32>
    %139 = arith.cmpi sge, %135, %138 : vector<8x2048xi32>
    %c16_i32_51 = arith.constant 16 : i32
    %140 = vector.broadcast %c16_i32_51 : i32 to vector<8x2048xi32>
    %141 = arith.cmpi slt, %135, %140 : vector<8x2048xi32>
    %142 = arith.andi %139, %141 : vector<8x2048xi1>
    %c0_i32_52 = arith.constant 0 : i32
    %143 = vector.broadcast %c0_i32_52 : i32 to vector<8x2048xi32>
    %144 = arith.cmpi sge, %137, %143 : vector<8x2048xi32>
    %145 = arith.andi %142, %144 : vector<8x2048xi1>
    %c16_i32_53 = arith.constant 16 : i32
    %146 = vector.broadcast %c16_i32_53 : i32 to vector<8x2048xi32>
    %147 = arith.cmpi slt, %137, %146 : vector<8x2048xi32>
    %148 = arith.andi %145, %147 : vector<8x2048xi1>
    %cst_54 = arith.constant 0.000000e+00 : f32
    %149 = vector.broadcast %cst_54 : f32 to vector<8x2048xf32>
    %150 = arith.select %148, %133, %149 : vector<8x2048xi1>, vector<8x2048xf32>
    %c2031_i32 = arith.constant 2031 : i32
    %151 = tpu.dynamic_rotate %0 by %c2031_i32 dim 1 : vector<8x2048xf32>, i32 -> vector<8x2048xf32>
    %c1_i32_55 = arith.constant 1 : i32
    %152 = vector.broadcast %c1_i32_55 : i32 to vector<8x2048xi32>
    %153 = arith.addi %7, %152 : vector<8x2048xi32>
    %c1_i32_56 = arith.constant 1 : i32
    %154 = vector.broadcast %c1_i32_56 : i32 to vector<8x2048xi32>
    %155 = arith.addi %5, %154 : vector<8x2048xi32>
    %c0_i32_57 = arith.constant 0 : i32
    %156 = vector.broadcast %c0_i32_57 : i32 to vector<8x2048xi32>
    %157 = arith.cmpi sge, %153, %156 : vector<8x2048xi32>
    %c16_i32_58 = arith.constant 16 : i32
    %158 = vector.broadcast %c16_i32_58 : i32 to vector<8x2048xi32>
    %159 = arith.cmpi slt, %153, %158 : vector<8x2048xi32>
    %160 = arith.andi %157, %159 : vector<8x2048xi1>
    %c0_i32_59 = arith.constant 0 : i32
    %161 = vector.broadcast %c0_i32_59 : i32 to vector<8x2048xi32>
    %162 = arith.cmpi sge, %155, %161 : vector<8x2048xi32>
    %163 = arith.andi %160, %162 : vector<8x2048xi1>
    %c16_i32_60 = arith.constant 16 : i32
    %164 = vector.broadcast %c16_i32_60 : i32 to vector<8x2048xi32>
    %165 = arith.cmpi slt, %155, %164 : vector<8x2048xi32>
    %166 = arith.andi %163, %165 : vector<8x2048xi1>
    %cst_61 = arith.constant 0.000000e+00 : f32
    %167 = vector.broadcast %cst_61 : f32 to vector<8x2048xf32>
    %168 = arith.select %166, %151, %167 : vector<8x2048xi1>, vector<8x2048xf32>
    %169 = tpu.concatenate %25, %43, %61, %79, %96, %114, %132, %150, %168 in 0 : vector<8x2048xf32>, vector<8x2048xf32>, vector<8x2048xf32>, vector<8x2048xf32>, vector<8x2048xf32>, vector<8x2048xf32>, vector<8x2048xf32>, vector<8x2048xf32>, vector<8x2048xf32> -> vector<72x2048xf32>
    %170 = arith.truncf %169 : vector<72x2048xf32> to vector<72x2048xbf16>
    %c0_62 = arith.constant 0 : index
    %c0_63 = arith.constant 0 : index
    %171 = vector.load %arg1[%c0_62, %c0_63] : memref<64x72xbf16, #tpu.memory_space<vmem>>, vector<64x72xbf16>
    %cst_64 = arith.constant dense<0.000000e+00> : vector<64x2048xf32>
    %172 = tpu.matmul %171, %170, %cst_64 {dimension_numbers = #tpu.dot_dimension_numbers<[1], [0], [0], [1], [0, 0, 1, 1], [], []>} : vector<64x72xbf16>, vector<72x2048xbf16>, vector<64x2048xf32> -> vector<64x2048xf32>
    %c0_65 = arith.constant 0 : index
    %c0_66 = arith.constant 0 : index
    %173 = vector.load %arg2[%c0_65, %c0_66] : memref<64x1xf32, #tpu.memory_space<vmem>>, vector<64x1xf32>
    %174 = vector.broadcast %173 : vector<64x1xf32> to vector<64x2048xf32>
    %175 = arith.addf %172, %174 : vector<64x2048xf32>
    %cst_67 = arith.constant 0.000000e+00 : f32
    %176 = vector.broadcast %cst_67 : f32 to vector<64x2048xf32>
    %177 = arith.maximumf %175, %176 : vector<64x2048xf32>
    %178 = tpu.iota {dimensions = array<i32: 0>} : vector<8x2048xi32>
    %179 = tpu.iota {dimensions = array<i32: 1>} : vector<8x2048xi32>
    %c8_i32 = arith.constant 8 : i32
    %180 = vector.broadcast %c8_i32 : i32 to vector<8x2048xi32>
    %181 = arith.shrsi %179, %180 : vector<8x2048xi32>
    %182 = arith.cmpi eq, %181, %178 : vector<8x2048xi32>
    %cst_68 = arith.constant 3.906250e-03 : f32
    %cst_69 = arith.constant 0.000000e+00 : f32
    %183 = vector.broadcast %cst_68 : f32 to vector<8x2048xf32>
    %184 = vector.broadcast %cst_69 : f32 to vector<8x2048xf32>
    %185 = arith.select %182, %183, %184 : vector<8x2048xi1>, vector<8x2048xf32>
    %cst_70 = arith.constant dense<0.000000e+00> : vector<8x64xf32>
    %186 = tpu.matmul %185, %177, %cst_70 {dimension_numbers = #tpu.dot_dimension_numbers<[1], [1], [0], [0], [0, 0, 1, 0], [], []>} : vector<8x2048xf32>, vector<64x2048xf32>, vector<8x64xf32> -> vector<8x64xf32>
    %187 = arith.truncf %186 : vector<8x64xf32> to vector<8x64xbf16>
    %c0_71 = arith.constant 0 : index
    %c0_72 = arith.constant 0 : index
    %188 = vector.load %arg3[%c0_71, %c0_72] : memref<64x768xbf16, #tpu.memory_space<vmem>>, vector<64x768xbf16>
    %cst_73 = arith.constant dense<0.000000e+00> : vector<8x768xf32>
    %189 = tpu.matmul %187, %188, %cst_73 {dimension_numbers = #tpu.dot_dimension_numbers<[1], [0], [0], [1], [0, 0, 1, 1], [], []>} : vector<8x64xbf16>, vector<64x768xbf16>, vector<8x768xf32> -> vector<8x768xf32>
    %c0_74 = arith.constant 0 : index
    %c0_75 = arith.constant 0 : index
    %190 = vector.load %arg4[%c0_74, %c0_75] : memref<1x768xf32, #tpu.memory_space<vmem>>, vector<1x768xf32>
    %191 = vector.broadcast %190 : vector<1x768xf32> to vector<8x768xf32>
    %192 = arith.addf %189, %191 : vector<8x768xf32>
    %cst_76 = arith.constant 0.000000e+00 : f32
    %193 = vector.broadcast %cst_76 : f32 to vector<8x768xf32>
    %194 = arith.maximumf %192, %193 : vector<8x768xf32>
    %195 = vector.extract_strided_slice %194 {offsets = [0, 0], sizes = [8, 256], strides = [1, 1]} : vector<8x768xf32> to vector<8x256xf32>
    %196 = vector.extract_strided_slice %194 {offsets = [0, 256], sizes = [8, 512], strides = [1, 1]} : vector<8x768xf32> to vector<8x512xf32>
    %c0_77 = arith.constant 0 : index
    %c0_78 = arith.constant 0 : index
    %197 = vector.load %arg5[%c0_77, %c0_78] : memref<1x256xf32, #tpu.memory_space<vmem>>, vector<1x256xf32>
    %198 = vector.broadcast %197 : vector<1x256xf32> to vector<8x256xf32>
    %199 = arith.mulf %195, %198 : vector<8x256xf32>
    %cst_79 = arith.constant dense<0.000000e+00> : vector<8xf32>
    %200 = vector.multi_reduction <add>, %199, %cst_79 [1] : vector<8x256xf32> to vector<8xf32>
    %201 = vector.shape_cast %200 : vector<8xf32> to vector<8x1xf32>
    %c0_80 = arith.constant 0 : index
    %c0_81 = arith.constant 0 : index
    %202 = vector.load %arg6[%c0_80, %c0_81] : memref<1x1xf32, #tpu.memory_space<vmem>>, vector<1x1xf32>
    %203 = vector.broadcast %202 : vector<1x1xf32> to vector<8x1xf32>
    %204 = arith.addf %201, %203 : vector<8x1xf32>
    %205 = arith.truncf %196 : vector<8x512xf32> to vector<8x512xbf16>
    %c0_82 = arith.constant 0 : index
    %c0_83 = arith.constant 0 : index
    %206 = vector.load %arg7[%c0_82, %c0_83] : memref<512x256xbf16, #tpu.memory_space<vmem>>, vector<512x256xbf16>
    %cst_84 = arith.constant dense<0.000000e+00> : vector<8x256xf32>
    %207 = tpu.matmul %205, %206, %cst_84 {dimension_numbers = #tpu.dot_dimension_numbers<[1], [0], [0], [1], [0, 0, 1, 1], [], []>} : vector<8x512xbf16>, vector<512x256xbf16>, vector<8x256xf32> -> vector<8x256xf32>
    %c0_85 = arith.constant 0 : index
    %c0_86 = arith.constant 0 : index
    %208 = vector.load %arg8[%c0_85, %c0_86] : memref<1x256xf32, #tpu.memory_space<vmem>>, vector<1x256xf32>
    %209 = vector.broadcast %208 : vector<1x256xf32> to vector<8x256xf32>
    %210 = arith.addf %207, %209 : vector<8x256xf32>
    %cst_87 = arith.constant 0.000000e+00 : f32
    %211 = vector.broadcast %cst_87 : f32 to vector<8x256xf32>
    %212 = arith.maximumf %210, %211 : vector<8x256xf32>
    %213 = arith.truncf %212 : vector<8x256xf32> to vector<8x256xbf16>
    %c0_88 = arith.constant 0 : index
    %c0_89 = arith.constant 0 : index
    %214 = vector.load %arg9[%c0_88, %c0_89] : memref<256x128xbf16, #tpu.memory_space<vmem>>, vector<256x128xbf16>
    %cst_90 = arith.constant dense<0.000000e+00> : vector<8x128xf32>
    %215 = tpu.matmul %213, %214, %cst_90 {dimension_numbers = #tpu.dot_dimension_numbers<[1], [0], [0], [1], [0, 0, 1, 1], [], []>} : vector<8x256xbf16>, vector<256x128xbf16>, vector<8x128xf32> -> vector<8x128xf32>
    %c0_91 = arith.constant 0 : index
    %c0_92 = arith.constant 0 : index
    %216 = vector.load %arg10[%c0_91, %c0_92] : memref<1x128xf32, #tpu.memory_space<vmem>>, vector<1x128xf32>
    %217 = vector.broadcast %216 : vector<1x128xf32> to vector<8x128xf32>
    %218 = arith.addf %215, %217 : vector<8x128xf32>
    %219 = arith.mulf %218, %218 : vector<8x128xf32>
    %cst_93 = arith.constant dense<0.000000e+00> : vector<8xf32>
    %220 = vector.multi_reduction <add>, %219, %cst_93 [1] : vector<8x128xf32> to vector<8xf32>
    %221 = vector.shape_cast %220 : vector<8xf32> to vector<8x1xf32>
    %cst_94 = arith.constant 1.000000e-24 : f32
    %222 = vector.broadcast %cst_94 : f32 to vector<8x1xf32>
    %223 = arith.maximumf %221, %222 : vector<8x1xf32>
    %224 = math.rsqrt %223 : vector<8x1xf32>
    %225 = vector.broadcast %224 : vector<8x1xf32> to vector<8x128xf32>
    %226 = arith.mulf %218, %225 : vector<8x128xf32>
    %227 = vector.shape_cast %204 : vector<8x1xf32> to vector<8x1xf32>
    %228 = vector.broadcast %227 : vector<8x1xf32> to vector<8x128xf32>
    %229 = tpu.concatenate %226, %228 in 1 : vector<8x128xf32>, vector<8x128xf32> -> vector<8x256xf32>
    %c0_95 = arith.constant 0 : index
    %c0_96 = arith.constant 0 : index
    %230 = vector.load %arg11[%c0_95, %c0_96] : memref<8x256xf32, #tpu.memory_space<vmem>>, vector<8x256xf32>
    tpu.vector_store %arg11[%c0_95, %c0_96], %229 {strides = array<i32>} : memref<8x256xf32, #tpu.memory_space<vmem>>, vector<8x256xf32>,
    return
  }
}

</mosaic_0001>

<llo_original>
// kernel: embedding_model_forward.1
$region0: #{embedding_model_forward.1}
  #allocation0 [shape = 'u32[]', space=smem, size = 0x4, offset = 0x4, fixed_abs, tag = 'smem constant byte address 0x4 - core index']
  #allocation1 [shape = 'u32[144,128]{1,0:T(1,128)}', space=vmem, size = 0x12000, scoped, tag = 'internal scratch']
  #allocation2 [shape = 'f32[1,1]{1,0:T(1,128)S(1)}', space=vmem, size = 0x200, scoped, tag = 'scoped memory for embedding_model_forward.1']
  %s0 = inlined_call_operand.vmem [shape: f32[8,2048], index: 0, kind: input, shape index: {}]
  %s1 = inlined_call_operand.vmem [shape: bf16[64,72], index: 1, kind: input, shape index: {}]
  %s2 = inlined_call_operand.vmem [shape: f32[64,1], index: 2, kind: input, shape index: {}]
  %s3 = inlined_call_operand.vmem [shape: bf16[64,768], index: 3, kind: input, shape index: {}]
  %s4 = inlined_call_operand.vmem [shape: f32[1,768], index: 4, kind: input, shape index: {}]
  %s5 = inlined_call_operand.vmem [shape: f32[1,256], index: 5, kind: input, shape index: {}]
  %s6 = inlined_call_operand.<no memory space> [shape: f32[1,1], index: 6, kind: input, shape index: {}]
  %s7 = inlined_call_operand.vmem [shape: bf16[512,256], index: 7, kind: input, shape index: {}]
  %s8 = inlined_call_operand.vmem [shape: f32[1,256], index: 8, kind: input, shape index: {}]
  %s9 = inlined_call_operand.vmem [shape: bf16[256,128], index: 9, kind: input, shape index: {}]
  %s10 = inlined_call_operand.vmem [shape: f32[1,128], index: 10, kind: input, shape index: {}]
  %s11 = inlined_call_operand.vmem [shape: f32[8,256], index: 11, kind: output, shape index: {}]
  %s12 = sld [smem:[#allocation0]]
  $region54: #{embedding_model_forward.1} parent=0
    _
  %s14 = ssub.s32 1, %s12
  %s15 = scalar_select 0, %s14, %s12
  %v16 = vstv %s6
  %17 = vst [vmem:[#allocation2] sm:$0x1] %v16
  // Predicated region
  $region2: #{embedding_model_forward.1} parent=0 // pred_check
    _
  $region3: #{embedding_model_forward.1} parent=0 // pred_check_branch
    %19 = sbr.rel (0) target = $region5
  $region4: #{embedding_model_forward.1} parent=0 // pred_region
    _
  $region5: #{embedding_model_forward.1} parent=0 // pred_fallthru
    _
  // Predicated region
  $region6: #{embedding_model_forward.1} parent=0 // pred_check
    _
  $region7: #{embedding_model_forward.1} parent=0 // pred_check_branch
    %21 = sbr.rel (0) target = $region9
  $region8: #{embedding_model_forward.1} parent=0 // pred_region
    _
  $region9: #{embedding_model_forward.1} parent=0 // pred_fallthru
    _
  // Predicated region
  $region10: #{embedding_model_forward.1} parent=0 // pred_check
    _
  $region11: #{embedding_model_forward.1} parent=0 // pred_check_branch
    %23 = sbr.rel (0) target = $region13
  $region12: #{embedding_model_forward.1} parent=0 // pred_region
    _
  $region13: #{embedding_model_forward.1} parent=0 // pred_fallthru
    _
  // Predicated region
  $region14: #{embedding_model_forward.1} parent=0 // pred_check
    _
  $region15: #{embedding_model_forward.1} parent=0 // pred_check_branch
    %25 = sbr.rel (0) target = $region17
  $region16: #{embedding_model_forward.1} parent=0 // pred_region
    _
  $region17: #{embedding_model_forward.1} parent=0 // pred_fallthru
    _
  // Predicated region
  $region18: #{embedding_model_forward.1} parent=0 // pred_check
    _
  $region19: #{embedding_model_forward.1} parent=0 // pred_check_branch
    %27 = sbr.rel (0) target = $region21
  $region20: #{embedding_model_forward.1} parent=0 // pred_region
    _
  $region21: #{embedding_model_forward.1} parent=0 // pred_fallthru
    _
  // Predicated region
  $region22: #{embedding_model_forward.1} parent=0 // pred_check
    _
  $region23: #{embedding_model_forward.1} parent=0 // pred_check_branch
    %29 = sbr.rel (0) target = $region25
  $region24: #{embedding_model_forward.1} parent=0 // pred_region
    _
  $region25: #{embedding_model_forward.1} parent=0 // pred_fallthru
    _
  // Predicated region
  $region26: #{embedding_model_forward.1} parent=0 // pred_check
    _
  $region27: #{embedding_model_forward.1} parent=0 // pred_check_branch
    %31 = sbr.rel (0) target = $region29
  $region28: #{embedding_model_forward.1} parent=0 // pred_region
    _
  $region29: #{embedding_model_forward.1} parent=0 // pred_fallthru
    _
  // Predicated region
  $region30: #{embedding_model_forward.1} parent=0 // pred_check
    _
  $region31: #{embedding_model_forward.1} parent=0 // pred_check_branch
    %33 = sbr.rel (0) target = $region33
  $region32: #{embedding_model_forward.1} parent=0 // pred_region
    _
  $region33: #{embedding_model_forward.1} parent=0 // pred_fallthru
    _
  // Predicated region
  $region34: #{embedding_model_forward.1} parent=0 // pred_check
    _
  $region35: #{embedding_model_forward.1} parent=0 // pred_check_branch
    %35 = sbr.rel (0) target = $region37
  $region36: #{embedding_model_forward.1} parent=0 // pred_region
    _
  $region37: #{embedding_model_forward.1} parent=0 // pred_fallthru
    _
  // Predicated region
  $region38: #{embedding_model_forward.1} parent=0 // pred_check
    _
  $region39: #{embedding_model_forward.1} parent=0 // pred_check_branch
    %37 = sbr.rel (0) target = $region41
  $region40: #{embedding_model_forward.1} parent=0 // pred_region
    _
  $region41: #{embedding_model_forward.1} parent=0 // pred_fallthru
    _
  // Predicated region
  $region42: #{embedding_model_forward.1} parent=0 // pred_check
    _
  $region43: #{embedding_model_forward.1} parent=0 // pred_check_branch
    %39 = sbr.rel (0) target = $region45
  $region44: #{embedding_model_forward.1} parent=0 // pred_region
    _
  $region45: #{embedding_model_forward.1} parent=0 // pred_fallthru
    _
  %v41 = vld [vmem:[%s0] sm:$0xff]
  %v42 = vld [vmem:[%s0 + $0x8] sm:$0xff]
  %v43 = vld [vmem:[%s0 + $0x10] sm:$0xff]
  %v44 = vld [vmem:[%s0 + $0x18] sm:$0xff]
  %v45 = vld [vmem:[%s0 + $0x20] sm:$0xff]
  %v46 = vld [vmem:[%s0 + $0x28] sm:$0xff]
  %v47 = vld [vmem:[%s0 + $0x30] sm:$0xff]
  %v48 = vld [vmem:[%s0 + $0x38] sm:$0xff]
  %v49 = vld [vmem:[%s0 + $0x40] sm:$0xff]
  %v50 = vld [vmem:[%s0 + $0x48] sm:$0xff]
  %v51 = vld [vmem:[%s0 + $0x50] sm:$0xff]
  %v52 = vld [vmem:[%s0 + $0x58] sm:$0xff]
  %v53 = vld [vmem:[%s0 + $0x60] sm:$0xff]
  %v54 = vld [vmem:[%s0 + $0x68] sm:$0xff]
  %v55 = vld [vmem:[%s0 + $0x70] sm:$0xff]
  %v56 = vld [vmem:[%s0 + $0x78] sm:$0xff]
  %v57 = vlaneseq
  %v58 = vand.u32 %v57, 127
  %v59 = vadd.s32 %v58, 128
  %v60 = vadd.s32 %v58, 256
  %v61 = vadd.s32 %v58, 384
  %v62 = vadd.s32 %v58, 512
  %v63 = vadd.s32 %v58, 640
  %v64 = vadd.s32 %v58, 768
  %v65 = vadd.s32 %v58, 896
  %v66 = vadd.s32 %v58, 1024
  %v67 = vadd.s32 %v58, 1152
  %v68 = vadd.s32 %v58, 1280
  %v69 = vadd.s32 %v58, 1408
  %v70 = vadd.s32 %v58, 1536
  %v71 = vadd.s32 %v58, 1664
  %v72 = vadd.s32 %v58, 1792
  %v73 = vadd.s32 %v58, 1920
  %v74 = vand.u32 %v58, 255
  %v75 = vand.u32 %v59, 255
  %v76 = vand.u32 %v60, 255
  %v77 = vand.u32 %v61, 255
  %v78 = vand.u32 %v62, 255
  %v79 = vand.u32 %v63, 255
  %v80 = vand.u32 %v64, 255
  %v81 = vand.u32 %v65, 255
  %v82 = vand.u32 %v66, 255
  %v83 = vand.u32 %v67, 255
  %v84 = vand.u32 %v68, 255
  %v85 = vand.u32 %v69, 255
  %v86 = vand.u32 %v70, 255
  %v87 = vand.u32 %v71, 255
  %v88 = vand.u32 %v72, 255
  %v89 = vand.u32 %v73, 255
  %v90 = vand.u32 %v74, 15
  %v91 = vand.u32 %v75, 15
  %v92 = vand.u32 %v76, 15
  %v93 = vand.u32 %v77, 15
  %v94 = vand.u32 %v78, 15
  %v95 = vand.u32 %v79, 15
  %v96 = vand.u32 %v80, 15
  %v97 = vand.u32 %v81, 15
  %v98 = vand.u32 %v82, 15
  %v99 = vand.u32 %v83, 15
  %v100 = vand.u32 %v84, 15
  %v101 = vand.u32 %v85, 15
  %v102 = vand.u32 %v86, 15
  %v103 = vand.u32 %v87, 15
  %v104 = vand.u32 %v88, 15
  %v105 = vand.u32 %v89, 15
  %v106 = vshra.s32 %v74, 4
  %v107 = vshra.s32 %v75, 4
  %v108 = vshra.s32 %v76, 4
  %v109 = vshra.s32 %v77, 4
  %v110 = vshra.s32 %v78, 4
  %v111 = vshra.s32 %v79, 4
  %v112 = vshra.s32 %v80, 4
  %v113 = vshra.s32 %v81, 4
  %v114 = vshra.s32 %v82, 4
  %v115 = vshra.s32 %v83, 4
  %v116 = vshra.s32 %v84, 4
  %v117 = vshra.s32 %v85, 4
  %v118 = vshra.s32 %v86, 4
  %v119 = vshra.s32 %v87, 4
  %v120 = vshra.s32 %v88, 4
  %v121 = vshra.s32 %v89, 4
  %122 = vrot.lane.b32.xlu0 %v41, 17
  %v123 = vpop.permute.xlu0 %122
  %124 = vrot.lane.b32.xlu0 %v42, 17
  %v125 = vpop.permute.xlu0 %124
  %126 = vrot.lane.b32.xlu0 %v43, 17
  %v127 = vpop.permute.xlu0 %126
  %128 = vrot.lane.b32.xlu0 %v44, 17
  %v129 = vpop.permute.xlu0 %128
  %130 = vrot.lane.b32.xlu0 %v45, 17
  %v131 = vpop.permute.xlu0 %130
  %132 = vrot.lane.b32.xlu0 %v46, 17
  %v133 = vpop.permute.xlu0 %132
  %134 = vrot.lane.b32.xlu0 %v47, 17
  %v135 = vpop.permute.xlu0 %134
  %136 = vrot.lane.b32.xlu0 %v48, 17
  %v137 = vpop.permute.xlu0 %136
  %138 = vrot.lane.b32.xlu0 %v49, 17
  %v139 = vpop.permute.xlu0 %138
  %140 = vrot.lane.b32.xlu0 %v50, 17
  %v141 = vpop.permute.xlu0 %140
  %142 = vrot.lane.b32.xlu0 %v51, 17
  %v143 = vpop.permute.xlu0 %142
  %144 = vrot.lane.b32.xlu0 %v52, 17
  %v145 = vpop.permute.xlu0 %144
  %146 = vrot.lane.b32.xlu0 %v53, 17
  %v147 = vpop.permute.xlu0 %146
  %148 = vrot.lane.b32.xlu0 %v54, 17
  %v149 = vpop.permute.xlu0 %148
  %150 = vrot.lane.b32.xlu0 %v55, 17
  %v151 = vpop.permute.xlu0 %150
  %152 = vrot.lane.b32.xlu0 %v56, 17
  %v153 = vpop.permute.xlu0 %152
  %vm154 = vcmp.lt.s32.totalorder %v58, 17
  %v155 = vsel %vm154, %v151, %v153
  %v156 = vsel %vm154, %v149, %v151
  %v157 = vsel %vm154, %v147, %v149
  %v158 = vsel %vm154, %v145, %v147
  %v159 = vsel %vm154, %v143, %v145
  %v160 = vsel %vm154, %v141, %v143
  %v161 = vsel %vm154, %v139, %v141
  %v162 = vsel %vm154, %v137, %v139
  %v163 = vsel %vm154, %v135, %v137
  %v164 = vsel %vm154, %v133, %v135
  %v165 = vsel %vm154, %v131, %v133
  %v166 = vsel %vm154, %v129, %v131
  %v167 = vsel %vm154, %v127, %v129
  %v168 = vsel %vm154, %v125, %v127
  %v169 = vsel %vm154, %v123, %v125
  %v170 = vsel %vm154, %v153, %v123
  %v171 = vadd.s32 %v106, 4294967295
  %v172 = vadd.s32 %v107, 4294967295
  %v173 = vadd.s32 %v108, 4294967295
  %v174 = vadd.s32 %v109, 4294967295
  %v175 = vadd.s32 %v110, 4294967295
  %v176 = vadd.s32 %v111, 4294967295
  %v177 = vadd.s32 %v112, 4294967295
  %v178 = vadd.s32 %v113, 4294967295
  %v179 = vadd.s32 %v114, 4294967295
  %v180 = vadd.s32 %v115, 4294967295
  %v181 = vadd.s32 %v116, 4294967295
  %v182 = vadd.s32 %v117, 4294967295
  %v183 = vadd.s32 %v118, 4294967295
  %v184 = vadd.s32 %v119, 4294967295
  %v185 = vadd.s32 %v120, 4294967295
  %v186 = vadd.s32 %v121, 4294967295
  %v187 = vadd.s32 %v90, 4294967295
  %v188 = vadd.s32 %v91, 4294967295
  %v189 = vadd.s32 %v92, 4294967295
  %v190 = vadd.s32 %v93, 4294967295
  %v191 = vadd.s32 %v94, 4294967295
  %v192 = vadd.s32 %v95, 4294967295
  %v193 = vadd.s32 %v96, 4294967295
  %v194 = vadd.s32 %v97, 4294967295
  %v195 = vadd.s32 %v98, 4294967295
  %v196 = vadd.s32 %v99, 4294967295
  %v197 = vadd.s32 %v100, 4294967295
  %v198 = vadd.s32 %v101, 4294967295
  %v199 = vadd.s32 %v102, 4294967295
  %v200 = vadd.s32 %v103, 4294967295
  %v201 = vadd.s32 %v104, 4294967295
  %v202 = vadd.s32 %v105, 4294967295
  %vm203 = vcmp.ge.s32.totalorder %v171, 0
  %vm204 = vcmp.ge.s32.totalorder %v172, 0
  %vm205 = vcmp.ge.s32.totalorder %v173, 0
  %vm206 = vcmp.ge.s32.totalorder %v174, 0
  %vm207 = vcmp.ge.s32.totalorder %v175, 0
  %vm208 = vcmp.ge.s32.totalorder %v176, 0
  %vm209 = vcmp.ge.s32.totalorder %v177, 0
  %vm210 = vcmp.ge.s32.totalorder %v178, 0
  %vm211 = vcmp.ge.s32.totalorder %v179, 0
  %vm212 = vcmp.ge.s32.totalorder %v180, 0
  %vm213 = vcmp.ge.s32.totalorder %v181, 0
  %vm214 = vcmp.ge.s32.totalorder %v182, 0
  %vm215 = vcmp.ge.s32.totalorder %v183, 0
  %vm216 = vcmp.ge.s32.totalorder %v184, 0
  %vm217 = vcmp.ge.s32.totalorder %v185, 0
  %vm218 = vcmp.ge.s32.totalorder %v186, 0
  %vm219 = vcmp.lt.s32.totalorder %v171, 16
  %vm220 = vcmp.lt.s32.totalorder %v172, 16
  %vm221 = vcmp.lt.s32.totalorder %v173, 16
  %vm222 = vcmp.lt.s32.totalorder %v174, 16
  %vm223 = vcmp.lt.s32.totalorder %v175, 16
  %vm224 = vcmp.lt.s32.totalorder %v176, 16
  %vm225 = vcmp.lt.s32.totalorder %v177, 16
  %vm226 = vcmp.lt.s32.totalorder %v178, 16
  %vm227 = vcmp.lt.s32.totalorder %v179, 16
  %vm228 = vcmp.lt.s32.totalorder %v180, 16
  %vm229 = vcmp.lt.s32.totalorder %v181, 16
  %vm230 = vcmp.lt.s32.totalorder %v182, 16
  %vm231 = vcmp.lt.s32.totalorder %v183, 16
  %vm232 = vcmp.lt.s32.totalorder %v184, 16
  %vm233 = vcmp.lt.s32.totalorder %v185, 16
  %vm234 = vcmp.lt.s32.totalorder %v186, 16
  %vm235 = vmand %vm203, %vm219
  %vm236 = vmand %vm204, %vm220
  %vm237 = vmand %vm205, %vm221
  %vm238 = vmand %vm206, %vm222
  %vm239 = vmand %vm207, %vm223
  %vm240 = vmand %vm208, %vm224
  %vm241 = vmand %vm209, %vm225
  %vm242 = vmand %vm210, %vm226
  %vm243 = vmand %vm211, %vm227
  %vm244 = vmand %vm212, %vm228
  %vm245 = vmand %vm213, %vm229
  %vm246 = vmand %vm214, %vm230
  %vm247 = vmand %vm215, %vm231
  %vm248 = vmand %vm216, %vm232
  %vm249 = vmand %vm217, %vm233
  %vm250 = vmand %vm218, %vm234
  %vm251 = vcmp.ge.s32.totalorder %v187, 0
  %vm252 = vcmp.ge.s32.totalorder %v188, 0
  %vm253 = vcmp.ge.s32.totalorder %v189, 0
  %vm254 = vcmp.ge.s32.totalorder %v190, 0
  %vm255 = vcmp.ge.s32.totalorder %v191, 0
  %vm256 = vcmp.ge.s32.totalorder %v192, 0
  %vm257 = vcmp.ge.s32.totalorder %v193, 0
  %vm258 = vcmp.ge.s32.totalorder %v194, 0
  %vm259 = vcmp.ge.s32.totalorder %v195, 0
  %vm260 = vcmp.ge.s32.totalorder %v196, 0
  %vm261 = vcmp.ge.s32.totalorder %v197, 0
  %vm262 = vcmp.ge.s32.totalorder %v198, 0
  %vm263 = vcmp.ge.s32.totalorder %v199, 0
  %vm264 = vcmp.ge.s32.totalorder %v200, 0
  %vm265 = vcmp.ge.s32.totalorder %v201, 0
  %vm266 = vcmp.ge.s32.totalorder %v202, 0
  %vm267 = vmand %vm235, %vm251
  %vm268 = vmand %vm236, %vm252
  %vm269 = vmand %vm237, %vm253
  %vm270 = vmand %vm238, %vm254
  %vm271 = vmand %vm239, %vm255
  %vm272 = vmand %vm240, %vm256
  %vm273 = vmand %vm241, %vm257
  %vm274 = vmand %vm242, %vm258
  %vm275 = vmand %vm243, %vm259
  %vm276 = vmand %vm244, %vm260
  %vm277 = vmand %vm245, %vm261
  %vm278 = vmand %vm246, %vm262
  %vm279 = vmand %vm247, %vm263
  %vm280 = vmand %vm248, %vm264
  %vm281 = vmand %vm249, %vm265
  %vm282 = vmand %vm250, %vm266
  %vm283 = vcmp.lt.s32.totalorder %v187, 16
  %vm284 = vcmp.lt.s32.totalorder %v188, 16
  %vm285 = vcmp.lt.s32.totalorder %v189, 16
  %vm286 = vcmp.lt.s32.totalorder %v190, 16
  %vm287 = vcmp.lt.s32.totalorder %v191, 16
  %vm288 = vcmp.lt.s32.totalorder %v192, 16
  %vm289 = vcmp.lt.s32.totalorder %v193, 16
  %vm290 = vcmp.lt.s32.totalorder %v194, 16
  %vm291 = vcmp.lt.s32.totalorder %v195, 16
  %vm292 = vcmp.lt.s32.totalorder %v196, 16
  %vm293 = vcmp.lt.s32.totalorder %v197, 16
  %vm294 = vcmp.lt.s32.totalorder %v198, 16
  %vm295 = vcmp.lt.s32.totalorder %v199, 16
  %vm296 = vcmp.lt.s32.totalorder %v200, 16
  %vm297 = vcmp.lt.s32.totalorder %v201, 16
  %vm298 = vcmp.lt.s32.totalorder %v202, 16
  %vm299 = vmand %vm267, %vm283
  %vm300 = vmand %vm268, %vm284
  %vm301 = vmand %vm269, %vm285
  %vm302 = vmand %vm270, %vm286
  %vm303 = vmand %vm271, %vm287
  %vm304 = vmand %vm272, %vm288
  %vm305 = vmand %vm273, %vm289
  %vm306 = vmand %vm274, %vm290
  %vm307 = vmand %vm275, %vm291
  %vm308 = vmand %vm276, %vm292
  %vm309 = vmand %vm277, %vm293
  %vm310 = vmand %vm278, %vm294
  %vm311 = vmand %vm279, %vm295
  %vm312 = vmand %vm280, %vm296
  %vm313 = vmand %vm281, %vm297
  %vm314 = vmand %vm282, %vm298
  %v315 = vsel %vm299, %v170, 0.0
  %v316 = vsel %vm300, %v169, 0.0
  %v317 = vsel %vm301, %v168, 0.0
  %v318 = vsel %vm302, %v167, 0.0
  %v319 = vsel %vm303, %v166, 0.0
  %v320 = vsel %vm304, %v165, 0.0
  %v321 = vsel %vm305, %v164, 0.0
  %v322 = vsel %vm306, %v163, 0.0
  %v323 = vsel %vm307, %v162, 0.0
  %v324 = vsel %vm308, %v161, 0.0
  %v325 = vsel %vm309, %v160, 0.0
  %v326 = vsel %vm310, %v159, 0.0
  %v327 = vsel %vm311, %v158, 0.0
  %v328 = vsel %vm312, %v157, 0.0
  %v329 = vsel %vm313, %v156, 0.0
  %v330 = vsel %vm314, %v155, 0.0
  %331 = vrot.lane.b32.xlu0 %v41, 16
  %v332 = vpop.permute.xlu0 %331
  %333 = vrot.lane.b32.xlu0 %v42, 16
  %v334 = vpop.permute.xlu0 %333
  %335 = vrot.lane.b32.xlu0 %v43, 16
  %v336 = vpop.permute.xlu0 %335
  %337 = vrot.lane.b32.xlu0 %v44, 16
  %v338 = vpop.permute.xlu0 %337
  %339 = vrot.lane.b32.xlu0 %v45, 16
  %v340 = vpop.permute.xlu0 %339
  %341 = vrot.lane.b32.xlu0 %v46, 16
  %v342 = vpop.permute.xlu0 %341
  %343 = vrot.lane.b32.xlu0 %v47, 16
  %v344 = vpop.permute.xlu0 %343
  %345 = vrot.lane.b32.xlu0 %v48, 16
  %v346 = vpop.permute.xlu0 %345
  %347 = vrot.lane.b32.xlu0 %v49, 16
  %v348 = vpop.permute.xlu0 %347
  %349 = vrot.lane.b32.xlu0 %v50, 16
  %v350 = vpop.permute.xlu0 %349
  %351 = vrot.lane.b32.xlu0 %v51, 16
  %v352 = vpop.permute.xlu0 %351
  %353 = vrot.lane.b32.xlu0 %v52, 16
  %v354 = vpop.permute.xlu0 %353
  %355 = vrot.lane.b32.xlu0 %v53, 16
  %v356 = vpop.permute.xlu0 %355
  %357 = vrot.lane.b32.xlu0 %v54, 16
  %v358 = vpop.permute.xlu0 %357
  %359 = vrot.lane.b32.xlu0 %v55, 16
  %v360 = vpop.permute.xlu0 %359
  %361 = vrot.lane.b32.xlu0 %v56, 16
  %v362 = vpop.permute.xlu0 %361
  %vm363 = vcmp.lt.s32.totalorder %v58, 16
  %v364 = vsel %vm363, %v360, %v362
  %v365 = vsel %vm363, %v358, %v360
  %v366 = vsel %vm363, %v356, %v358
  %v367 = vsel %vm363, %v354, %v356
  %v368 = vsel %vm363, %v352, %v354
  %v369 = vsel %vm363, %v350, %v352
  %v370 = vsel %vm363, %v348, %v350
  %v371 = vsel %vm363, %v346, %v348
  %v372 = vsel %vm363, %v344, %v346
  %v373 = vsel %vm363, %v342, %v344
  %v374 = vsel %vm363, %v340, %v342
  %v375 = vsel %vm363, %v338, %v340
  %v376 = vsel %vm363, %v336, %v338
  %v377 = vsel %vm363, %v334, %v336
  %v378 = vsel %vm363, %v332, %v334
  %v379 = vsel %vm363, %v362, %v332
  %vm380 = vcmp.ge.s32.totalorder %v90, 0
  %vm381 = vcmp.ge.s32.totalorder %v91, 0
  %vm382 = vcmp.ge.s32.totalorder %v92, 0
  %vm383 = vcmp.ge.s32.totalorder %v93, 0
  %vm384 = vcmp.ge.s32.totalorder %v94, 0
  %vm385 = vcmp.ge.s32.totalorder %v95, 0
  %vm386 = vcmp.ge.s32.totalorder %v96, 0
  %vm387 = vcmp.ge.s32.totalorder %v97, 0
  %vm388 = vcmp.ge.s32.totalorder %v98, 0
  %vm389 = vcmp.ge.s32.totalorder %v99, 0
  %vm390 = vcmp.ge.s32.totalorder %v100, 0
  %vm391 = vcmp.ge.s32.totalorder %v101, 0
  %vm392 = vcmp.ge.s32.totalorder %v102, 0
  %vm393 = vcmp.ge.s32.totalorder %v103, 0
  %vm394 = vcmp.ge.s32.totalorder %v104, 0
  %vm395 = vcmp.ge.s32.totalorder %v105, 0
  %vm396 = vmand %vm235, %vm380
  %vm397 = vmand %vm236, %vm381
  %vm398 = vmand %vm237, %vm382
  %vm399 = vmand %vm238, %vm383
  %vm400 = vmand %vm239, %vm384
  %vm401 = vmand %vm240, %vm385
  %vm402 = vmand %vm241, %vm386
  %vm403 = vmand %vm242, %vm387
  %vm404 = vmand %vm243, %vm388
  %vm405 = vmand %vm244, %vm389
  %vm406 = vmand %vm245, %vm390
  %vm407 = vmand %vm246, %vm391
  %vm408 = vmand %vm247, %vm392
  %vm409 = vmand %vm248, %vm393
  %vm410 = vmand %vm249, %vm394
  %vm411 = vmand %vm250, %vm395
  %vm412 = vcmp.lt.s32.totalorder %v90, 16
  %vm413 = vcmp.lt.s32.totalorder %v91, 16
  %vm414 = vcmp.lt.s32.totalorder %v92, 16
  %vm415 = vcmp.lt.s32.totalorder %v93, 16
  %vm416 = vcmp.lt.s32.totalorder %v94, 16
  %vm417 = vcmp.lt.s32.totalorder %v95, 16
  %vm418 = vcmp.lt.s32.totalorder %v96, 16
  %vm419 = vcmp.lt.s32.totalorder %v97, 16
  %vm420 = vcmp.lt.s32.totalorder %v98, 16
  %vm421 = vcmp.lt.s32.totalorder %v99, 16
  %vm422 = vcmp.lt.s32.totalorder %v100, 16
  %vm423 = vcmp.lt.s32.totalorder %v101, 16
  %vm424 = vcmp.lt.s32.totalorder %v102, 16
  %vm425 = vcmp.lt.s32.totalorder %v103, 16
  %vm426 = vcmp.lt.s32.totalorder %v104, 16
  %vm427 = vcmp.lt.s32.totalorder %v105, 16
  %vm428 = vmand %vm396, %vm412
  %vm429 = vmand %vm397, %vm413
  %vm430 = vmand %vm398, %vm414
  %vm431 = vmand %vm399, %vm415
  %vm432 = vmand %vm400, %vm416
  %vm433 = vmand %vm401, %vm417
  %vm434 = vmand %vm402, %vm418
  %vm435 = vmand %vm403, %vm419
  %vm436 = vmand %vm404, %vm420
  %vm437 = vmand %vm405, %vm421
  %vm438 = vmand %vm406, %vm422
  %vm439 = vmand %vm407, %vm423
  %vm440 = vmand %vm408, %vm424
  %vm441 = vmand %vm409, %vm425
  %vm442 = vmand %vm410, %vm426
  %vm443 = vmand %vm411, %vm427
  %v444 = vsel %vm428, %v379, 0.0
  %v445 = vsel %vm429, %v378, 0.0
  %v446 = vsel %vm430, %v377, 0.0
  %v447 = vsel %vm431, %v376, 0.0
  %v448 = vsel %vm432, %v375, 0.0
  %v449 = vsel %vm433, %v374, 0.0
  %v450 = vsel %vm434, %v373, 0.0
  %v451 = vsel %vm435, %v372, 0.0
  %v452 = vsel %vm436, %v371, 0.0
  %v453 = vsel %vm437, %v370, 0.0
  %v454 = vsel %vm438, %v369, 0.0
  %v455 = vsel %vm439, %v368, 0.0
  %v456 = vsel %vm440, %v367, 0.0
  %v457 = vsel %vm441, %v366, 0.0
  %v458 = vsel %vm442, %v365, 0.0
  %v459 = vsel %vm443, %v364, 0.0
  %460 = vrot.lane.b32.xlu0 %v41, 15
  %v461 = vpop.permute.xlu0 %460
  %462 = vrot.lane.b32.xlu0 %v42, 15
  %v463 = vpop.permute.xlu0 %462
  %464 = vrot.lane.b32.xlu0 %v43, 15
  %v465 = vpop.permute.xlu0 %464
  %466 = vrot.lane.b32.xlu0 %v44, 15
  %v467 = vpop.permute.xlu0 %466
  %468 = vrot.lane.b32.xlu0 %v45, 15
  %v469 = vpop.permute.xlu0 %468
  %470 = vrot.lane.b32.xlu0 %v46, 15
  %v471 = vpop.permute.xlu0 %470
  %472 = vrot.lane.b32.xlu0 %v47, 15
  %v473 = vpop.permute.xlu0 %472
  %474 = vrot.lane.b32.xlu0 %v48, 15
  %v475 = vpop.permute.xlu0 %474
  %476 = vrot.lane.b32.xlu0 %v49, 15
  %v477 = vpop.permute.xlu0 %476
  %478 = vrot.lane.b32.xlu0 %v50, 15
  %v479 = vpop.permute.xlu0 %478
  %480 = vrot.lane.b32.xlu0 %v51, 15
  %v481 = vpop.permute.xlu0 %480
  %482 = vrot.lane.b32.xlu0 %v52, 15
  %v483 = vpop.permute.xlu0 %482
  %484 = vrot.lane.b32.xlu0 %v53, 15
  %v485 = vpop.permute.xlu0 %484
  %486 = vrot.lane.b32.xlu0 %v54, 15
  %v487 = vpop.permute.xlu0 %486
  %488 = vrot.lane.b32.xlu0 %v55, 15
  %v489 = vpop.permute.xlu0 %488
  %490 = vrot.lane.b32.xlu0 %v56, 15
  %v491 = vpop.permute.xlu0 %490
  %vm492 = vcmp.lt.s32.totalorder %v58, 15
  %v493 = vsel %vm492, %v489, %v491
  %v494 = vsel %vm492, %v487, %v489
  %v495 = vsel %vm492, %v485, %v487
  %v496 = vsel %vm492, %v483, %v485
  %v497 = vsel %vm492, %v481, %v483
  %v498 = vsel %vm492, %v479, %v481
  %v499 = vsel %vm492, %v477, %v479
  %v500 = vsel %vm492, %v475, %v477
  %v501 = vsel %vm492, %v473, %v475
  %v502 = vsel %vm492, %v471, %v473
  %v503 = vsel %vm492, %v469, %v471
  %v504 = vsel %vm492, %v467, %v469
  %v505 = vsel %vm492, %v465, %v467
  %v506 = vsel %vm492, %v463, %v465
  %v507 = vsel %vm492, %v461, %v463
  %v508 = vsel %vm492, %v491, %v461
  %v509 = vadd.s32 %v90, 1
  %v510 = vadd.s32 %v91, 1
  %v511 = vadd.s32 %v92, 1
  %v512 = vadd.s32 %v93, 1
  %v513 = vadd.s32 %v94, 1
  %v514 = vadd.s32 %v95, 1
  %v515 = vadd.s32 %v96, 1
  %v516 = vadd.s32 %v97, 1
  %v517 = vadd.s32 %v98, 1
  %v518 = vadd.s32 %v99, 1
  %v519 = vadd.s32 %v100, 1
  %v520 = vadd.s32 %v101, 1
  %v521 = vadd.s32 %v102, 1
  %v522 = vadd.s32 %v103, 1
  %v523 = vadd.s32 %v104, 1
  %v524 = vadd.s32 %v105, 1
  %vm525 = vcmp.ge.s32.totalorder %v509, 0
  %vm526 = vcmp.ge.s32.totalorder %v510, 0
  %vm527 = vcmp.ge.s32.totalorder %v511, 0
  %vm528 = vcmp.ge.s32.totalorder %v512, 0
  %vm529 = vcmp.ge.s32.totalorder %v513, 0
  %vm530 = vcmp.ge.s32.totalorder %v514, 0
  %vm531 = vcmp.ge.s32.totalorder %v515, 0
  %vm532 = vcmp.ge.s32.totalorder %v516, 0
  %vm533 = vcmp.ge.s32.totalorder %v517, 0
  %vm534 = vcmp.ge.s32.totalorder %v518, 0
  %vm535 = vcmp.ge.s32.totalorder %v519, 0
  %vm536 = vcmp.ge.s32.totalorder %v520, 0
  %vm537 = vcmp.ge.s32.totalorder %v521, 0
  %vm538 = vcmp.ge.s32.totalorder %v522, 0
  %vm539 = vcmp.ge.s32.totalorder %v523, 0
  %vm540 = vcmp.ge.s32.totalorder %v524, 0
  %vm541 = vmand %vm235, %vm525
  %vm542 = vmand %vm236, %vm526
  %vm543 = vmand %vm237, %vm527
  %vm544 = vmand %vm238, %vm528
  %vm545 = vmand %vm239, %vm529
  %vm546 = vmand %vm240, %vm530
  %vm547 = vmand %vm241, %vm531
  %vm548 = vmand %vm242, %vm532
  %vm549 = vmand %vm243, %vm533
  %vm550 = vmand %vm244, %vm534
  %vm551 = vmand %vm245, %vm535
  %vm552 = vmand %vm246, %vm536
  %vm553 = vmand %vm247, %vm537
  %vm554 = vmand %vm248, %vm538
  %vm555 = vmand %vm249, %vm539
  %vm556 = vmand %vm250, %vm540
  %vm557 = vcmp.lt.s32.totalorder %v509, 16
  %vm558 = vcmp.lt.s32.totalorder %v510, 16
  %vm559 = vcmp.lt.s32.totalorder %v511, 16
  %vm560 = vcmp.lt.s32.totalorder %v512, 16
  %vm561 = vcmp.lt.s32.totalorder %v513, 16
  %vm562 = vcmp.lt.s32.totalorder %v514, 16
  %vm563 = vcmp.lt.s32.totalorder %v515, 16
  %vm564 = vcmp.lt.s32.totalorder %v516, 16
  %vm565 = vcmp.lt.s32.totalorder %v517, 16
  %vm566 = vcmp.lt.s32.totalorder %v518, 16
  %vm567 = vcmp.lt.s32.totalorder %v519, 16
  %vm568 = vcmp.lt.s32.totalorder %v520, 16
  %vm569 = vcmp.lt.s32.totalorder %v521, 16
  %vm570 = vcmp.lt.s32.totalorder %v522, 16
  %vm571 = vcmp.lt.s32.totalorder %v523, 16
  %vm572 = vcmp.lt.s32.totalorder %v524, 16
  %vm573 = vmand %vm541, %vm557
  %vm574 = vmand %vm542, %vm558
  %vm575 = vmand %vm543, %vm559
  %vm576 = vmand %vm544, %vm560
  %vm577 = vmand %vm545, %vm561
  %vm578 = vmand %vm546, %vm562
  %vm579 = vmand %vm547, %vm563
  %vm580 = vmand %vm548, %vm564
  %vm581 = vmand %vm549, %vm565
  %vm582 = vmand %vm550, %vm566
  %vm583 = vmand %vm551, %vm567
  %vm584 = vmand %vm552, %vm568
  %vm585 = vmand %vm553, %vm569
  %vm586 = vmand %vm554, %vm570
  %vm587 = vmand %vm555, %vm571
  %vm588 = vmand %vm556, %vm572
  %v589 = vsel %vm573, %v508, 0.0
  %v590 = vsel %vm574, %v507, 0.0
  %v591 = vsel %vm575, %v506, 0.0
  %v592 = vsel %vm576, %v505, 0.0
  %v593 = vsel %vm577, %v504, 0.0
  %v594 = vsel %vm578, %v503, 0.0
  %v595 = vsel %vm579, %v502, 0.0
  %v596 = vsel %vm580, %v501, 0.0
  %v597 = vsel %vm581, %v500, 0.0
  %v598 = vsel %vm582, %v499, 0.0
  %v599 = vsel %vm583, %v498, 0.0
  %v600 = vsel %vm584, %v497, 0.0
  %v601 = vsel %vm585, %v496, 0.0
  %v602 = vsel %vm586, %v495, 0.0
  %v603 = vsel %vm587, %v494, 0.0
  %v604 = vsel %vm588, %v493, 0.0
  %605 = vrot.lane.b32.xlu0 %v41, 1
  %v606 = vpop.permute.xlu0 %605
  %607 = vrot.lane.b32.xlu0 %v42, 1
  %v608 = vpop.permute.xlu0 %607
  %609 = vrot.lane.b32.xlu0 %v43, 1
  %v610 = vpop.permute.xlu0 %609
  %611 = vrot.lane.b32.xlu0 %v44, 1
  %v612 = vpop.permute.xlu0 %611
  %613 = vrot.lane.b32.xlu0 %v45, 1
  %v614 = vpop.permute.xlu0 %613
  %615 = vrot.lane.b32.xlu0 %v46, 1
  %v616 = vpop.permute.xlu0 %615
  %617 = vrot.lane.b32.xlu0 %v47, 1
  %v618 = vpop.permute.xlu0 %617
  %619 = vrot.lane.b32.xlu0 %v48, 1
  %v620 = vpop.permute.xlu0 %619
  %621 = vrot.lane.b32.xlu0 %v49, 1
  %v622 = vpop.permute.xlu0 %621
  %623 = vrot.lane.b32.xlu0 %v50, 1
  %v624 = vpop.permute.xlu0 %623
  %625 = vrot.lane.b32.xlu0 %v51, 1
  %v626 = vpop.permute.xlu0 %625
  %627 = vrot.lane.b32.xlu0 %v52, 1
  %v628 = vpop.permute.xlu0 %627
  %629 = vrot.lane.b32.xlu0 %v53, 1
  %v630 = vpop.permute.xlu0 %629
  %631 = vrot.lane.b32.xlu0 %v54, 1
  %v632 = vpop.permute.xlu0 %631
  %633 = vrot.lane.b32.xlu0 %v55, 1
  %v634 = vpop.permute.xlu0 %633
  %635 = vrot.lane.b32.xlu0 %v56, 1
  %v636 = vpop.permute.xlu0 %635
  %vm637 = vcmp.lt.s32.totalorder %v58, 1
  %v638 = vsel %vm637, %v634, %v636
  %v639 = vsel %vm637, %v632, %v634
  %v640 = vsel %vm637, %v630, %v632
  %v641 = vsel %vm637, %v628, %v630
  %v642 = vsel %vm637, %v626, %v628
  %v643 = vsel %vm637, %v624, %v626
  %v644 = vsel %vm637, %v622, %v624
  %v645 = vsel %vm637, %v620, %v622
  %v646 = vsel %vm637, %v618, %v620
  %v647 = vsel %vm637, %v616, %v618
  %v648 = vsel %vm637, %v614, %v616
  %v649 = vsel %vm637, %v612, %v614
  %v650 = vsel %vm637, %v610, %v612
  %v651 = vsel %vm637, %v608, %v610
  %v652 = vsel %vm637, %v606, %v608
  %v653 = vsel %vm637, %v636, %v606
  %vm654 = vcmp.ge.s32.totalorder %v106, 0
  %vm655 = vcmp.ge.s32.totalorder %v107, 0
  %vm656 = vcmp.ge.s32.totalorder %v108, 0
  %vm657 = vcmp.ge.s32.totalorder %v109, 0
  %vm658 = vcmp.ge.s32.totalorder %v110, 0
  %vm659 = vcmp.ge.s32.totalorder %v111, 0
  %vm660 = vcmp.ge.s32.totalorder %v112, 0
  %vm661 = vcmp.ge.s32.totalorder %v113, 0
  %vm662 = vcmp.ge.s32.totalorder %v114, 0
  %vm663 = vcmp.ge.s32.totalorder %v115, 0
  %vm664 = vcmp.ge.s32.totalorder %v116, 0
  %vm665 = vcmp.ge.s32.totalorder %v117, 0
  %vm666 = vcmp.ge.s32.totalorder %v118, 0
  %vm667 = vcmp.ge.s32.totalorder %v119, 0
  %vm668 = vcmp.ge.s32.totalorder %v120, 0
  %vm669 = vcmp.ge.s32.totalorder %v121, 0
  %vm670 = vcmp.lt.s32.totalorder %v106, 16
  %vm671 = vcmp.lt.s32.totalorder %v107, 16
  %vm672 = vcmp.lt.s32.totalorder %v108, 16
  %vm673 = vcmp.lt.s32.totalorder %v109, 16
  %vm674 = vcmp.lt.s32.totalorder %v110, 16
  %vm675 = vcmp.lt.s32.totalorder %v111, 16
  %vm676 = vcmp.lt.s32.totalorder %v112, 16
  %vm677 = vcmp.lt.s32.totalorder %v113, 16
  %vm678 = vcmp.lt.s32.totalorder %v114, 16
  %vm679 = vcmp.lt.s32.totalorder %v115, 16
  %vm680 = vcmp.lt.s32.totalorder %v116, 16
  %vm681 = vcmp.lt.s32.totalorder %v117, 16
  %vm682 = vcmp.lt.s32.totalorder %v118, 16
  %vm683 = vcmp.lt.s32.totalorder %v119, 16
  %vm684 = vcmp.lt.s32.totalorder %v120, 16
  %vm685 = vcmp.lt.s32.totalorder %v121, 16
  %vm686 = vmand %vm654, %vm670
  %vm687 = vmand %vm655, %vm671
  %vm688 = vmand %vm656, %vm672
  %vm689 = vmand %vm657, %vm673
  %vm690 = vmand %vm658, %vm674
  %vm691 = vmand %vm659, %vm675
  %vm692 = vmand %vm660, %vm676
  %vm693 = vmand %vm661, %vm677
  %vm694 = vmand %vm662, %vm678
  %vm695 = vmand %vm663, %vm679
  %vm696 = vmand %vm664, %vm680
  %vm697 = vmand %vm665, %vm681
  %vm698 = vmand %vm666, %vm682
  %vm699 = vmand %vm667, %vm683
  %vm700 = vmand %vm668, %vm684
  %vm701 = vmand %vm669, %vm685
  %vm702 = vmand %vm686, %vm251
  %vm703 = vmand %vm687, %vm252
  %vm704 = vmand %vm688, %vm253
  %vm705 = vmand %vm689, %vm254
  %vm706 = vmand %vm690, %vm255
  %vm707 = vmand %vm691, %vm256
  %vm708 = vmand %vm692, %vm257
  %vm709 = vmand %vm693, %vm258
  %vm710 = vmand %vm694, %vm259
  %vm711 = vmand %vm695, %vm260
  %vm712 = vmand %vm696, %vm261
  %vm713 = vmand %vm697, %vm262
  %vm714 = vmand %vm698, %vm263
  %vm715 = vmand %vm699, %vm264
  %vm716 = vmand %vm700, %vm265
  %vm717 = vmand %vm701, %vm266
  %vm718 = vmand %vm702, %vm283
  %vm719 = vmand %vm703, %vm284
  %vm720 = vmand %vm704, %vm285
  %vm721 = vmand %vm705, %vm286
  %vm722 = vmand %vm706, %vm287
  %vm723 = vmand %vm707, %vm288
  %vm724 = vmand %vm708, %vm289
  %vm725 = vmand %vm709, %vm290
  %vm726 = vmand %vm710, %vm291
  %vm727 = vmand %vm711, %vm292
  %vm728 = vmand %vm712, %vm293
  %vm729 = vmand %vm713, %vm294
  %vm730 = vmand %vm714, %vm295
  %vm731 = vmand %vm715, %vm296
  %vm732 = vmand %vm716, %vm297
  %vm733 = vmand %vm717, %vm298
  %v734 = vsel %vm718, %v653, 0.0
  %v735 = vsel %vm719, %v652, 0.0
  %v736 = vsel %vm720, %v651, 0.0
  %v737 = vsel %vm721, %v650, 0.0
  %v738 = vsel %vm722, %v649, 0.0
  %v739 = vsel %vm723, %v648, 0.0
  %v740 = vsel %vm724, %v647, 0.0
  %v741 = vsel %vm725, %v646, 0.0
  %v742 = vsel %vm726, %v645, 0.0
  %v743 = vsel %vm727, %v644, 0.0
  %v744 = vsel %vm728, %v643, 0.0
  %v745 = vsel %vm729, %v642, 0.0
  %v746 = vsel %vm730, %v641, 0.0
  %v747 = vsel %vm731, %v640, 0.0
  %v748 = vsel %vm732, %v639, 0.0
  %v749 = vsel %vm733, %v638, 0.0
  %vm750 = vmand %vm686, %vm380
  %vm751 = vmand %vm687, %vm381
  %vm752 = vmand %vm688, %vm382
  %vm753 = vmand %vm689, %vm383
  %vm754 = vmand %vm690, %vm384
  %vm755 = vmand %vm691, %vm385
  %vm756 = vmand %vm692, %vm386
  %vm757 = vmand %vm693, %vm387
  %vm758 = vmand %vm694, %vm388
  %vm759 = vmand %vm695, %vm389
  %vm760 = vmand %vm696, %vm390
  %vm761 = vmand %vm697, %vm391
  %vm762 = vmand %vm698, %vm392
  %vm763 = vmand %vm699, %vm393
  %vm764 = vmand %vm700, %vm394
  %vm765 = vmand %vm701, %vm395
  %vm766 = vmand %vm750, %vm412
  %vm767 = vmand %vm751, %vm413
  %vm768 = vmand %vm752, %vm414
  %vm769 = vmand %vm753, %vm415
  %vm770 = vmand %vm754, %vm416
  %vm771 = vmand %vm755, %vm417
  %vm772 = vmand %vm756, %vm418
  %vm773 = vmand %vm757, %vm419
  %vm774 = vmand %vm758, %vm420
  %vm775 = vmand %vm759, %vm421
  %vm776 = vmand %vm760, %vm422
  %vm777 = vmand %vm761, %vm423
  %vm778 = vmand %vm762, %vm424
  %vm779 = vmand %vm763, %vm425
  %vm780 = vmand %vm764, %vm426
  %vm781 = vmand %vm765, %vm427
  %v782 = vsel %vm766, %v41, 0.0
  %v783 = vsel %vm767, %v42, 0.0
  %v784 = vsel %vm768, %v43, 0.0
  %v785 = vsel %vm769, %v44, 0.0
  %v786 = vsel %vm770, %v45, 0.0
  %v787 = vsel %vm771, %v46, 0.0
  %v788 = vsel %vm772, %v47, 0.0
  %v789 = vsel %vm773, %v48, 0.0
  %v790 = vsel %vm774, %v49, 0.0
  %v791 = vsel %vm775, %v50, 0.0
  %v792 = vsel %vm776, %v51, 0.0
  %v793 = vsel %vm777, %v52, 0.0
  %v794 = vsel %vm778, %v53, 0.0
  %v795 = vsel %vm779, %v54, 0.0
  %v796 = vsel %vm780, %v55, 0.0
  %v797 = vsel %vm781, %v56, 0.0
  %798 = vrot.lane.b32.xlu0 %v41, 127
  %v799 = vpop.permute.xlu0 %798
  %800 = vrot.lane.b32.xlu0 %v42, 127
  %v801 = vpop.permute.xlu0 %800
  %802 = vrot.lane.b32.xlu0 %v43, 127
  %v803 = vpop.permute.xlu0 %802
  %804 = vrot.lane.b32.xlu0 %v44, 127
  %v805 = vpop.permute.xlu0 %804
  %806 = vrot.lane.b32.xlu0 %v45, 127
  %v807 = vpop.permute.xlu0 %806
  %808 = vrot.lane.b32.xlu0 %v46, 127
  %v809 = vpop.permute.xlu0 %808
  %810 = vrot.lane.b32.xlu0 %v47, 127
  %v811 = vpop.permute.xlu0 %810
  %812 = vrot.lane.b32.xlu0 %v48, 127
  %v813 = vpop.permute.xlu0 %812
  %814 = vrot.lane.b32.xlu0 %v49, 127
  %v815 = vpop.permute.xlu0 %814
  %816 = vrot.lane.b32.xlu0 %v50, 127
  %v817 = vpop.permute.xlu0 %816
  %818 = vrot.lane.b32.xlu0 %v51, 127
  %v819 = vpop.permute.xlu0 %818
  %820 = vrot.lane.b32.xlu0 %v52, 127
  %v821 = vpop.permute.xlu0 %820
  %822 = vrot.lane.b32.xlu0 %v53, 127
  %v823 = vpop.permute.xlu0 %822
  %824 = vrot.lane.b32.xlu0 %v54, 127
  %v825 = vpop.permute.xlu0 %824
  %826 = vrot.lane.b32.xlu0 %v55, 127
  %v827 = vpop.permute.xlu0 %826
  %828 = vrot.lane.b32.xlu0 %v56, 127
  %v829 = vpop.permute.xlu0 %828
  %vm830 = vcmp.lt.s32.totalorder %v58, 127
  %v831 = vsel %vm830, %v827, %v829
  %v832 = vsel %vm830, %v825, %v827
  %v833 = vsel %vm830, %v823, %v825
  %v834 = vsel %vm830, %v821, %v823
  %v835 = vsel %vm830, %v819, %v821
  %v836 = vsel %vm830, %v817, %v819
  %v837 = vsel %vm830, %v815, %v817
  %v838 = vsel %vm830, %v813, %v815
  %v839 = vsel %vm830, %v811, %v813
  %v840 = vsel %vm830, %v809, %v811
  %v841 = vsel %vm830, %v807, %v809
  %v842 = vsel %vm830, %v805, %v807
  %v843 = vsel %vm830, %v803, %v805
  %v844 = vsel %vm830, %v801, %v803
  %v845 = vsel %vm830, %v799, %v801
  %v846 = vsel %vm830, %v829, %v799
  %vm847 = vmand %vm686, %vm525
  %vm848 = vmand %vm687, %vm526
  %vm849 = vmand %vm688, %vm527
  %vm850 = vmand %vm689, %vm528
  %vm851 = vmand %vm690, %vm529
  %vm852 = vmand %vm691, %vm530
  %vm853 = vmand %vm692, %vm531
  %vm854 = vmand %vm693, %vm532
  %vm855 = vmand %vm694, %vm533
  %vm856 = vmand %vm695, %vm534
  %vm857 = vmand %vm696, %vm535
  %vm858 = vmand %vm697, %vm536
  %vm859 = vmand %vm698, %vm537
  %vm860 = vmand %vm699, %vm538
  %vm861 = vmand %vm700, %vm539
  %vm862 = vmand %vm701, %vm540
  %vm863 = vmand %vm847, %vm557
  %vm864 = vmand %vm848, %vm558
  %vm865 = vmand %vm849, %vm559
  %vm866 = vmand %vm850, %vm560
  %vm867 = vmand %vm851, %vm561
  %vm868 = vmand %vm852, %vm562
  %vm869 = vmand %vm853, %vm563
  %vm870 = vmand %vm854, %vm564
  %vm871 = vmand %vm855, %vm565
  %vm872 = vmand %vm856, %vm566
  %vm873 = vmand %vm857, %vm567
  %vm874 = vmand %vm858, %vm568
  %vm875 = vmand %vm859, %vm569
  %vm876 = vmand %vm860, %vm570
  %vm877 = vmand %vm861, %vm571
  %vm878 = vmand %vm862, %vm572
  %v879 = vsel %vm863, %v845, 0.0
  %v880 = vsel %vm864, %v844, 0.0
  %v881 = vsel %vm865, %v843, 0.0
  %v882 = vsel %vm866, %v842, 0.0
  %v883 = vsel %vm867, %v841, 0.0
  %v884 = vsel %vm868, %v840, 0.0
  %v885 = vsel %vm869, %v839, 0.0
  %v886 = vsel %vm870, %v838, 0.0
  %v887 = vsel %vm871, %v837, 0.0
  %v888 = vsel %vm872, %v836, 0.0
  %v889 = vsel %vm873, %v835, 0.0
  %v890 = vsel %vm874, %v834, 0.0
  %v891 = vsel %vm875, %v833, 0.0
  %v892 = vsel %vm876, %v832, 0.0
  %v893 = vsel %vm877, %v831, 0.0
  %v894 = vsel %vm878, %v846, 0.0
  %895 = vrot.lane.b32.xlu0 %v41, 113
  %v896 = vpop.permute.xlu0 %895
  %897 = vrot.lane.b32.xlu0 %v42, 113
  %v898 = vpop.permute.xlu0 %897
  %899 = vrot.lane.b32.xlu0 %v43, 113
  %v900 = vpop.permute.xlu0 %899
  %901 = vrot.lane.b32.xlu0 %v44, 113
  %v902 = vpop.permute.xlu0 %901
  %903 = vrot.lane.b32.xlu0 %v45, 113
  %v904 = vpop.permute.xlu0 %903
  %905 = vrot.lane.b32.xlu0 %v46, 113
  %v906 = vpop.permute.xlu0 %905
  %907 = vrot.lane.b32.xlu0 %v47, 113
  %v908 = vpop.permute.xlu0 %907
  %909 = vrot.lane.b32.xlu0 %v48, 113
  %v910 = vpop.permute.xlu0 %909
  %911 = vrot.lane.b32.xlu0 %v49, 113
  %v912 = vpop.permute.xlu0 %911
  %913 = vrot.lane.b32.xlu0 %v50, 113
  %v914 = vpop.permute.xlu0 %913
  %915 = vrot.lane.b32.xlu0 %v51, 113
  %v916 = vpop.permute.xlu0 %915
  %917 = vrot.lane.b32.xlu0 %v52, 113
  %v918 = vpop.permute.xlu0 %917
  %919 = vrot.lane.b32.xlu0 %v53, 113
  %v920 = vpop.permute.xlu0 %919
  %921 = vrot.lane.b32.xlu0 %v54, 113
  %v922 = vpop.permute.xlu0 %921
  %923 = vrot.lane.b32.xlu0 %v55, 113
  %v924 = vpop.permute.xlu0 %923
  %925 = vrot.lane.b32.xlu0 %v56, 113
  %v926 = vpop.permute.xlu0 %925
  %vm927 = vcmp.lt.s32.totalorder %v58, 113
  %v928 = vsel %vm927, %v924, %v926
  %v929 = vsel %vm927, %v922, %v924
  %v930 = vsel %vm927, %v920, %v922
  %v931 = vsel %vm927, %v918, %v920
  %v932 = vsel %vm927, %v916, %v918
  %v933 = vsel %vm927, %v914, %v916
  %v934 = vsel %vm927, %v912, %v914
  %v935 = vsel %vm927, %v910, %v912
  %v936 = vsel %vm927, %v908, %v910
  %v937 = vsel %vm927, %v906, %v908
  %v938 = vsel %vm927, %v904, %v906
  %v939 = vsel %vm927, %v902, %v904
  %v940 = vsel %vm927, %v900, %v902
  %v941 = vsel %vm927, %v898, %v900
  %v942 = vsel %vm927, %v896, %v898
  %v943 = vsel %vm927, %v926, %v896
  %v944 = vadd.s32 %v106, 1
  %v945 = vadd.s32 %v107, 1
  %v946 = vadd.s32 %v108, 1
  %v947 = vadd.s32 %v109, 1
  %v948 = vadd.s32 %v110, 1
  %v949 = vadd.s32 %v111, 1
  %v950 = vadd.s32 %v112, 1
  %v951 = vadd.s32 %v113, 1
  %v952 = vadd.s32 %v114, 1
  %v953 = vadd.s32 %v115, 1
  %v954 = vadd.s32 %v116, 1
  %v955 = vadd.s32 %v117, 1
  %v956 = vadd.s32 %v118, 1
  %v957 = vadd.s32 %v119, 1
  %v958 = vadd.s32 %v120, 1
  %v959 = vadd.s32 %v121, 1
  %vm960 = vcmp.ge.s32.totalorder %v944, 0
  %vm961 = vcmp.ge.s32.totalorder %v945, 0
  %vm962 = vcmp.ge.s32.totalorder %v946, 0
  %vm963 = vcmp.ge.s32.totalorder %v947, 0
  %vm964 = vcmp.ge.s32.totalorder %v948, 0
  %vm965 = vcmp.ge.s32.totalorder %v949, 0
  %vm966 = vcmp.ge.s32.totalorder %v950, 0
  %vm967 = vcmp.ge.s32.totalorder %v951, 0
  %vm968 = vcmp.ge.s32.totalorder %v952, 0
  %vm969 = vcmp.ge.s32.totalorder %v953, 0
  %vm970 = vcmp.ge.s32.totalorder %v954, 0
  %vm971 = vcmp.ge.s32.totalorder %v955, 0
  %vm972 = vcmp.ge.s32.totalorder %v956, 0
  %vm973 = vcmp.ge.s32.totalorder %v957, 0
  %vm974 = vcmp.ge.s32.totalorder %v958, 0
  %vm975 = vcmp.ge.s32.totalorder %v959, 0
  %vm976 = vcmp.lt.s32.totalorder %v944, 16
  %vm977 = vcmp.lt.s32.totalorder %v945, 16
  %vm978 = vcmp.lt.s32.totalorder %v946, 16
  %vm979 = vcmp.lt.s32.totalorder %v947, 16
  %vm980 = vcmp.lt.s32.totalorder %v948, 16
  %vm981 = vcmp.lt.s32.totalorder %v949, 16
  %vm982 = vcmp.lt.s32.totalorder %v950, 16
  %vm983 = vcmp.lt.s32.totalorder %v951, 16
  %vm984 = vcmp.lt.s32.totalorder %v952, 16
  %vm985 = vcmp.lt.s32.totalorder %v953, 16
  %vm986 = vcmp.lt.s32.totalorder %v954, 16
  %vm987 = vcmp.lt.s32.totalorder %v955, 16
  %vm988 = vcmp.lt.s32.totalorder %v956, 16
  %vm989 = vcmp.lt.s32.totalorder %v957, 16
  %vm990 = vcmp.lt.s32.totalorder %v958, 16
  %vm991 = vcmp.lt.s32.totalorder %v959, 16
  %vm992 = vmand %vm960, %vm976
  %vm993 = vmand %vm961, %vm977
  %vm994 = vmand %vm962, %vm978
  %vm995 = vmand %vm963, %vm979
  %vm996 = vmand %vm964, %vm980
  %vm997 = vmand %vm965, %vm981
  %vm998 = vmand %vm966, %vm982
  %vm999 = vmand %vm967, %vm983
  %vm1000 = vmand %vm968, %vm984
  %vm1001 = vmand %vm969, %vm985
  %vm1002 = vmand %vm970, %vm986
  %vm1003 = vmand %vm971, %vm987
  %vm1004 = vmand %vm972, %vm988
  %vm1005 = vmand %vm973, %vm989
  %vm1006 = vmand %vm974, %vm990
  %vm1007 = vmand %vm975, %vm991
  %vm1008 = vmand %vm992, %vm251
  %vm1009 = vmand %vm993, %vm252
  %vm1010 = vmand %vm994, %vm253
  %vm1011 = vmand %vm995, %vm254
  %vm1012 = vmand %vm996, %vm255
  %vm1013 = vmand %vm997, %vm256
  %vm1014 = vmand %vm998, %vm257
  %vm1015 = vmand %vm999, %vm258
  %vm1016 = vmand %vm1000, %vm259
  %vm1017 = vmand %vm1001, %vm260
  %vm1018 = vmand %vm1002, %vm261
  %vm1019 = vmand %vm1003, %vm262
  %vm1020 = vmand %vm1004, %vm263
  %vm1021 = vmand %vm1005, %vm264
  %vm1022 = vmand %vm1006, %vm265
  %vm1023 = vmand %vm1007, %vm266
  %vm1024 = vmand %vm1008, %vm283
  %vm1025 = vmand %vm1009, %vm284
  %vm1026 = vmand %vm1010, %vm285
  %vm1027 = vmand %vm1011, %vm286
  %vm1028 = vmand %vm1012, %vm287
  %vm1029 = vmand %vm1013, %vm288
  %vm1030 = vmand %vm1014, %vm289
  %vm1031 = vmand %vm1015, %vm290
  %vm1032 = vmand %vm1016, %vm291
  %vm1033 = vmand %vm1017, %vm292
  %vm1034 = vmand %vm1018, %vm293
  %vm1035 = vmand %vm1019, %vm294
  %vm1036 = vmand %vm1020, %vm295
  %vm1037 = vmand %vm1021, %vm296
  %vm1038 = vmand %vm1022, %vm297
  %vm1039 = vmand %vm1023, %vm298
  %v1040 = vsel %vm1024, %v942, 0.0
  %v1041 = vsel %vm1025, %v941, 0.0
  %v1042 = vsel %vm1026, %v940, 0.0
  %v1043 = vsel %vm1027, %v939, 0.0
  %v1044 = vsel %vm1028, %v938, 0.0
  %v1045 = vsel %vm1029, %v937, 0.0
  %v1046 = vsel %vm1030, %v936, 0.0
  %v1047 = vsel %vm1031, %v935, 0.0
  %v1048 = vsel %vm1032, %v934, 0.0
  %v1049 = vsel %vm1033, %v933, 0.0
  %v1050 = vsel %vm1034, %v932, 0.0
  %v1051 = vsel %vm1035, %v931, 0.0
  %v1052 = vsel %vm1036, %v930, 0.0
  %v1053 = vsel %vm1037, %v929, 0.0
  %v1054 = vsel %vm1038, %v928, 0.0
  %v1055 = vsel %vm1039, %v943, 0.0
  %1056 = vrot.lane.b32.xlu0 %v41, 112
  %v1057 = vpop.permute.xlu0 %1056
  %1058 = vrot.lane.b32.xlu0 %v42, 112
  %v1059 = vpop.permute.xlu0 %1058
  %1060 = vrot.lane.b32.xlu0 %v43, 112
  %v1061 = vpop.permute.xlu0 %1060
  %1062 = vrot.lane.b32.xlu0 %v44, 112
  %v1063 = vpop.permute.xlu0 %1062
  %1064 = vrot.lane.b32.xlu0 %v45, 112
  %v1065 = vpop.permute.xlu0 %1064
  %1066 = vrot.lane.b32.xlu0 %v46, 112
  %v1067 = vpop.permute.xlu0 %1066
  %1068 = vrot.lane.b32.xlu0 %v47, 112
  %v1069 = vpop.permute.xlu0 %1068
  %1070 = vrot.lane.b32.xlu0 %v48, 112
  %v1071 = vpop.permute.xlu0 %1070
  %1072 = vrot.lane.b32.xlu0 %v49, 112
  %v1073 = vpop.permute.xlu0 %1072
  %1074 = vrot.lane.b32.xlu0 %v50, 112
  %v1075 = vpop.permute.xlu0 %1074
  %1076 = vrot.lane.b32.xlu0 %v51, 112
  %v1077 = vpop.permute.xlu0 %1076
  %1078 = vrot.lane.b32.xlu0 %v52, 112
  %v1079 = vpop.permute.xlu0 %1078
  %1080 = vrot.lane.b32.xlu0 %v53, 112
  %v1081 = vpop.permute.xlu0 %1080
  %1082 = vrot.lane.b32.xlu0 %v54, 112
  %v1083 = vpop.permute.xlu0 %1082
  %1084 = vrot.lane.b32.xlu0 %v55, 112
  %v1085 = vpop.permute.xlu0 %1084
  %1086 = vrot.lane.b32.xlu0 %v56, 112
  %v1087 = vpop.permute.xlu0 %1086
  %vm1088 = vcmp.lt.s32.totalorder %v58, 112
  %v1089 = vsel %vm1088, %v1085, %v1087
  %v1090 = vsel %vm1088, %v1083, %v1085
  %v1091 = vsel %vm1088, %v1081, %v1083
  %v1092 = vsel %vm1088, %v1079, %v1081
  %v1093 = vsel %vm1088, %v1077, %v1079
  %v1094 = vsel %vm1088, %v1075, %v1077
  %v1095 = vsel %vm1088, %v1073, %v1075
  %v1096 = vsel %vm1088, %v1071, %v1073
  %v1097 = vsel %vm1088, %v1069, %v1071
  %v1098 = vsel %vm1088, %v1067, %v1069
  %v1099 = vsel %vm1088, %v1065, %v1067
  %v1100 = vsel %vm1088, %v1063, %v1065
  %v1101 = vsel %vm1088, %v1061, %v1063
  %v1102 = vsel %vm1088, %v1059, %v1061
  %v1103 = vsel %vm1088, %v1057, %v1059
  %v1104 = vsel %vm1088, %v1087, %v1057
  %vm1105 = vmand %vm992, %vm380
  %vm1106 = vmand %vm993, %vm381
  %vm1107 = vmand %vm994, %vm382
  %vm1108 = vmand %vm995, %vm383
  %vm1109 = vmand %vm996, %vm384
  %vm1110 = vmand %vm997, %vm385
  %vm1111 = vmand %vm998, %vm386
  %vm1112 = vmand %vm999, %vm387
  %vm1113 = vmand %vm1000, %vm388
  %vm1114 = vmand %vm1001, %vm389
  %vm1115 = vmand %vm1002, %vm390
  %vm1116 = vmand %vm1003, %vm391
  %vm1117 = vmand %vm1004, %vm392
  %vm1118 = vmand %vm1005, %vm393
  %vm1119 = vmand %vm1006, %vm394
  %vm1120 = vmand %vm1007, %vm395
  %vm1121 = vmand %vm1105, %vm412
  %vm1122 = vmand %vm1106, %vm413
  %vm1123 = vmand %vm1107, %vm414
  %vm1124 = vmand %vm1108, %vm415
  %vm1125 = vmand %vm1109, %vm416
  %vm1126 = vmand %vm1110, %vm417
  %vm1127 = vmand %vm1111, %vm418
  %vm1128 = vmand %vm1112, %vm419
  %vm1129 = vmand %vm1113, %vm420
  %vm1130 = vmand %vm1114, %vm421
  %vm1131 = vmand %vm1115, %vm422
  %vm1132 = vmand %vm1116, %vm423
  %vm1133 = vmand %vm1117, %vm424
  %vm1134 = vmand %vm1118, %vm425
  %vm1135 = vmand %vm1119, %vm426
  %vm1136 = vmand %vm1120, %vm427
  %v1137 = vsel %vm1121, %v1103, 0.0
  %v1138 = vsel %vm1122, %v1102, 0.0
  %v1139 = vsel %vm1123, %v1101, 0.0
  %v1140 = vsel %vm1124, %v1100, 0.0
  %v1141 = vsel %vm1125, %v1099, 0.0
  %v1142 = vsel %vm1126, %v1098, 0.0
  %v1143 = vsel %vm1127, %v1097, 0.0
  %v1144 = vsel %vm1128, %v1096, 0.0
  %v1145 = vsel %vm1129, %v1095, 0.0
  %v1146 = vsel %vm1130, %v1094, 0.0
  %v1147 = vsel %vm1131, %v1093, 0.0
  %v1148 = vsel %vm1132, %v1092, 0.0
  %v1149 = vsel %vm1133, %v1091, 0.0
  %v1150 = vsel %vm1134, %v1090, 0.0
  %v1151 = vsel %vm1135, %v1089, 0.0
  %v1152 = vsel %vm1136, %v1104, 0.0
  %1153 = vrot.lane.b32.xlu0 %v41, 111
  %v1154 = vpop.permute.xlu0 %1153
  %1155 = vrot.lane.b32.xlu0 %v42, 111
  %v1156 = vpop.permute.xlu0 %1155
  %1157 = vrot.lane.b32.xlu0 %v43, 111
  %v1158 = vpop.permute.xlu0 %1157
  %1159 = vrot.lane.b32.xlu0 %v44, 111
  %v1160 = vpop.permute.xlu0 %1159
  %1161 = vrot.lane.b32.xlu0 %v45, 111
  %v1162 = vpop.permute.xlu0 %1161
  %1163 = vrot.lane.b32.xlu0 %v46, 111
  %v1164 = vpop.permute.xlu0 %1163
  %1165 = vrot.lane.b32.xlu0 %v47, 111
  %v1166 = vpop.permute.xlu0 %1165
  %1167 = vrot.lane.b32.xlu0 %v48, 111
  %v1168 = vpop.permute.xlu0 %1167
  %1169 = vrot.lane.b32.xlu0 %v49, 111
  %v1170 = vpop.permute.xlu0 %1169
  %1171 = vrot.lane.b32.xlu0 %v50, 111
  %v1172 = vpop.permute.xlu0 %1171
  %1173 = vrot.lane.b32.xlu0 %v51, 111
  %v1174 = vpop.permute.xlu0 %1173
  %1175 = vrot.lane.b32.xlu0 %v52, 111
  %v1176 = vpop.permute.xlu0 %1175
  %1177 = vrot.lane.b32.xlu0 %v53, 111
  %v1178 = vpop.permute.xlu0 %1177
  %1179 = vrot.lane.b32.xlu0 %v54, 111
  %v1180 = vpop.permute.xlu0 %1179
  %1181 = vrot.lane.b32.xlu0 %v55, 111
  %v1182 = vpop.permute.xlu0 %1181
  %1183 = vrot.lane.b32.xlu0 %v56, 111
  %v1184 = vpop.permute.xlu0 %1183
  %vm1185 = vcmp.lt.s32.totalorder %v58, 111
  %v1186 = vsel %vm1185, %v1182, %v1184
  %v1187 = vsel %vm1185, %v1180, %v1182
  %v1188 = vsel %vm1185, %v1178, %v1180
  %v1189 = vsel %vm1185, %v1176, %v1178
  %v1190 = vsel %vm1185, %v1174, %v1176
  %v1191 = vsel %vm1185, %v1172, %v1174
  %v1192 = vsel %vm1185, %v1170, %v1172
  %v1193 = vsel %vm1185, %v1168, %v1170
  %v1194 = vsel %vm1185, %v1166, %v1168
  %v1195 = vsel %vm1185, %v1164, %v1166
  %v1196 = vsel %vm1185, %v1162, %v1164
  %v1197 = vsel %vm1185, %v1160, %v1162
  %v1198 = vsel %vm1185, %v1158, %v1160
  %v1199 = vsel %vm1185, %v1156, %v1158
  %v1200 = vsel %vm1185, %v1154, %v1156
  %v1201 = vsel %vm1185, %v1184, %v1154
  %vm1202 = vmand %vm992, %vm525
  %vm1203 = vmand %vm993, %vm526
  %vm1204 = vmand %vm994, %vm527
  %vm1205 = vmand %vm995, %vm528
  %vm1206 = vmand %vm996, %vm529
  %vm1207 = vmand %vm997, %vm530
  %vm1208 = vmand %vm998, %vm531
  %vm1209 = vmand %vm999, %vm532
  %vm1210 = vmand %vm1000, %vm533
  %vm1211 = vmand %vm1001, %vm534
  %vm1212 = vmand %vm1002, %vm535
  %vm1213 = vmand %vm1003, %vm536
  %vm1214 = vmand %vm1004, %vm537
  %vm1215 = vmand %vm1005, %vm538
  %vm1216 = vmand %vm1006, %vm539
  %vm1217 = vmand %vm1007, %vm540
  %vm1218 = vmand %vm1202, %vm557
  %vm1219 = vmand %vm1203, %vm558
  %vm1220 = vmand %vm1204, %vm559
  %vm1221 = vmand %vm1205, %vm560
  %vm1222 = vmand %vm1206, %vm561
  %vm1223 = vmand %vm1207, %vm562
  %vm1224 = vmand %vm1208, %vm563
  %vm1225 = vmand %vm1209, %vm564
  %vm1226 = vmand %vm1210, %vm565
  %vm1227 = vmand %vm1211, %vm566
  %vm1228 = vmand %vm1212, %vm567
  %vm1229 = vmand %vm1213, %vm568
  %vm1230 = vmand %vm1214, %vm569
  %vm1231 = vmand %vm1215, %vm570
  %vm1232 = vmand %vm1216, %vm571
  %vm1233 = vmand %vm1217, %vm572
  %v1234 = vsel %vm1218, %v1200, 0.0
  %v1235 = vsel %vm1219, %v1199, 0.0
  %v1236 = vsel %vm1220, %v1198, 0.0
  %v1237 = vsel %vm1221, %v1197, 0.0
  %v1238 = vsel %vm1222, %v1196, 0.0
  %v1239 = vsel %vm1223, %v1195, 0.0
  %v1240 = vsel %vm1224, %v1194, 0.0
  %v1241 = vsel %vm1225, %v1193, 0.0
  %v1242 = vsel %vm1226, %v1192, 0.0
  %v1243 = vsel %vm1227, %v1191, 0.0
  %v1244 = vsel %vm1228, %v1190, 0.0
  %v1245 = vsel %vm1229, %v1189, 0.0
  %v1246 = vsel %vm1230, %v1188, 0.0
  %v1247 = vsel %vm1231, %v1187, 0.0
  %v1248 = vsel %vm1232, %v1186, 0.0
  %v1249 = vsel %vm1233, %v1201, 0.0
  %v1250 = vpack.c.bf16 %v444, %v315
  %v1251 = vpack.c.bf16 %v445, %v316
  %v1252 = vpack.c.bf16 %v446, %v317
  %v1253 = vpack.c.bf16 %v447, %v318
  %v1254 = vpack.c.bf16 %v448, %v319
  %v1255 = vpack.c.bf16 %v449, %v320
  %v1256 = vpack.c.bf16 %v450, %v321
  %v1257 = vpack.c.bf16 %v451, %v322
  %v1258 = vpack.c.bf16 %v452, %v323
  %v1259 = vpack.c.bf16 %v453, %v324
  %v1260 = vpack.c.bf16 %v454, %v325
  %v1261 = vpack.c.bf16 %v455, %v326
  %v1262 = vpack.c.bf16 %v456, %v327
  %v1263 = vpack.c.bf16 %v457, %v328
  %v1264 = vpack.c.bf16 %v458, %v329
  %v1265 = vpack.c.bf16 %v459, %v330
  %v1266 = vpack.c.bf16 %v734, %v589
  %v1267 = vpack.c.bf16 %v735, %v590
  %v1268 = vpack.c.bf16 %v736, %v591
  %v1269 = vpack.c.bf16 %v737, %v592
  %v1270 = vpack.c.bf16 %v738, %v593
  %v1271 = vpack.c.bf16 %v739, %v594
  %v1272 = vpack.c.bf16 %v740, %v595
  %v1273 = vpack.c.bf16 %v741, %v596
  %v1274 = vpack.c.bf16 %v742, %v597
  %v1275 = vpack.c.bf16 %v743, %v598
  %v1276 = vpack.c.bf16 %v744, %v599
  %v1277 = vpack.c.bf16 %v745, %v600
  %v1278 = vpack.c.bf16 %v746, %v601
  %v1279 = vpack.c.bf16 %v747, %v602
  %v1280 = vpack.c.bf16 %v748, %v603
  %v1281 = vpack.c.bf16 %v749, %v604
  %v1282 = vpack.c.bf16 %v879, %v782
  %v1283 = vpack.c.bf16 %v880, %v783
  %v1284 = vpack.c.bf16 %v881, %v784
  %v1285 = vpack.c.bf16 %v882, %v785
  %v1286 = vpack.c.bf16 %v883, %v786
  %v1287 = vpack.c.bf16 %v884, %v787
  %v1288 = vpack.c.bf16 %v885, %v788
  %v1289 = vpack.c.bf16 %v886, %v789
  %v1290 = vpack.c.bf16 %v887, %v790
  %v1291 = vpack.c.bf16 %v888, %v791
  %v1292 = vpack.c.bf16 %v889, %v792
  %v1293 = vpack.c.bf16 %v890, %v793
  %v1294 = vpack.c.bf16 %v891, %v794
  %v1295 = vpack.c.bf16 %v892, %v795
  %v1296 = vpack.c.bf16 %v893, %v796
  %v1297 = vpack.c.bf16 %v894, %v797
  %v1298 = vpack.c.bf16 %v1137, %v1040
  %v1299 = vpack.c.bf16 %v1138, %v1041
  %v1300 = vpack.c.bf16 %v1139, %v1042
  %v1301 = vpack.c.bf16 %v1140, %v1043
  %v1302 = vpack.c.bf16 %v1141, %v1044
  %v1303 = vpack.c.bf16 %v1142, %v1045
  %v1304 = vpack.c.bf16 %v1143, %v1046
  %v1305 = vpack.c.bf16 %v1144, %v1047
  %v1306 = vpack.c.bf16 %v1145, %v1048
  %v1307 = vpack.c.bf16 %v1146, %v1049
  %v1308 = vpack.c.bf16 %v1147, %v1050
  %v1309 = vpack.c.bf16 %v1148, %v1051
  %v1310 = vpack.c.bf16 %v1149, %v1052
  %v1311 = vpack.c.bf16 %v1150, %v1053
  %v1312 = vpack.c.bf16 %v1151, %v1054
  %v1313 = vpack.c.bf16 %v1152, %v1055
  %v1314 = vpack.c.bf16 %v1234, %v1234
  %v1315 = vpack.c.bf16 %v1235, %v1235
  %v1316 = vpack.c.bf16 %v1236, %v1236
  %v1317 = vpack.c.bf16 %v1237, %v1237
  %v1318 = vpack.c.bf16 %v1238, %v1238
  %v1319 = vpack.c.bf16 %v1239, %v1239
  %v1320 = vpack.c.bf16 %v1240, %v1240
  %v1321 = vpack.c.bf16 %v1241, %v1241
  %v1322 = vpack.c.bf16 %v1242, %v1242
  %v1323 = vpack.c.bf16 %v1243, %v1243
  %v1324 = vpack.c.bf16 %v1244, %v1244
  %v1325 = vpack.c.bf16 %v1245, %v1245
  %v1326 = vpack.c.bf16 %v1246, %v1246
  %v1327 = vpack.c.bf16 %v1247, %v1247
  %v1328 = vpack.c.bf16 %v1248, %v1248
  %v1329 = vpack.c.bf16 %v1249, %v1249
  %v1330 = vld [vmem:[%s1] sm:$0xf]
  %v1331 = vld [vmem:[%s1 + $0x4] sm:$0xf]
  %v1332 = vld [vmem:[%s1 + $0x8] sm:$0xf]
  %v1333 = vld [vmem:[%s1 + $0xc] sm:$0xf]
  %v1334 = vld [vmem:[%s1 + $0x10] sm:$0xf]
  %v1335 = vld [vmem:[%s1 + $0x14] sm:$0xf]
  %v1336 = vld [vmem:[%s1 + $0x18] sm:$0xf]
  %v1337 = vld [vmem:[%s1 + $0x1c] sm:$0xf]
  %v1338 = vld [vmem:[%s2] sm:$0xff]
  %v1339 = vld [vmem:[%s2 + $0x8] sm:$0xff]
  %v1340 = vld [vmem:[%s2 + $0x10] sm:$0xff]
  %v1341 = vld [vmem:[%s2 + $0x18] sm:$0xff]
  %v1342 = vld [vmem:[%s2 + $0x20] sm:$0xff]
  %v1343 = vld [vmem:[%s2 + $0x28] sm:$0xff]
  %v1344 = vld [vmem:[%s2 + $0x30] sm:$0xff]
  %v1345 = vld [vmem:[%s2 + $0x38] sm:$0xff]
  %1347 = vset.pattern.permute.xlu0 0
  %1348 = vperm.xlu0 %1347, %v1338
  %v1349 = vpop.permute.xlu0 %1348
  %1352 = vset.pattern.permute.xlu0 0
  %1353 = vperm.xlu0 %1352, %v1339
  %v1354 = vpop.permute.xlu0 %1353
  %1357 = vset.pattern.permute.xlu0 0
  %1358 = vperm.xlu0 %1357, %v1340
  %v1359 = vpop.permute.xlu0 %1358
  %1362 = vset.pattern.permute.xlu0 0
  %1363 = vperm.xlu0 %1362, %v1341
  %v1364 = vpop.permute.xlu0 %1363
  %1367 = vset.pattern.permute.xlu0 0
  %1368 = vperm.xlu0 %1367, %v1342
  %v1369 = vpop.permute.xlu0 %1368
  %1372 = vset.pattern.permute.xlu0 0
  %1373 = vperm.xlu0 %1372, %v1343
  %v1374 = vpop.permute.xlu0 %1373
  %1377 = vset.pattern.permute.xlu0 0
  %1378 = vperm.xlu0 %1377, %v1344
  %v1379 = vpop.permute.xlu0 %1378
  %1382 = vset.pattern.permute.xlu0 0
  %1383 = vperm.xlu0 %1382, %v1345
  %v1384 = vpop.permute.xlu0 %1383
  %v1394 = vunpack.c.l.b16 %v1330
  %v1395 = vunpack.c.l.b16 %v1331
  %v1396 = vunpack.c.l.b16 %v1332
  %v1397 = vunpack.c.l.b16 %v1333
  %v1398 = vunpack.c.l.b16 %v1334
  %v1399 = vunpack.c.l.b16 %v1335
  %v1400 = vunpack.c.l.b16 %v1336
  %v1401 = vunpack.c.l.b16 %v1337
  %v1402 = vpack.c.b16 %v1395, %v1394
  %v1403 = vpack.c.b16 %v1397, %v1396
  %v1404 = vpack.c.b16 %v1399, %v1398
  %v1405 = vpack.c.b16 %v1401, %v1400
  %vm1406 = vcmask 588800
  %v1408 = vsel %vm1406, %v1402, 0
  %v1411 = vsel %vm1406, %v1403, 0
  %v1414 = vsel %vm1406, %v1404, 0
  %v1417 = vsel %vm1406, %v1405, 0
  %vm1419 = vcmask 1043456
  %v1421 = vsel %vm1419, %v1314, 0
  %v1424 = vsel %vm1419, %v1315, 0
  %v1427 = vsel %vm1419, %v1316, 0
  %v1430 = vsel %vm1419, %v1317, 0
  %v1433 = vsel %vm1419, %v1318, 0
  %v1436 = vsel %vm1419, %v1319, 0
  %v1439 = vsel %vm1419, %v1320, 0
  %v1442 = vsel %vm1419, %v1321, 0
  %v1445 = vsel %vm1419, %v1322, 0
  %v1448 = vsel %vm1419, %v1323, 0
  %v1451 = vsel %vm1419, %v1324, 0
  %v1454 = vsel %vm1419, %v1325, 0
  %v1457 = vsel %vm1419, %v1326, 0
  %v1460 = vsel %vm1419, %v1327, 0
  %v1463 = vsel %vm1419, %v1328, 0
  %v1466 = vsel %vm1419, %v1329, 0
  %1468 = vmatprep.subr.bf16.mxu0 %v1251
  %1469 = vmatpush1.bf16.msra.mxu0 %v1250
  %1470 = vmatprep.subr.bf16.mxu0 %v1267
  %1471 = vmatpush1.bf16.msra.mxu0 %v1266
  %1472 = vmatprep.subr.bf16.mxu0 %v1283
  %1473 = vmatpush1.bf16.msra.mxu0 %v1282
  %1474 = vmatprep.subr.bf16.mxu0 %v1299
  %1475 = vmatpush1.bf16.msra.mxu0 %v1298
  %1476 = vmatprep.subr.bf16.mxu0 %v1424
  %1477 = vmatpush1.bf16.msra.mxu0 %v1421
  %1478 = vmatprep.subr.bf16.mxu0 0
  %1479 = vmatpush1.bf16.msra.mxu0 0
  %1480 = vmatprep.subr.bf16.mxu0 0
  %1481 = vmatpush1.bf16.msra.mxu0 0
  %1482 = vmatprep.subr.bf16.mxu0 0
  %1483 = vmatpush1.bf16.msra.mxu0 0
  %1484 = vmatprep.subr.bf16.mxu0 0
  %1485 = vmatpush1.bf16.msra.mxu0 0
  %1486 = vmatprep.subr.bf16.mxu0 0
  %1487 = vmatpush1.bf16.msra.mxu0 0
  %1488 = vmatprep.subr.bf16.mxu0 0
  %1489 = vmatpush1.bf16.msra.mxu0 0
  %1490 = vmatprep.subr.bf16.mxu0 0
  %1491 = vmatpush1.bf16.msra.mxu0 0
  %1492 = vmatprep.subr.bf16.mxu0 0
  %1493 = vmatpush1.bf16.msra.mxu0 0
  %1494 = vmatprep.subr.bf16.mxu0 0
  %1495 = vmatpush1.bf16.msra.mxu0 0
  %1496 = vmatprep.subr.bf16.mxu0 0
  %1497 = vmatpush1.bf16.msra.mxu0 0
  %1498 = vmatprep.subr.bf16.mxu0 0
  %1499 = vmatpush1.bf16.msra.mxu0 0
  %1500 = vmatprep.mubr.bf16.mxu0 0
  %1501 = vmatmul.mubr.bf16.gmra.mrb[0].mxu0 %v1408
  %v1502 = vpop.f32.mrb[0].mxu0
  %v1503 = vadd.f32 %v1349, %v1502
  %v1504 = vpop.f32.mrb[0].mxu0
  %v1505 = vadd.f32 %v1349, %v1504
  %v1506 = vpop.f32.mrb[0].mxu0
  %v1507 = vadd.f32 %v1354, %v1506
  %v1508 = vpop.f32.mrb[0].mxu0
  %v1509 = vadd.f32 %v1354, %v1508
  %1510 = vmatprep.mubr.bf16.mxu0 0
  %1511 = vmatmul.mubr.bf16.gmra.mrb[0].mxu0 %v1411
  %v1512 = vpop.f32.mrb[0].mxu0
  %v1513 = vadd.f32 %v1359, %v1512
  %v1514 = vpop.f32.mrb[0].mxu0
  %v1515 = vadd.f32 %v1359, %v1514
  %v1516 = vpop.f32.mrb[0].mxu0
  %v1517 = vadd.f32 %v1364, %v1516
  %v1518 = vpop.f32.mrb[0].mxu0
  %v1519 = vadd.f32 %v1364, %v1518
  %1520 = vmatprep.mubr.bf16.mxu0 0
  %1521 = vmatmul.mubr.bf16.gmra.mrb[0].mxu0 %v1414
  %v1522 = vpop.f32.mrb[0].mxu0
  %v1523 = vadd.f32 %v1369, %v1522
  %v1524 = vpop.f32.mrb[0].mxu0
  %v1525 = vadd.f32 %v1369, %v1524
  %v1526 = vpop.f32.mrb[0].mxu0
  %v1527 = vadd.f32 %v1374, %v1526
  %v1528 = vpop.f32.mrb[0].mxu0
  %v1529 = vadd.f32 %v1374, %v1528
  %1530 = vmatprep.mubr.bf16.mxu0 0
  %1531 = vmatmul.mubr.bf16.gmra.mrb[0].mxu0 %v1417
  %v1532 = vpop.f32.mrb[0].mxu0
  %v1533 = vadd.f32 %v1379, %v1532
  %v1534 = vpop.f32.mrb[0].mxu0
  %v1535 = vadd.f32 %v1379, %v1534
  %v1536 = vpop.f32.mrb[0].mxu0
  %v1537 = vadd.f32 %v1384, %v1536
  %v1538 = vpop.f32.mrb[0].mxu0
  %v1539 = vadd.f32 %v1384, %v1538
  %1540 = vdwg.mxu0
  %1541 = vmatprep.subr.bf16.mxu0 %v1253
  %1542 = vmatpush1.bf16.msra.mxu0 %v1252
  %1543 = vmatprep.subr.bf16.mxu0 %v1269
  %1544 = vmatpush1.bf16.msra.mxu0 %v1268
  %1545 = vmatprep.subr.bf16.mxu0 %v1285
  %1546 = vmatpush1.bf16.msra.mxu0 %v1284
  %1547 = vmatprep.subr.bf16.mxu0 %v1301
  %1548 = vmatpush1.bf16.msra.mxu0 %v1300
  %1549 = vmatprep.subr.bf16.mxu0 %v1430
  %1550 = vmatpush1.bf16.msra.mxu0 %v1427
  %1551 = vmatprep.subr.bf16.mxu0 0
  %1552 = vmatpush1.bf16.msra.mxu0 0
  %1553 = vmatprep.subr.bf16.mxu0 0
  %1554 = vmatpush1.bf16.msra.mxu0 0
  %1555 = vmatprep.subr.bf16.mxu0 0
  %1556 = vmatpush1.bf16.msra.mxu0 0
  %1557 = vmatprep.subr.bf16.mxu0 0
  %1558 = vmatpush1.bf16.msra.mxu0 0
  %1559 = vmatprep.subr.bf16.mxu0 0
  %1560 = vmatpush1.bf16.msra.mxu0 0
  %1561 = vmatprep.subr.bf16.mxu0 0
  %1562 = vmatpush1.bf16.msra.mxu0 0
  %1563 = vmatprep.subr.bf16.mxu0 0
  %1564 = vmatpush1.bf16.msra.mxu0 0
  %1565 = vmatprep.subr.bf16.mxu0 0
  %1566 = vmatpush1.bf16.msra.mxu0 0
  %1567 = vmatprep.subr.bf16.mxu0 0
  %1568 = vmatpush1.bf16.msra.mxu0 0
  %1569 = vmatprep.subr.bf16.mxu0 0
  %1570 = vmatpush1.bf16.msra.mxu0 0
  %1571 = vmatprep.subr.bf16.mxu0 0
  %1572 = vmatpush1.bf16.msra.mxu0 0
  %1573 = vmatprep.mubr.bf16.mxu0 0
  %1574 = vmatmul.mubr.bf16.gmra.mrb[0].mxu0 %v1408
  %v1575 = vpop.f32.mrb[0].mxu0
  %v1576 = vadd.f32 %v1349, %v1575
  %v1577 = vpop.f32.mrb[0].mxu0
  %v1578 = vadd.f32 %v1349, %v1577
  %v1579 = vpop.f32.mrb[0].mxu0
  %v1580 = vadd.f32 %v1354, %v1579
  %v1581 = vpop.f32.mrb[0].mxu0
  %v1582 = vadd.f32 %v1354, %v1581
  %1583 = vmatprep.mubr.bf16.mxu0 0
  %1584 = vmatmul.mubr.bf16.gmra.mrb[0].mxu0 %v1411
  %v1585 = vpop.f32.mrb[0].mxu0
  %v1586 = vadd.f32 %v1359, %v1585
  %v1587 = vpop.f32.mrb[0].mxu0
  %v1588 = vadd.f32 %v1359, %v1587
  %v1589 = vpop.f32.mrb[0].mxu0
  %v1590 = vadd.f32 %v1364, %v1589
  %v1591 = vpop.f32.mrb[0].mxu0
  %v1592 = vadd.f32 %v1364, %v1591
  %1593 = vmatprep.mubr.bf16.mxu0 0
  %1594 = vmatmul.mubr.bf16.gmra.mrb[0].mxu0 %v1414
  %v1595 = vpop.f32.mrb[0].mxu0
  %v1596 = vadd.f32 %v1369, %v1595
  %v1597 = vpop.f32.mrb[0].mxu0
  %v1598 = vadd.f32 %v1369, %v1597
  %v1599 = vpop.f32.mrb[0].mxu0
  %v1600 = vadd.f32 %v1374, %v1599
  %v1601 = vpop.f32.mrb[0].mxu0
  %v1602 = vadd.f32 %v1374, %v1601
  %1603 = vmatprep.mubr.bf16.mxu0 0
  %1604 = vmatmul.mubr.bf16.gmra.mrb[0].mxu0 %v1417
  %v1605 = vpop.f32.mrb[0].mxu0
  %v1606 = vadd.f32 %v1379, %v1605
  %v1607 = vpop.f32.mrb[0].mxu0
  %v1608 = vadd.f32 %v1379, %v1607
  %v1609 = vpop.f32.mrb[0].mxu0
  %v1610 = vadd.f32 %v1384, %v1609
  %v1611 = vpop.f32.mrb[0].mxu0
  %v1612 = vadd.f32 %v1384, %v1611
  %1613 = vdwg.mxu0
  %1614 = vmatprep.subr.bf16.mxu0 %v1255
  %1615 = vmatpush1.bf16.msra.mxu0 %v1254
  %1616 = vmatprep.subr.bf16.mxu0 %v1271
  %1617 = vmatpush1.bf16.msra.mxu0 %v1270
  %1618 = vmatprep.subr.bf16.mxu0 %v1287
  %1619 = vmatpush1.bf16.msra.mxu0 %v1286
  %1620 = vmatprep.subr.bf16.mxu0 %v1303
  %1621 = vmatpush1.bf16.msra.mxu0 %v1302
  %1622 = vmatprep.subr.bf16.mxu0 %v1436
  %1623 = vmatpush1.bf16.msra.mxu0 %v1433
  %1624 = vmatprep.subr.bf16.mxu0 0
  %1625 = vmatpush1.bf16.msra.mxu0 0
  %1626 = vmatprep.subr.bf16.mxu0 0
  %1627 = vmatpush1.bf16.msra.mxu0 0
  %1628 = vmatprep.subr.bf16.mxu0 0
  %1629 = vmatpush1.bf16.msra.mxu0 0
  %1630 = vmatprep.subr.bf16.mxu0 0
  %1631 = vmatpush1.bf16.msra.mxu0 0
  %1632 = vmatprep.subr.bf16.mxu0 0
  %1633 = vmatpush1.bf16.msra.mxu0 0
  %1634 = vmatprep.subr.bf16.mxu0 0
  %1635 = vmatpush1.bf16.msra.mxu0 0
  %1636 = vmatprep.subr.bf16.mxu0 0
  %1637 = vmatpush1.bf16.msra.mxu0 0
  %1638 = vmatprep.subr.bf16.mxu0 0
  %1639 = vmatpush1.bf16.msra.mxu0 0
  %1640 = vmatprep.subr.bf16.mxu0 0
  %1641 = vmatpush1.bf16.msra.mxu0 0
  %1642 = vmatprep.subr.bf16.mxu0 0
  %1643 = vmatpush1.bf16.msra.mxu0 0
  %1644 = vmatprep.subr.bf16.mxu0 0
  %1645 = vmatpush1.bf16.msra.mxu0 0
  %1646 = vmatprep.mubr.bf16.mxu0 0
  %1647 = vmatmul.mubr.bf16.gmra.mrb[0].mxu0 %v1408
  %v1648 = vpop.f32.mrb[0].mxu0
  %v1649 = vadd.f32 %v1349, %v1648
  %v1650 = vpop.f32.mrb[0].mxu0
  %v1651 = vadd.f32 %v1349, %v1650
  %v1652 = vpop.f32.mrb[0].mxu0
  %v1653 = vadd.f32 %v1354, %v1652
  %v1654 = vpop.f32.mrb[0].mxu0
  %v1655 = vadd.f32 %v1354, %v1654
  %1656 = vmatprep.mubr.bf16.mxu0 0
  %1657 = vmatmul.mubr.bf16.gmra.mrb[0].mxu0 %v1411
  %v1658 = vpop.f32.mrb[0].mxu0
  %v1659 = vadd.f32 %v1359, %v1658
  %v1660 = vpop.f32.mrb[0].mxu0
  %v1661 = vadd.f32 %v1359, %v1660
  %v1662 = vpop.f32.mrb[0].mxu0
  %v1663 = vadd.f32 %v1364, %v1662
  %v1664 = vpop.f32.mrb[0].mxu0
  %v1665 = vadd.f32 %v1364, %v1664
  %1666 = vmatprep.mubr.bf16.mxu0 0
  %1667 = vmatmul.mubr.bf16.gmra.mrb[0].mxu0 %v1414
  %v1668 = vpop.f32.mrb[0].mxu0
  %v1669 = vadd.f32 %v1369, %v1668
  %v1670 = vpop.f32.mrb[0].mxu0
  %v1671 = vadd.f32 %v1369, %v1670
  %v1672 = vpop.f32.mrb[0].mxu0
  %v1673 = vadd.f32 %v1374, %v1672
  %v1674 = vpop.f32.mrb[0].mxu0
  %v1675 = vadd.f32 %v1374, %v1674
  %1676 = vmatprep.mubr.bf16.mxu0 0
  %1677 = vmatmul.mubr.bf16.gmra.mrb[0].mxu0 %v1417
  %v1678 = vpop.f32.mrb[0].mxu0
  %v1679 = vadd.f32 %v1379, %v1678
  %v1680 = vpop.f32.mrb[0].mxu0
  %v1681 = vadd.f32 %v1379, %v1680
  %v1682 = vpop.f32.mrb[0].mxu0
  %v1683 = vadd.f32 %v1384, %v1682
  %v1684 = vpop.f32.mrb[0].mxu0
  %v1685 = vadd.f32 %v1384, %v1684
  %1686 = vdwg.mxu0
  %1687 = vmatprep.subr.bf16.mxu0 %v1257
  %1688 = vmatpush1.bf16.msra.mxu0 %v1256
  %1689 = vmatprep.subr.bf16.mxu0 %v1273
  %1690 = vmatpush1.bf16.msra.mxu0 %v1272
  %1691 = vmatprep.subr.bf16.mxu0 %v1289
  %1692 = vmatpush1.bf16.msra.mxu0 %v1288
  %1693 = vmatprep.subr.bf16.mxu0 %v1305
  %1694 = vmatpush1.bf16.msra.mxu0 %v1304
  %1695 = vmatprep.subr.bf16.mxu0 %v1442
  %1696 = vmatpush1.bf16.msra.mxu0 %v1439
  %1697 = vmatprep.subr.bf16.mxu0 0
  %1698 = vmatpush1.bf16.msra.mxu0 0
  %1699 = vmatprep.subr.bf16.mxu0 0
  %1700 = vmatpush1.bf16.msra.mxu0 0
  %1701 = vmatprep.subr.bf16.mxu0 0
  %1702 = vmatpush1.bf16.msra.mxu0 0
  %1703 = vmatprep.subr.bf16.mxu0 0
  %1704 = vmatpush1.bf16.msra.mxu0 0
  %1705 = vmatprep.subr.bf16.mxu0 0
  %1706 = vmatpush1.bf16.msra.mxu0 0
  %1707 = vmatprep.subr.bf16.mxu0 0
  %1708 = vmatpush1.bf16.msra.mxu0 0
  %1709 = vmatprep.subr.bf16.mxu0 0
  %1710 = vmatpush1.bf16.msra.mxu0 0
  %1711 = vmatprep.subr.bf16.mxu0 0
  %1712 = vmatpush1.bf16.msra.mxu0 0
  %1713 = vmatprep.subr.bf16.mxu0 0
  %1714 = vmatpush1.bf16.msra.mxu0 0
  %1715 = vmatprep.subr.bf16.mxu0 0
  %1716 = vmatpush1.bf16.msra.mxu0 0
  %1717 = vmatprep.subr.bf16.mxu0 0
  %1718 = vmatpush1.bf16.msra.mxu0 0
  %1719 = vmatprep.mubr.bf16.mxu0 0
  %1720 = vmatmul.mubr.bf16.gmra.mrb[0].mxu0 %v1408
  %v1721 = vpop.f32.mrb[0].mxu0
  %v1722 = vadd.f32 %v1349, %v1721
  %v1723 = vpop.f32.mrb[0].mxu0
  %v1724 = vadd.f32 %v1349, %v1723
  %v1725 = vpop.f32.mrb[0].mxu0
  %v1726 = vadd.f32 %v1354, %v1725
  %v1727 = vpop.f32.mrb[0].mxu0
  %v1728 = vadd.f32 %v1354, %v1727
  %1729 = vmatprep.mubr.bf16.mxu0 0
  %1730 = vmatmul.mubr.bf16.gmra.mrb[0].mxu0 %v1411
  %v1731 = vpop.f32.mrb[0].mxu0
  %v1732 = vadd.f32 %v1359, %v1731
  %v1733 = vpop.f32.mrb[0].mxu0
  %v1734 = vadd.f32 %v1359, %v1733
  %v1735 = vpop.f32.mrb[0].mxu0
  %v1736 = vadd.f32 %v1364, %v1735
  %v1737 = vpop.f32.mrb[0].mxu0
  %v1738 = vadd.f32 %v1364, %v1737
  %1739 = vmatprep.mubr.bf16.mxu0 0
  %1740 = vmatmul.mubr.bf16.gmra.mrb[0].mxu0 %v1414
  %v1741 = vpop.f32.mrb[0].mxu0
  %v1742 = vadd.f32 %v1369, %v1741
  %v1743 = vpop.f32.mrb[0].mxu0
  %v1744 = vadd.f32 %v1369, %v1743
  %v1745 = vpop.f32.mrb[0].mxu0
  %v1746 = vadd.f32 %v1374, %v1745
  %v1747 = vpop.f32.mrb[0].mxu0
  %v1748 = vadd.f32 %v1374, %v1747
  %1749 = vmatprep.mubr.bf16.mxu0 0
  %1750 = vmatmul.mubr.bf16.gmra.mrb[0].mxu0 %v1417
  %v1751 = vpop.f32.mrb[0].mxu0
  %v1752 = vadd.f32 %v1379, %v1751
  %v1753 = vpop.f32.mrb[0].mxu0
  %v1754 = vadd.f32 %v1379, %v1753
  %v1755 = vpop.f32.mrb[0].mxu0
  %v1756 = vadd.f32 %v1384, %v1755
  %v1757 = vpop.f32.mrb[0].mxu0
  %v1758 = vadd.f32 %v1384, %v1757
  %1759 = vdwg.mxu0
  %1760 = vmatprep.subr.bf16.mxu0 %v1259
  %1761 = vmatpush1.bf16.msra.mxu0 %v1258
  %1762 = vmatprep.subr.bf16.mxu0 %v1275
  %1763 = vmatpush1.bf16.msra.mxu0 %v1274
  %1764 = vmatprep.subr.bf16.mxu0 %v1291
  %1765 = vmatpush1.bf16.msra.mxu0 %v1290
  %1766 = vmatprep.subr.bf16.mxu0 %v1307
  %1767 = vmatpush1.bf16.msra.mxu0 %v1306
  %1768 = vmatprep.subr.bf16.mxu0 %v1448
  %1769 = vmatpush1.bf16.msra.mxu0 %v1445
  %1770 = vmatprep.subr.bf16.mxu0 0
  %1771 = vmatpush1.bf16.msra.mxu0 0
  %1772 = vmatprep.subr.bf16.mxu0 0
  %1773 = vmatpush1.bf16.msra.mxu0 0
  %1774 = vmatprep.subr.bf16.mxu0 0
  %1775 = vmatpush1.bf16.msra.mxu0 0
  %1776 = vmatprep.subr.bf16.mxu0 0
  %1777 = vmatpush1.bf16.msra.mxu0 0
  %1778 = vmatprep.subr.bf16.mxu0 0
  %1779 = vmatpush1.bf16.msra.mxu0 0
  %1780 = vmatprep.subr.bf16.mxu0 0
  %1781 = vmatpush1.bf16.msra.mxu0 0
  %1782 = vmatprep.subr.bf16.mxu0 0
  %1783 = vmatpush1.bf16.msra.mxu0 0
  %1784 = vmatprep.subr.bf16.mxu0 0
  %1785 = vmatpush1.bf16.msra.mxu0 0
  %1786 = vmatprep.subr.bf16.mxu0 0
  %1787 = vmatpush1.bf16.msra.mxu0 0
  %1788 = vmatprep.subr.bf16.mxu0 0
  %1789 = vmatpush1.bf16.msra.mxu0 0
  %1790 = vmatprep.subr.bf16.mxu0 0
  %1791 = vmatpush1.bf16.msra.mxu0 0
  %1792 = vmatprep.mubr.bf16.mxu0 0
  %1793 = vmatmul.mubr.bf16.gmra.mrb[0].mxu0 %v1408
  %v1794 = vpop.f32.mrb[0].mxu0
  %v1795 = vadd.f32 %v1349, %v1794
  %v1796 = vpop.f32.mrb[0].mxu0
  %v1797 = vadd.f32 %v1349, %v1796
  %v1798 = vpop.f32.mrb[0].mxu0
  %v1799 = vadd.f32 %v1354, %v1798
  %v1800 = vpop.f32.mrb[0].mxu0
  %v1801 = vadd.f32 %v1354, %v1800
  %1802 = vmatprep.mubr.bf16.mxu0 0
  %1803 = vmatmul.mubr.bf16.gmra.mrb[0].mxu0 %v1411
  %v1804 = vpop.f32.mrb[0].mxu0
  %v1805 = vadd.f32 %v1359, %v1804
  %v1806 = vpop.f32.mrb[0].mxu0
  %v1807 = vadd.f32 %v1359, %v1806
  %v1808 = vpop.f32.mrb[0].mxu0
  %v1809 = vadd.f32 %v1364, %v1808
  %v1810 = vpop.f32.mrb[0].mxu0
  %v1811 = vadd.f32 %v1364, %v1810
  %1812 = vmatprep.mubr.bf16.mxu0 0
  %1813 = vmatmul.mubr.bf16.gmra.mrb[0].mxu0 %v1414
  %v1814 = vpop.f32.mrb[0].mxu0
  %v1815 = vadd.f32 %v1369, %v1814
  %v1816 = vpop.f32.mrb[0].mxu0
  %v1817 = vadd.f32 %v1369, %v1816
  %v1818 = vpop.f32.mrb[0].mxu0
  %v1819 = vadd.f32 %v1374, %v1818
  %v1820 = vpop.f32.mrb[0].mxu0
  %v1821 = vadd.f32 %v1374, %v1820
  %1822 = vmatprep.mubr.bf16.mxu0 0
  %1823 = vmatmul.mubr.bf16.gmra.mrb[0].mxu0 %v1417
  %v1824 = vpop.f32.mrb[0].mxu0
  %v1825 = vadd.f32 %v1379, %v1824
  %v1826 = vpop.f32.mrb[0].mxu0
  %v1827 = vadd.f32 %v1379, %v1826
  %v1828 = vpop.f32.mrb[0].mxu0
  %v1829 = vadd.f32 %v1384, %v1828
  %v1830 = vpop.f32.mrb[0].mxu0
  %v1831 = vadd.f32 %v1384, %v1830
  %1832 = vdwg.mxu0
  %1833 = vmatprep.subr.bf16.mxu0 %v1261
  %1834 = vmatpush1.bf16.msra.mxu0 %v1260
  %1835 = vmatprep.subr.bf16.mxu0 %v1277
  %1836 = vmatpush1.bf16.msra.mxu0 %v1276
  %1837 = vmatprep.subr.bf16.mxu0 %v1293
  %1838 = vmatpush1.bf16.msra.mxu0 %v1292
  %1839 = vmatprep.subr.bf16.mxu0 %v1309
  %1840 = vmatpush1.bf16.msra.mxu0 %v1308
  %1841 = vmatprep.subr.bf16.mxu0 %v1454
  %1842 = vmatpush1.bf16.msra.mxu0 %v1451
  %1843 = vmatprep.subr.bf16.mxu0 0
  %1844 = vmatpush1.bf16.msra.mxu0 0
  %1845 = vmatprep.subr.bf16.mxu0 0
  %1846 = vmatpush1.bf16.msra.mxu0 0
  %1847 = vmatprep.subr.bf16.mxu0 0
  %1848 = vmatpush1.bf16.msra.mxu0 0
  %1849 = vmatprep.subr.bf16.mxu0 0
  %1850 = vmatpush1.bf16.msra.mxu0 0
  %1851 = vmatprep.subr.bf16.mxu0 0
  %1852 = vmatpush1.bf16.msra.mxu0 0
  %1853 = vmatprep.subr.bf16.mxu0 0
  %1854 = vmatpush1.bf16.msra.mxu0 0
  %1855 = vmatprep.subr.bf16.mxu0 0
  %1856 = vmatpush1.bf16.msra.mxu0 0
  %1857 = vmatprep.subr.bf16.mxu0 0
  %1858 = vmatpush1.bf16.msra.mxu0 0
  %1859 = vmatprep.subr.bf16.mxu0 0
  %1860 = vmatpush1.bf16.msra.mxu0 0
  %1861 = vmatprep.subr.bf16.mxu0 0
  %1862 = vmatpush1.bf16.msra.mxu0 0
  %1863 = vmatprep.subr.bf16.mxu0 0
  %1864 = vmatpush1.bf16.msra.mxu0 0
  %1865 = vmatprep.mubr.bf16.mxu0 0
  %1866 = vmatmul.mubr.bf16.gmra.mrb[0].mxu0 %v1408
  %v1867 = vpop.f32.mrb[0].mxu0
  %v1868 = vadd.f32 %v1349, %v1867
  %v1869 = vpop.f32.mrb[0].mxu0
  %v1870 = vadd.f32 %v1349, %v1869
  %v1871 = vpop.f32.mrb[0].mxu0
  %v1872 = vadd.f32 %v1354, %v1871
  %v1873 = vpop.f32.mrb[0].mxu0
  %v1874 = vadd.f32 %v1354, %v1873
  %1875 = vmatprep.mubr.bf16.mxu0 0
  %1876 = vmatmul.mubr.bf16.gmra.mrb[0].mxu0 %v1411
  %v1877 = vpop.f32.mrb[0].mxu0
  %v1878 = vadd.f32 %v1359, %v1877
  %v1879 = vpop.f32.mrb[0].mxu0
  %v1880 = vadd.f32 %v1359, %v1879
  %v1881 = vpop.f32.mrb[0].mxu0
  %v1882 = vadd.f32 %v1364, %v1881
  %v1883 = vpop.f32.mrb[0].mxu0
  %v1884 = vadd.f32 %v1364, %v1883
  %1885 = vmatprep.mubr.bf16.mxu0 0
  %1886 = vmatmul.mubr.bf16.gmra.mrb[0].mxu0 %v1414
  %v1887 = vpop.f32.mrb[0].mxu0
  %v1888 = vadd.f32 %v1369, %v1887
  %v1889 = vpop.f32.mrb[0].mxu0
  %v1890 = vadd.f32 %v1369, %v1889
  %v1891 = vpop.f32.mrb[0].mxu0
  %v1892 = vadd.f32 %v1374, %v1891
  %v1893 = vpop.f32.mrb[0].mxu0
  %v1894 = vadd.f32 %v1374, %v1893
  %1895 = vmatprep.mubr.bf16.mxu0 0
  %1896 = vmatmul.mubr.bf16.gmra.mrb[0].mxu0 %v1417
  %v1897 = vpop.f32.mrb[0].mxu0
  %v1898 = vadd.f32 %v1379, %v1897
  %v1899 = vpop.f32.mrb[0].mxu0
  %v1900 = vadd.f32 %v1379, %v1899
  %v1901 = vpop.f32.mrb[0].mxu0
  %v1902 = vadd.f32 %v1384, %v1901
  %v1903 = vpop.f32.mrb[0].mxu0
  %v1904 = vadd.f32 %v1384, %v1903
  %1905 = vdwg.mxu0
  %1906 = vmatprep.subr.bf16.mxu0 %v1263
  %1907 = vmatpush1.bf16.msra.mxu0 %v1262
  %1908 = vmatprep.subr.bf16.mxu0 %v1279
  %1909 = vmatpush1.bf16.msra.mxu0 %v1278
  %1910 = vmatprep.subr.bf16.mxu0 %v1295
  %1911 = vmatpush1.bf16.msra.mxu0 %v1294
  %1912 = vmatprep.subr.bf16.mxu0 %v1311
  %1913 = vmatpush1.bf16.msra.mxu0 %v1310
  %1914 = vmatprep.subr.bf16.mxu0 %v1460
  %1915 = vmatpush1.bf16.msra.mxu0 %v1457
  %1916 = vmatprep.subr.bf16.mxu0 0
  %1917 = vmatpush1.bf16.msra.mxu0 0
  %1918 = vmatprep.subr.bf16.mxu0 0
  %1919 = vmatpush1.bf16.msra.mxu0 0
  %1920 = vmatprep.subr.bf16.mxu0 0
  %1921 = vmatpush1.bf16.msra.mxu0 0
  %1922 = vmatprep.subr.bf16.mxu0 0
  %1923 = vmatpush1.bf16.msra.mxu0 0
  %1924 = vmatprep.subr.bf16.mxu0 0
  %1925 = vmatpush1.bf16.msra.mxu0 0
  %1926 = vmatprep.subr.bf16.mxu0 0
  %1927 = vmatpush1.bf16.msra.mxu0 0
  %1928 = vmatprep.subr.bf16.mxu0 0
  %1929 = vmatpush1.bf16.msra.mxu0 0
  %1930 = vmatprep.subr.bf16.mxu0 0
  %1931 = vmatpush1.bf16.msra.mxu0 0
  %1932 = vmatprep.subr.bf16.mxu0 0
  %1933 = vmatpush1.bf16.msra.mxu0 0
  %1934 = vmatprep.subr.bf16.mxu0 0
  %1935 = vmatpush1.bf16.msra.mxu0 0
  %1936 = vmatprep.subr.bf16.mxu0 0
  %1937 = vmatpush1.bf16.msra.mxu0 0
  %1938 = vmatprep.mubr.bf16.mxu0 0
  %1939 = vmatmul.mubr.bf16.gmra.mrb[0].mxu0 %v1408
  %v1940 = vpop.f32.mrb[0].mxu0
  %v1941 = vadd.f32 %v1349, %v1940
  %v1942 = vpop.f32.mrb[0].mxu0
  %v1943 = vadd.f32 %v1349, %v1942
  %v1944 = vpop.f32.mrb[0].mxu0
  %v1945 = vadd.f32 %v1354, %v1944
  %v1946 = vpop.f32.mrb[0].mxu0
  %v1947 = vadd.f32 %v1354, %v1946
  %1948 = vmatprep.mubr.bf16.mxu0 0
  %1949 = vmatmul.mubr.bf16.gmra.mrb[0].mxu0 %v1411
  %v1950 = vpop.f32.mrb[0].mxu0
  %v1951 = vadd.f32 %v1359, %v1950
  %v1952 = vpop.f32.mrb[0].mxu0
  %v1953 = vadd.f32 %v1359, %v1952
  %v1954 = vpop.f32.mrb[0].mxu0
  %v1955 = vadd.f32 %v1364, %v1954
  %v1956 = vpop.f32.mrb[0].mxu0
  %v1957 = vadd.f32 %v1364, %v1956
  %1958 = vmatprep.mubr.bf16.mxu0 0
  %1959 = vmatmul.mubr.bf16.gmra.mrb[0].mxu0 %v1414
  %v1960 = vpop.f32.mrb[0].mxu0
  %v1961 = vadd.f32 %v1369, %v1960
  %v1962 = vpop.f32.mrb[0].mxu0
  %v1963 = vadd.f32 %v1369, %v1962
  %v1964 = vpop.f32.mrb[0].mxu0
  %v1965 = vadd.f32 %v1374, %v1964
  %v1966 = vpop.f32.mrb[0].mxu0
  %v1967 = vadd.f32 %v1374, %v1966
  %1968 = vmatprep.mubr.bf16.mxu0 0
  %1969 = vmatmul.mubr.bf16.gmra.mrb[0].mxu0 %v1417
  %v1970 = vpop.f32.mrb[0].mxu0
  %v1971 = vadd.f32 %v1379, %v1970
  %v1972 = vpop.f32.mrb[0].mxu0
  %v1973 = vadd.f32 %v1379, %v1972
  %v1974 = vpop.f32.mrb[0].mxu0
  %v1975 = vadd.f32 %v1384, %v1974
  %v1976 = vpop.f32.mrb[0].mxu0
  %v1977 = vadd.f32 %v1384, %v1976
  %1978 = vdwg.mxu0
  %1979 = vmatprep.subr.bf16.mxu0 %v1265
  %1980 = vmatpush1.bf16.msra.mxu0 %v1264
  %1981 = vmatprep.subr.bf16.mxu0 %v1281
  %1982 = vmatpush1.bf16.msra.mxu0 %v1280
  %1983 = vmatprep.subr.bf16.mxu0 %v1297
  %1984 = vmatpush1.bf16.msra.mxu0 %v1296
  %1985 = vmatprep.subr.bf16.mxu0 %v1313
  %1986 = vmatpush1.bf16.msra.mxu0 %v1312
  %1987 = vmatprep.subr.bf16.mxu0 %v1466
  %1988 = vmatpush1.bf16.msra.mxu0 %v1463
  %1989 = vmatprep.subr.bf16.mxu0 0
  %1990 = vmatpush1.bf16.msra.mxu0 0
  %1991 = vmatprep.subr.bf16.mxu0 0
  %1992 = vmatpush1.bf16.msra.mxu0 0
  %1993 = vmatprep.subr.bf16.mxu0 0
  %1994 = vmatpush1.bf16.msra.mxu0 0
  %1995 = vmatprep.subr.bf16.mxu0 0
  %1996 = vmatpush1.bf16.msra.mxu0 0
  %1997 = vmatprep.subr.bf16.mxu0 0
  %1998 = vmatpush1.bf16.msra.mxu0 0
  %1999 = vmatprep.subr.bf16.mxu0 0
  %2000 = vmatpush1.bf16.msra.mxu0 0
  %2001 = vmatprep.subr.bf16.mxu0 0
  %2002 = vmatpush1.bf16.msra.mxu0 0
  %2003 = vmatprep.subr.bf16.mxu0 0
  %2004 = vmatpush1.bf16.msra.mxu0 0
  %2005 = vmatprep.subr.bf16.mxu0 0
  %2006 = vmatpush1.bf16.msra.mxu0 0
  %2007 = vmatprep.subr.bf16.mxu0 0
  %2008 = vmatpush1.bf16.msra.mxu0 0
  %2009 = vmatprep.subr.bf16.mxu0 0
  %2010 = vmatpush1.bf16.msra.mxu0 0
  %2011 = vmatprep.mubr.bf16.mxu0 0
  %2012 = vmatmul.mubr.bf16.gmra.mrb[0].mxu0 %v1408
  %v2013 = vpop.f32.mrb[0].mxu0
  %v2014 = vadd.f32 %v1349, %v2013
  %v2015 = vpop.f32.mrb[0].mxu0
  %v2016 = vadd.f32 %v1349, %v2015
  %v2017 = vpop.f32.mrb[0].mxu0
  %v2018 = vadd.f32 %v1354, %v2017
  %v2019 = vpop.f32.mrb[0].mxu0
  %v2020 = vadd.f32 %v1354, %v2019
  %2021 = vmatprep.mubr.bf16.mxu0 0
  %2022 = vmatmul.mubr.bf16.gmra.mrb[0].mxu0 %v1411
  %v2023 = vpop.f32.mrb[0].mxu0
  %v2024 = vadd.f32 %v1359, %v2023
  %v2025 = vpop.f32.mrb[0].mxu0
  %v2026 = vadd.f32 %v1359, %v2025
  %v2027 = vpop.f32.mrb[0].mxu0
  %v2028 = vadd.f32 %v1364, %v2027
  %v2029 = vpop.f32.mrb[0].mxu0
  %v2030 = vadd.f32 %v1364, %v2029
  %2031 = vmatprep.mubr.bf16.mxu0 0
  %2032 = vmatmul.mubr.bf16.gmra.mrb[0].mxu0 %v1414
  %v2033 = vpop.f32.mrb[0].mxu0
  %v2034 = vadd.f32 %v1369, %v2033
  %v2035 = vpop.f32.mrb[0].mxu0
  %v2036 = vadd.f32 %v1369, %v2035
  %v2037 = vpop.f32.mrb[0].mxu0
  %v2038 = vadd.f32 %v1374, %v2037
  %v2039 = vpop.f32.mrb[0].mxu0
  %v2040 = vadd.f32 %v1374, %v2039
  %2041 = vmatprep.mubr.bf16.mxu0 0
  %2042 = vmatmul.mubr.bf16.gmra.mrb[0].mxu0 %v1417
  %v2043 = vpop.f32.mrb[0].mxu0
  %v2044 = vadd.f32 %v1379, %v2043
  %v2045 = vpop.f32.mrb[0].mxu0
  %v2046 = vadd.f32 %v1379, %v2045
  %v2047 = vpop.f32.mrb[0].mxu0
  %v2048 = vadd.f32 %v1384, %v2047
  %v2049 = vpop.f32.mrb[0].mxu0
  %v2050 = vadd.f32 %v1384, %v2049
  %2051 = vdwg.mxu0
  %v2052 = vmax.f32 %v1503, 0.0
  %v2053 = vmax.f32 %v1505, 0.0
  %v2054 = vmax.f32 %v1576, 0.0
  %v2055 = vmax.f32 %v1578, 0.0
  %v2056 = vmax.f32 %v1649, 0.0
  %v2057 = vmax.f32 %v1651, 0.0
  %v2058 = vmax.f32 %v1722, 0.0
  %v2059 = vmax.f32 %v1724, 0.0
  %v2060 = vmax.f32 %v1795, 0.0
  %v2061 = vmax.f32 %v1797, 0.0
  %v2062 = vmax.f32 %v1868, 0.0
  %v2063 = vmax.f32 %v1870, 0.0
  %v2064 = vmax.f32 %v1941, 0.0
  %v2065 = vmax.f32 %v1943, 0.0
  %v2066 = vmax.f32 %v2014, 0.0
  %v2067 = vmax.f32 %v2016, 0.0
  %v2068 = vmax.f32 %v1507, 0.0
  %v2069 = vmax.f32 %v1509, 0.0
  %v2070 = vmax.f32 %v1580, 0.0
  %v2071 = vmax.f32 %v1582, 0.0
  %v2072 = vmax.f32 %v1653, 0.0
  %v2073 = vmax.f32 %v1655, 0.0
  %v2074 = vmax.f32 %v1726, 0.0
  %v2075 = vmax.f32 %v1728, 0.0
  %v2076 = vmax.f32 %v1799, 0.0
  %v2077 = vmax.f32 %v1801, 0.0
  %v2078 = vmax.f32 %v1872, 0.0
  %v2079 = vmax.f32 %v1874, 0.0
  %v2080 = vmax.f32 %v1945, 0.0
  %v2081 = vmax.f32 %v1947, 0.0
  %v2082 = vmax.f32 %v2018, 0.0
  %v2083 = vmax.f32 %v2020, 0.0
  %v2084 = vmax.f32 %v1513, 0.0
  %v2085 = vmax.f32 %v1515, 0.0
  %v2086 = vmax.f32 %v1586, 0.0
  %v2087 = vmax.f32 %v1588, 0.0
  %v2088 = vmax.f32 %v1659, 0.0
  %v2089 = vmax.f32 %v1661, 0.0
  %v2090 = vmax.f32 %v1732, 0.0
  %v2091 = vmax.f32 %v1734, 0.0
  %v2092 = vmax.f32 %v1805, 0.0
  %v2093 = vmax.f32 %v1807, 0.0
  %v2094 = vmax.f32 %v1878, 0.0
  %v2095 = vmax.f32 %v1880, 0.0
  %v2096 = vmax.f32 %v1951, 0.0
  %v2097 = vmax.f32 %v1953, 0.0
  %v2098 = vmax.f32 %v2024, 0.0
  %v2099 = vmax.f32 %v2026, 0.0
  %v2100 = vmax.f32 %v1517, 0.0
  %v2101 = vmax.f32 %v1519, 0.0
  %v2102 = vmax.f32 %v1590, 0.0
  %v2103 = vmax.f32 %v1592, 0.0
  %v2104 = vmax.f32 %v1663, 0.0
  %v2105 = vmax.f32 %v1665, 0.0
  %v2106 = vmax.f32 %v1736, 0.0
  %v2107 = vmax.f32 %v1738, 0.0
  %v2108 = vmax.f32 %v1809, 0.0
  %v2109 = vmax.f32 %v1811, 0.0
  %v2110 = vmax.f32 %v1882, 0.0
  %v2111 = vmax.f32 %v1884, 0.0
  %v2112 = vmax.f32 %v1955, 0.0
  %v2113 = vmax.f32 %v1957, 0.0
  %v2114 = vmax.f32 %v2028, 0.0
  %v2115 = vmax.f32 %v2030, 0.0
  %v2116 = vmax.f32 %v1523, 0.0
  %v2117 = vmax.f32 %v1525, 0.0
  %v2118 = vmax.f32 %v1596, 0.0
  %v2119 = vmax.f32 %v1598, 0.0
  %v2120 = vmax.f32 %v1669, 0.0
  %v2121 = vmax.f32 %v1671, 0.0
  %v2122 = vmax.f32 %v1742, 0.0
  %v2123 = vmax.f32 %v1744, 0.0
  %v2124 = vmax.f32 %v1815, 0.0
  %v2125 = vmax.f32 %v1817, 0.0
  %v2126 = vmax.f32 %v1888, 0.0
  %v2127 = vmax.f32 %v1890, 0.0
  %v2128 = vmax.f32 %v1961, 0.0
  %v2129 = vmax.f32 %v1963, 0.0
  %v2130 = vmax.f32 %v2034, 0.0
  %v2131 = vmax.f32 %v2036, 0.0
  %v2132 = vmax.f32 %v1527, 0.0
  %v2133 = vmax.f32 %v1529, 0.0
  %v2134 = vmax.f32 %v1600, 0.0
  %v2135 = vmax.f32 %v1602, 0.0
  %v2136 = vmax.f32 %v1673, 0.0
  %v2137 = vmax.f32 %v1675, 0.0
  %v2138 = vmax.f32 %v1746, 0.0
  %v2139 = vmax.f32 %v1748, 0.0
  %v2140 = vmax.f32 %v1819, 0.0
  %v2141 = vmax.f32 %v1821, 0.0
  %v2142 = vmax.f32 %v1892, 0.0
  %v2143 = vmax.f32 %v1894, 0.0
  %v2144 = vmax.f32 %v1965, 0.0
  %v2145 = vmax.f32 %v1967, 0.0
  %v2146 = vmax.f32 %v2038, 0.0
  %v2147 = vmax.f32 %v2040, 0.0
  %v2148 = vmax.f32 %v1533, 0.0
  %v2149 = vmax.f32 %v1535, 0.0
  %v2150 = vmax.f32 %v1606, 0.0
  %v2151 = vmax.f32 %v1608, 0.0
  %v2152 = vmax.f32 %v1679, 0.0
  %v2153 = vmax.f32 %v1681, 0.0
  %v2154 = vmax.f32 %v1752, 0.0
  %v2155 = vmax.f32 %v1754, 0.0
  %v2156 = vmax.f32 %v1825, 0.0
  %v2157 = vmax.f32 %v1827, 0.0
  %v2158 = vmax.f32 %v1898, 0.0
  %v2159 = vmax.f32 %v1900, 0.0
  %v2160 = vmax.f32 %v1971, 0.0
  %v2161 = vmax.f32 %v1973, 0.0
  %v2162 = vmax.f32 %v2044, 0.0
  %v2163 = vmax.f32 %v2046, 0.0
  %v2164 = vmax.f32 %v1537, 0.0
  %v2165 = vmax.f32 %v1539, 0.0
  %v2166 = vmax.f32 %v1610, 0.0
  %v2167 = vmax.f32 %v1612, 0.0
  %v2168 = vmax.f32 %v1683, 0.0
  %v2169 = vmax.f32 %v1685, 0.0
  %v2170 = vmax.f32 %v1756, 0.0
  %v2171 = vmax.f32 %v1758, 0.0
  %v2172 = vmax.f32 %v1829, 0.0
  %v2173 = vmax.f32 %v1831, 0.0
  %v2174 = vmax.f32 %v1902, 0.0
  %v2175 = vmax.f32 %v1904, 0.0
  %v2176 = vmax.f32 %v1975, 0.0
  %v2177 = vmax.f32 %v1977, 0.0
  %v2178 = vmax.f32 %v2048, 0.0
  %v2179 = vmax.f32 %v2050, 0.0
  %v2180 = vlaneseq
  %v2181 = vshrl.u32 %v2180, 7
  %v2182 = vshra.s32 %v58, 8
  %v2183 = vshra.s32 %v59, 8
  %v2184 = vshra.s32 %v60, 8
  %v2185 = vshra.s32 %v61, 8
  %v2186 = vshra.s32 %v62, 8
  %v2187 = vshra.s32 %v63, 8
  %v2188 = vshra.s32 %v64, 8
  %v2189 = vshra.s32 %v65, 8
  %v2190 = vshra.s32 %v66, 8
  %v2191 = vshra.s32 %v67, 8
  %v2192 = vshra.s32 %v68, 8
  %v2193 = vshra.s32 %v69, 8
  %v2194 = vshra.s32 %v70, 8
  %v2195 = vshra.s32 %v71, 8
  %v2196 = vshra.s32 %v72, 8
  %v2197 = vshra.s32 %v73, 8
  %vm2198 = vcmp.eq.s32.totalorder %v2182, %v2181
  %vm2199 = vcmp.eq.s32.totalorder %v2183, %v2181
  %vm2200 = vcmp.eq.s32.totalorder %v2184, %v2181
  %vm2201 = vcmp.eq.s32.totalorder %v2185, %v2181
  %vm2202 = vcmp.eq.s32.totalorder %v2186, %v2181
  %vm2203 = vcmp.eq.s32.totalorder %v2187, %v2181
  %vm2204 = vcmp.eq.s32.totalorder %v2188, %v2181
  %vm2205 = vcmp.eq.s32.totalorder %v2189, %v2181
  %vm2206 = vcmp.eq.s32.totalorder %v2190, %v2181
  %vm2207 = vcmp.eq.s32.totalorder %v2191, %v2181
  %vm2208 = vcmp.eq.s32.totalorder %v2192, %v2181
  %vm2209 = vcmp.eq.s32.totalorder %v2193, %v2181
  %vm2210 = vcmp.eq.s32.totalorder %v2194, %v2181
  %vm2211 = vcmp.eq.s32.totalorder %v2195, %v2181
  %vm2212 = vcmp.eq.s32.totalorder %v2196, %v2181
  %vm2213 = vcmp.eq.s32.totalorder %v2197, %v2181
  %v2214 = vsel %vm2198, 0.00390625, 0.0
  %v2215 = vsel %vm2199, 0.00390625, 0.0
  %v2216 = vsel %vm2200, 0.00390625, 0.0
  %v2217 = vsel %vm2201, 0.00390625, 0.0
  %v2218 = vsel %vm2202, 0.00390625, 0.0
  %v2219 = vsel %vm2203, 0.00390625, 0.0
  %v2220 = vsel %vm2204, 0.00390625, 0.0
  %v2221 = vsel %vm2205, 0.00390625, 0.0
  %v2222 = vsel %vm2206, 0.00390625, 0.0
  %v2223 = vsel %vm2207, 0.00390625, 0.0
  %v2224 = vsel %vm2208, 0.00390625, 0.0
  %v2225 = vsel %vm2209, 0.00390625, 0.0
  %v2226 = vsel %vm2210, 0.00390625, 0.0
  %v2227 = vsel %vm2211, 0.00390625, 0.0
  %v2228 = vsel %vm2212, 0.00390625, 0.0
  %v2229 = vsel %vm2213, 0.00390625, 0.0
  %2230 = vmatprep.subr.mxu0 %v2053
  %2231 = vmatpush1.xpose.msra.mxu0 %v2052
  %2232 = vmatprep.subr.mxu0 %v2069
  %2233 = vmatpush1.xpose.msra.mxu0 %v2068
  %2234 = vmatprep.subr.mxu0 %v2085
  %2235 = vmatpush1.xpose.msra.mxu0 %v2084
  %2236 = vmatprep.subr.mxu0 %v2101
  %2237 = vmatpush1.xpose.msra.mxu0 %v2100
  %2238 = vmatprep.subr.mxu0 %v2117
  %2239 = vmatpush1.xpose.msra.mxu0 %v2116
  %2240 = vmatprep.subr.mxu0 %v2133
  %2241 = vmatpush1.xpose.msra.mxu0 %v2132
  %2242 = vmatprep.subr.mxu0 %v2149
  %2243 = vmatpush1.xpose.msra.mxu0 %v2148
  %2244 = vmatprep.subr.mxu0 %v2165
  %2245 = vmatpush1.xpose.msra.mxu0 %v2164
  %2246 = vmatprep.subr.mxu0 0.0
  %2247 = vmatpush1.xpose.msra.mxu0 0.0
  %2248 = vmatprep.subr.mxu0 0.0
  %2249 = vmatpush1.xpose.msra.mxu0 0.0
  %2250 = vmatprep.subr.mxu0 0.0
  %2251 = vmatpush1.xpose.msra.mxu0 0.0
  %2252 = vmatprep.subr.mxu0 0.0
  %2253 = vmatpush1.xpose.msra.mxu0 0.0
  %2254 = vmatprep.subr.mxu0 0.0
  %2255 = vmatpush1.xpose.msra.mxu0 0.0
  %2256 = vmatprep.subr.mxu0 0.0
  %2257 = vmatpush1.xpose.msra.mxu0 0.0
  %2258 = vmatprep.subr.mxu0 0.0
  %2259 = vmatpush1.xpose.msra.mxu0 0.0
  %2260 = vmatprep.subr.mxu0 0.0
  %2261 = vmatpush1.xpose.msra.mxu0 0.0
  %2262 = vmatprep.subr.mxu0 0.0
  %2263 = vmatpush1.xpose.msra.mxu0 0.0
  %2264 = vmatprep.subr.mxu0 0.0
  %2265 = vmatpush1.xpose.msra.mxu0 0.0
  %2266 = vmatprep.subr.mxu0 0.0
  %2267 = vmatpush1.xpose.msra.mxu0 0.0
  %2268 = vmatprep.subr.mxu0 0.0
  %2269 = vmatpush1.xpose.msra.mxu0 0.0
  %2270 = vmatprep.subr.mxu0 0.0
  %2271 = vmatpush1.xpose.msra.mxu0 0.0
  %2272 = vmatprep.subr.mxu0 0.0
  %2273 = vmatpush1.xpose.msra.mxu0 0.0
  %2274 = vmatprep.subr.mxu0 0.0
  %2275 = vmatpush1.xpose.msra.mxu0 0.0
  %2276 = vmatprep.subr.mxu0 0.0
  %2277 = vmatpush1.xpose.msra.mxu0 0.0
  %2278 = vmatprep.subr.mxu0 0.0
  %2279 = vmatpush1.xpose.msra.mxu0 0.0
  %2280 = vmatprep.subr.mxu0 0.0
  %2281 = vmatpush1.xpose.msra.mxu0 0.0
  %2282 = vmatprep.subr.mxu0 0.0
  %2283 = vmatpush1.xpose.msra.mxu0 0.0
  %2284 = vmatprep.subr.mxu0 0.0
  %2285 = vmatpush1.xpose.msra.mxu0 0.0
  %2286 = vmatprep.subr.mxu0 0.0
  %2287 = vmatpush1.xpose.msra.mxu0 0.0
  %2288 = vmatprep.subr.mxu0 0.0
  %2289 = vmatpush1.xpose.msra.mxu0 0.0
  %2290 = vmatprep.subr.mxu0 0.0
  %2291 = vmatpush1.xpose.msra.mxu0 0.0
  %2292 = vmatprep.subr.mxu0 0.0
  %2293 = vmatpush1.xpose.msra.mxu0 0.0
  %2294 = vmatprep.mubr.f32.mxu0 %v2215
  %2295 = vmatmul.mubr.f32.gmra.mrb[0].mxu0 %v2214
  %v2296 = vpop.f32.mrb[0].mxu0
  %v2297 = vadd.f32 0.0, %v2296
  %v2298 = vpop.f32.mrb[0].mxu0
  %2299 = vdwg.mxu0
  %2300 = vmatprep.subr.mxu0 %v2055
  %2301 = vmatpush1.xpose.msra.mxu0 %v2054
  %2302 = vmatprep.subr.mxu0 %v2071
  %2303 = vmatpush1.xpose.msra.mxu0 %v2070
  %2304 = vmatprep.subr.mxu0 %v2087
  %2305 = vmatpush1.xpose.msra.mxu0 %v2086
  %2306 = vmatprep.subr.mxu0 %v2103
  %2307 = vmatpush1.xpose.msra.mxu0 %v2102
  %2308 = vmatprep.subr.mxu0 %v2119
  %2309 = vmatpush1.xpose.msra.mxu0 %v2118
  %2310 = vmatprep.subr.mxu0 %v2135
  %2311 = vmatpush1.xpose.msra.mxu0 %v2134
  %2312 = vmatprep.subr.mxu0 %v2151
  %2313 = vmatpush1.xpose.msra.mxu0 %v2150
  %2314 = vmatprep.subr.mxu0 %v2167
  %2315 = vmatpush1.xpose.msra.mxu0 %v2166
  %2316 = vmatprep.subr.mxu0 0.0
  %2317 = vmatpush1.xpose.msra.mxu0 0.0
  %2318 = vmatprep.subr.mxu0 0.0
  %2319 = vmatpush1.xpose.msra.mxu0 0.0
  %2320 = vmatprep.subr.mxu0 0.0
  %2321 = vmatpush1.xpose.msra.mxu0 0.0
  %2322 = vmatprep.subr.mxu0 0.0
  %2323 = vmatpush1.xpose.msra.mxu0 0.0
  %2324 = vmatprep.subr.mxu0 0.0
  %2325 = vmatpush1.xpose.msra.mxu0 0.0
  %2326 = vmatprep.subr.mxu0 0.0
  %2327 = vmatpush1.xpose.msra.mxu0 0.0
  %2328 = vmatprep.subr.mxu0 0.0
  %2329 = vmatpush1.xpose.msra.mxu0 0.0
  %2330 = vmatprep.subr.mxu0 0.0
  %2331 = vmatpush1.xpose.msra.mxu0 0.0
  %2332 = vmatprep.subr.mxu0 0.0
  %2333 = vmatpush1.xpose.msra.mxu0 0.0
  %2334 = vmatprep.subr.mxu0 0.0
  %2335 = vmatpush1.xpose.msra.mxu0 0.0
  %2336 = vmatprep.subr.mxu0 0.0
  %2337 = vmatpush1.xpose.msra.mxu0 0.0
  %2338 = vmatprep.subr.mxu0 0.0
  %2339 = vmatpush1.xpose.msra.mxu0 0.0
  %2340 = vmatprep.subr.mxu0 0.0
  %2341 = vmatpush1.xpose.msra.mxu0 0.0
  %2342 = vmatprep.subr.mxu0 0.0
  %2343 = vmatpush1.xpose.msra.mxu0 0.0
  %2344 = vmatprep.subr.mxu0 0.0
  %2345 = vmatpush1.xpose.msra.mxu0 0.0
  %2346 = vmatprep.subr.mxu0 0.0
  %2347 = vmatpush1.xpose.msra.mxu0 0.0
  %2348 = vmatprep.subr.mxu0 0.0
  %2349 = vmatpush1.xpose.msra.mxu0 0.0
  %2350 = vmatprep.subr.mxu0 0.0
  %2351 = vmatpush1.xpose.msra.mxu0 0.0
  %2352 = vmatprep.subr.mxu0 0.0
  %2353 = vmatpush1.xpose.msra.mxu0 0.0
  %2354 = vmatprep.subr.mxu0 0.0
  %2355 = vmatpush1.xpose.msra.mxu0 0.0
  %2356 = vmatprep.subr.mxu0 0.0
  %2357 = vmatpush1.xpose.msra.mxu0 0.0
  %2358 = vmatprep.subr.mxu0 0.0
  %2359 = vmatpush1.xpose.msra.mxu0 0.0
  %2360 = vmatprep.subr.mxu0 0.0
  %2361 = vmatpush1.xpose.msra.mxu0 0.0
  %2362 = vmatprep.subr.mxu0 0.0
  %2363 = vmatpush1.xpose.msra.mxu0 0.0
  %2364 = vmatprep.mubr.f32.mxu0 %v2217
  %2365 = vmatmul.mubr.f32.gmra.mrb[0].mxu0 %v2216
  %v2366 = vpop.f32.mrb[0].mxu0
  %v2367 = vadd.f32 %v2297, %v2366
  %v2368 = vpop.f32.mrb[0].mxu0
  %2369 = vdwg.mxu0
  %2370 = vmatprep.subr.mxu0 %v2057
  %2371 = vmatpush1.xpose.msra.mxu0 %v2056
  %2372 = vmatprep.subr.mxu0 %v2073
  %2373 = vmatpush1.xpose.msra.mxu0 %v2072
  %2374 = vmatprep.subr.mxu0 %v2089
  %2375 = vmatpush1.xpose.msra.mxu0 %v2088
  %2376 = vmatprep.subr.mxu0 %v2105
  %2377 = vmatpush1.xpose.msra.mxu0 %v2104
  %2378 = vmatprep.subr.mxu0 %v2121
  %2379 = vmatpush1.xpose.msra.mxu0 %v2120
  %2380 = vmatprep.subr.mxu0 %v2137
  %2381 = vmatpush1.xpose.msra.mxu0 %v2136
  %2382 = vmatprep.subr.mxu0 %v2153
  %2383 = vmatpush1.xpose.msra.mxu0 %v2152
  %2384 = vmatprep.subr.mxu0 %v2169
  %2385 = vmatpush1.xpose.msra.mxu0 %v2168
  %2386 = vmatprep.subr.mxu0 0.0
  %2387 = vmatpush1.xpose.msra.mxu0 0.0
  %2388 = vmatprep.subr.mxu0 0.0
  %2389 = vmatpush1.xpose.msra.mxu0 0.0
  %2390 = vmatprep.subr.mxu0 0.0
  %2391 = vmatpush1.xpose.msra.mxu0 0.0
  %2392 = vmatprep.subr.mxu0 0.0
  %2393 = vmatpush1.xpose.msra.mxu0 0.0
  %2394 = vmatprep.subr.mxu0 0.0
  %2395 = vmatpush1.xpose.msra.mxu0 0.0
  %2396 = vmatprep.subr.mxu0 0.0
  %2397 = vmatpush1.xpose.msra.mxu0 0.0
  %2398 = vmatprep.subr.mxu0 0.0
  %2399 = vmatpush1.xpose.msra.mxu0 0.0
  %2400 = vmatprep.subr.mxu0 0.0
  %2401 = vmatpush1.xpose.msra.mxu0 0.0
  %2402 = vmatprep.subr.mxu0 0.0
  %2403 = vmatpush1.xpose.msra.mxu0 0.0
  %2404 = vmatprep.subr.mxu0 0.0
  %2405 = vmatpush1.xpose.msra.mxu0 0.0
  %2406 = vmatprep.subr.mxu0 0.0
  %2407 = vmatpush1.xpose.msra.mxu0 0.0
  %2408 = vmatprep.subr.mxu0 0.0
  %2409 = vmatpush1.xpose.msra.mxu0 0.0
  %2410 = vmatprep.subr.mxu0 0.0
  %2411 = vmatpush1.xpose.msra.mxu0 0.0
  %2412 = vmatprep.subr.mxu0 0.0
  %2413 = vmatpush1.xpose.msra.mxu0 0.0
  %2414 = vmatprep.subr.mxu0 0.0
  %2415 = vmatpush1.xpose.msra.mxu0 0.0
  %2416 = vmatprep.subr.mxu0 0.0
  %2417 = vmatpush1.xpose.msra.mxu0 0.0
  %2418 = vmatprep.subr.mxu0 0.0
  %2419 = vmatpush1.xpose.msra.mxu0 0.0
  %2420 = vmatprep.subr.mxu0 0.0
  %2421 = vmatpush1.xpose.msra.mxu0 0.0
  %2422 = vmatprep.subr.mxu0 0.0
  %2423 = vmatpush1.xpose.msra.mxu0 0.0
  %2424 = vmatprep.subr.mxu0 0.0
  %2425 = vmatpush1.xpose.msra.mxu0 0.0
  %2426 = vmatprep.subr.mxu0 0.0
  %2427 = vmatpush1.xpose.msra.mxu0 0.0
  %2428 = vmatprep.subr.mxu0 0.0
  %2429 = vmatpush1.xpose.msra.mxu0 0.0
  %2430 = vmatprep.subr.mxu0 0.0
  %2431 = vmatpush1.xpose.msra.mxu0 0.0
  %2432 = vmatprep.subr.mxu0 0.0
  %2433 = vmatpush1.xpose.msra.mxu0 0.0
  %2434 = vmatprep.mubr.f32.mxu0 %v2219
  %2435 = vmatmul.mubr.f32.gmra.mrb[0].mxu0 %v2218
  %v2436 = vpop.f32.mrb[0].mxu0
  %v2437 = vadd.f32 %v2367, %v2436
  %v2438 = vpop.f32.mrb[0].mxu0
  %2439 = vdwg.mxu0
  %2440 = vmatprep.subr.mxu0 %v2059
  %2441 = vmatpush1.xpose.msra.mxu0 %v2058
  %2442 = vmatprep.subr.mxu0 %v2075
  %2443 = vmatpush1.xpose.msra.mxu0 %v2074
  %2444 = vmatprep.subr.mxu0 %v2091
  %2445 = vmatpush1.xpose.msra.mxu0 %v2090
  %2446 = vmatprep.subr.mxu0 %v2107
  %2447 = vmatpush1.xpose.msra.mxu0 %v2106
  %2448 = vmatprep.subr.mxu0 %v2123
  %2449 = vmatpush1.xpose.msra.mxu0 %v2122
  %2450 = vmatprep.subr.mxu0 %v2139
  %2451 = vmatpush1.xpose.msra.mxu0 %v2138
  %2452 = vmatprep.subr.mxu0 %v2155
  %2453 = vmatpush1.xpose.msra.mxu0 %v2154
  %2454 = vmatprep.subr.mxu0 %v2171
  %2455 = vmatpush1.xpose.msra.mxu0 %v2170
  %2456 = vmatprep.subr.mxu0 0.0
  %2457 = vmatpush1.xpose.msra.mxu0 0.0
  %2458 = vmatprep.subr.mxu0 0.0
  %2459 = vmatpush1.xpose.msra.mxu0 0.0
  %2460 = vmatprep.subr.mxu0 0.0
  %2461 = vmatpush1.xpose.msra.mxu0 0.0
  %2462 = vmatprep.subr.mxu0 0.0
  %2463 = vmatpush1.xpose.msra.mxu0 0.0
  %2464 = vmatprep.subr.mxu0 0.0
  %2465 = vmatpush1.xpose.msra.mxu0 0.0
  %2466 = vmatprep.subr.mxu0 0.0
  %2467 = vmatpush1.xpose.msra.mxu0 0.0
  %2468 = vmatprep.subr.mxu0 0.0
  %2469 = vmatpush1.xpose.msra.mxu0 0.0
  %2470 = vmatprep.subr.mxu0 0.0
  %2471 = vmatpush1.xpose.msra.mxu0 0.0
  %2472 = vmatprep.subr.mxu0 0.0
  %2473 = vmatpush1.xpose.msra.mxu0 0.0
  %2474 = vmatprep.subr.mxu0 0.0
  %2475 = vmatpush1.xpose.msra.mxu0 0.0
  %2476 = vmatprep.subr.mxu0 0.0
  %2477 = vmatpush1.xpose.msra.mxu0 0.0
  %2478 = vmatprep.subr.mxu0 0.0
  %2479 = vmatpush1.xpose.msra.mxu0 0.0
  %2480 = vmatprep.subr.mxu0 0.0
  %2481 = vmatpush1.xpose.msra.mxu0 0.0
  %2482 = vmatprep.subr.mxu0 0.0
  %2483 = vmatpush1.xpose.msra.mxu0 0.0
  %2484 = vmatprep.subr.mxu0 0.0
  %2485 = vmatpush1.xpose.msra.mxu0 0.0
  %2486 = vmatprep.subr.mxu0 0.0
  %2487 = vmatpush1.xpose.msra.mxu0 0.0
  %2488 = vmatprep.subr.mxu0 0.0
  %2489 = vmatpush1.xpose.msra.mxu0 0.0
  %2490 = vmatprep.subr.mxu0 0.0
  %2491 = vmatpush1.xpose.msra.mxu0 0.0
  %2492 = vmatprep.subr.mxu0 0.0
  %2493 = vmatpush1.xpose.msra.mxu0 0.0
  %2494 = vmatprep.subr.mxu0 0.0
  %2495 = vmatpush1.xpose.msra.mxu0 0.0
  %2496 = vmatprep.subr.mxu0 0.0
  %2497 = vmatpush1.xpose.msra.mxu0 0.0
  %2498 = vmatprep.subr.mxu0 0.0
  %2499 = vmatpush1.xpose.msra.mxu0 0.0
  %2500 = vmatprep.subr.mxu0 0.0
  %2501 = vmatpush1.xpose.msra.mxu0 0.0
  %2502 = vmatprep.subr.mxu0 0.0
  %2503 = vmatpush1.xpose.msra.mxu0 0.0
  %2504 = vmatprep.mubr.f32.mxu0 %v2221
  %2505 = vmatmul.mubr.f32.gmra.mrb[0].mxu0 %v2220
  %v2506 = vpop.f32.mrb[0].mxu0
  %v2507 = vadd.f32 %v2437, %v2506
  %v2508 = vpop.f32.mrb[0].mxu0
  %2509 = vdwg.mxu0
  %2510 = vmatprep.subr.mxu0 %v2061
  %2511 = vmatpush1.xpose.msra.mxu0 %v2060
  %2512 = vmatprep.subr.mxu0 %v2077
  %2513 = vmatpush1.xpose.msra.mxu0 %v2076
  %2514 = vmatprep.subr.mxu0 %v2093
  %2515 = vmatpush1.xpose.msra.mxu0 %v2092
  %2516 = vmatprep.subr.mxu0 %v2109
  %2517 = vmatpush1.xpose.msra.mxu0 %v2108
  %2518 = vmatprep.subr.mxu0 %v2125
  %2519 = vmatpush1.xpose.msra.mxu0 %v2124
  %2520 = vmatprep.subr.mxu0 %v2141
  %2521 = vmatpush1.xpose.msra.mxu0 %v2140
  %2522 = vmatprep.subr.mxu0 %v2157
  %2523 = vmatpush1.xpose.msra.mxu0 %v2156
  %2524 = vmatprep.subr.mxu0 %v2173
  %2525 = vmatpush1.xpose.msra.mxu0 %v2172
  %2526 = vmatprep.subr.mxu0 0.0
  %2527 = vmatpush1.xpose.msra.mxu0 0.0
  %2528 = vmatprep.subr.mxu0 0.0
  %2529 = vmatpush1.xpose.msra.mxu0 0.0
  %2530 = vmatprep.subr.mxu0 0.0
  %2531 = vmatpush1.xpose.msra.mxu0 0.0
  %2532 = vmatprep.subr.mxu0 0.0
  %2533 = vmatpush1.xpose.msra.mxu0 0.0
  %2534 = vmatprep.subr.mxu0 0.0
  %2535 = vmatpush1.xpose.msra.mxu0 0.0
  %2536 = vmatprep.subr.mxu0 0.0
  %2537 = vmatpush1.xpose.msra.mxu0 0.0
  %2538 = vmatprep.subr.mxu0 0.0
  %2539 = vmatpush1.xpose.msra.mxu0 0.0
  %2540 = vmatprep.subr.mxu0 0.0
  %2541 = vmatpush1.xpose.msra.mxu0 0.0
  %2542 = vmatprep.subr.mxu0 0.0
  %2543 = vmatpush1.xpose.msra.mxu0 0.0
  %2544 = vmatprep.subr.mxu0 0.0
  %2545 = vmatpush1.xpose.msra.mxu0 0.0
  %2546 = vmatprep.subr.mxu0 0.0
  %2547 = vmatpush1.xpose.msra.mxu0 0.0
  %2548 = vmatprep.subr.mxu0 0.0
  %2549 = vmatpush1.xpose.msra.mxu0 0.0
  %2550 = vmatprep.subr.mxu0 0.0
  %2551 = vmatpush1.xpose.msra.mxu0 0.0
  %2552 = vmatprep.subr.mxu0 0.0
  %2553 = vmatpush1.xpose.msra.mxu0 0.0
  %2554 = vmatprep.subr.mxu0 0.0
  %2555 = vmatpush1.xpose.msra.mxu0 0.0
  %2556 = vmatprep.subr.mxu0 0.0
  %2557 = vmatpush1.xpose.msra.mxu0 0.0
  %2558 = vmatprep.subr.mxu0 0.0
  %2559 = vmatpush1.xpose.msra.mxu0 0.0
  %2560 = vmatprep.subr.mxu0 0.0
  %2561 = vmatpush1.xpose.msra.mxu0 0.0
  %2562 = vmatprep.subr.mxu0 0.0
  %2563 = vmatpush1.xpose.msra.mxu0 0.0
  %2564 = vmatprep.subr.mxu0 0.0
  %2565 = vmatpush1.xpose.msra.mxu0 0.0
  %2566 = vmatprep.subr.mxu0 0.0
  %2567 = vmatpush1.xpose.msra.mxu0 0.0
  %2568 = vmatprep.subr.mxu0 0.0
  %2569 = vmatpush1.xpose.msra.mxu0 0.0
  %2570 = vmatprep.subr.mxu0 0.0
  %2571 = vmatpush1.xpose.msra.mxu0 0.0
  %2572 = vmatprep.subr.mxu0 0.0
  %2573 = vmatpush1.xpose.msra.mxu0 0.0
  %2574 = vmatprep.mubr.f32.mxu0 %v2223
  %2575 = vmatmul.mubr.f32.gmra.mrb[0].mxu0 %v2222
  %v2576 = vpop.f32.mrb[0].mxu0
  %v2577 = vadd.f32 %v2507, %v2576
  %v2578 = vpop.f32.mrb[0].mxu0
  %2579 = vdwg.mxu0
  %2580 = vmatprep.subr.mxu0 %v2063
  %2581 = vmatpush1.xpose.msra.mxu0 %v2062
  %2582 = vmatprep.subr.mxu0 %v2079
  %2583 = vmatpush1.xpose.msra.mxu0 %v2078
  %2584 = vmatprep.subr.mxu0 %v2095
  %2585 = vmatpush1.xpose.msra.mxu0 %v2094
  %2586 = vmatprep.subr.mxu0 %v2111
  %2587 = vmatpush1.xpose.msra.mxu0 %v2110
  %2588 = vmatprep.subr.mxu0 %v2127
  %2589 = vmatpush1.xpose.msra.mxu0 %v2126
  %2590 = vmatprep.subr.mxu0 %v2143
  %2591 = vmatpush1.xpose.msra.mxu0 %v2142
  %2592 = vmatprep.subr.mxu0 %v2159
  %2593 = vmatpush1.xpose.msra.mxu0 %v2158
  %2594 = vmatprep.subr.mxu0 %v2175
  %2595 = vmatpush1.xpose.msra.mxu0 %v2174
  %2596 = vmatprep.subr.mxu0 0.0
  %2597 = vmatpush1.xpose.msra.mxu0 0.0
  %2598 = vmatprep.subr.mxu0 0.0
  %2599 = vmatpush1.xpose.msra.mxu0 0.0
  %2600 = vmatprep.subr.mxu0 0.0
  %2601 = vmatpush1.xpose.msra.mxu0 0.0
  %2602 = vmatprep.subr.mxu0 0.0
  %2603 = vmatpush1.xpose.msra.mxu0 0.0
  %2604 = vmatprep.subr.mxu0 0.0
  %2605 = vmatpush1.xpose.msra.mxu0 0.0
  %2606 = vmatprep.subr.mxu0 0.0
  %2607 = vmatpush1.xpose.msra.mxu0 0.0
  %2608 = vmatprep.subr.mxu0 0.0
  %2609 = vmatpush1.xpose.msra.mxu0 0.0
  %2610 = vmatprep.subr.mxu0 0.0
  %2611 = vmatpush1.xpose.msra.mxu0 0.0
  %2612 = vmatprep.subr.mxu0 0.0
  %2613 = vmatpush1.xpose.msra.mxu0 0.0
  %2614 = vmatprep.subr.mxu0 0.0
  %2615 = vmatpush1.xpose.msra.mxu0 0.0
  %2616 = vmatprep.subr.mxu0 0.0
  %2617 = vmatpush1.xpose.msra.mxu0 0.0
  %2618 = vmatprep.subr.mxu0 0.0
  %2619 = vmatpush1.xpose.msra.mxu0 0.0
  %2620 = vmatprep.subr.mxu0 0.0
  %2621 = vmatpush1.xpose.msra.mxu0 0.0
  %2622 = vmatprep.subr.mxu0 0.0
  %2623 = vmatpush1.xpose.msra.mxu0 0.0
  %2624 = vmatprep.subr.mxu0 0.0
  %2625 = vmatpush1.xpose.msra.mxu0 0.0
  %2626 = vmatprep.subr.mxu0 0.0
  %2627 = vmatpush1.xpose.msra.mxu0 0.0
  %2628 = vmatprep.subr.mxu0 0.0
  %2629 = vmatpush1.xpose.msra.mxu0 0.0
  %2630 = vmatprep.subr.mxu0 0.0
  %2631 = vmatpush1.xpose.msra.mxu0 0.0
  %2632 = vmatprep.subr.mxu0 0.0
  %2633 = vmatpush1.xpose.msra.mxu0 0.0
  %2634 = vmatprep.subr.mxu0 0.0
  %2635 = vmatpush1.xpose.msra.mxu0 0.0
  %2636 = vmatprep.subr.mxu0 0.0
  %2637 = vmatpush1.xpose.msra.mxu0 0.0
  %2638 = vmatprep.subr.mxu0 0.0
  %2639 = vmatpush1.xpose.msra.mxu0 0.0
  %2640 = vmatprep.subr.mxu0 0.0
  %2641 = vmatpush1.xpose.msra.mxu0 0.0
  %2642 = vmatprep.subr.mxu0 0.0
  %2643 = vmatpush1.xpose.msra.mxu0 0.0
  %2644 = vmatprep.mubr.f32.mxu0 %v2225
  %2645 = vmatmul.mubr.f32.gmra.mrb[0].mxu0 %v2224
  %v2646 = vpop.f32.mrb[0].mxu0
  %v2647 = vadd.f32 %v2577, %v2646
  %v2648 = vpop.f32.mrb[0].mxu0
  %2649 = vdwg.mxu0
  %2650 = vmatprep.subr.mxu0 %v2065
  %2651 = vmatpush1.xpose.msra.mxu0 %v2064
  %2652 = vmatprep.subr.mxu0 %v2081
  %2653 = vmatpush1.xpose.msra.mxu0 %v2080
  %2654 = vmatprep.subr.mxu0 %v2097
  %2655 = vmatpush1.xpose.msra.mxu0 %v2096
  %2656 = vmatprep.subr.mxu0 %v2113
  %2657 = vmatpush1.xpose.msra.mxu0 %v2112
  %2658 = vmatprep.subr.mxu0 %v2129
  %2659 = vmatpush1.xpose.msra.mxu0 %v2128
  %2660 = vmatprep.subr.mxu0 %v2145
  %2661 = vmatpush1.xpose.msra.mxu0 %v2144
  %2662 = vmatprep.subr.mxu0 %v2161
  %2663 = vmatpush1.xpose.msra.mxu0 %v2160
  %2664 = vmatprep.subr.mxu0 %v2177
  %2665 = vmatpush1.xpose.msra.mxu0 %v2176
  %2666 = vmatprep.subr.mxu0 0.0
  %2667 = vmatpush1.xpose.msra.mxu0 0.0
  %2668 = vmatprep.subr.mxu0 0.0
  %2669 = vmatpush1.xpose.msra.mxu0 0.0
  %2670 = vmatprep.subr.mxu0 0.0
  %2671 = vmatpush1.xpose.msra.mxu0 0.0
  %2672 = vmatprep.subr.mxu0 0.0
  %2673 = vmatpush1.xpose.msra.mxu0 0.0
  %2674 = vmatprep.subr.mxu0 0.0
  %2675 = vmatpush1.xpose.msra.mxu0 0.0
  %2676 = vmatprep.subr.mxu0 0.0
  %2677 = vmatpush1.xpose.msra.mxu0 0.0
  %2678 = vmatprep.subr.mxu0 0.0
  %2679 = vmatpush1.xpose.msra.mxu0 0.0
  %2680 = vmatprep.subr.mxu0 0.0
  %2681 = vmatpush1.xpose.msra.mxu0 0.0
  %2682 = vmatprep.subr.mxu0 0.0
  %2683 = vmatpush1.xpose.msra.mxu0 0.0
  %2684 = vmatprep.subr.mxu0 0.0
  %2685 = vmatpush1.xpose.msra.mxu0 0.0
  %2686 = vmatprep.subr.mxu0 0.0
  %2687 = vmatpush1.xpose.msra.mxu0 0.0
  %2688 = vmatprep.subr.mxu0 0.0
  %2689 = vmatpush1.xpose.msra.mxu0 0.0
  %2690 = vmatprep.subr.mxu0 0.0
  %2691 = vmatpush1.xpose.msra.mxu0 0.0
  %2692 = vmatprep.subr.mxu0 0.0
  %2693 = vmatpush1.xpose.msra.mxu0 0.0
  %2694 = vmatprep.subr.mxu0 0.0
  %2695 = vmatpush1.xpose.msra.mxu0 0.0
  %2696 = vmatprep.subr.mxu0 0.0
  %2697 = vmatpush1.xpose.msra.mxu0 0.0
  %2698 = vmatprep.subr.mxu0 0.0
  %2699 = vmatpush1.xpose.msra.mxu0 0.0
  %2700 = vmatprep.subr.mxu0 0.0
  %2701 = vmatpush1.xpose.msra.mxu0 0.0
  %2702 = vmatprep.subr.mxu0 0.0
  %2703 = vmatpush1.xpose.msra.mxu0 0.0
  %2704 = vmatprep.subr.mxu0 0.0
  %2705 = vmatpush1.xpose.msra.mxu0 0.0
  %2706 = vmatprep.subr.mxu0 0.0
  %2707 = vmatpush1.xpose.msra.mxu0 0.0
  %2708 = vmatprep.subr.mxu0 0.0
  %2709 = vmatpush1.xpose.msra.mxu0 0.0
  %2710 = vmatprep.subr.mxu0 0.0
  %2711 = vmatpush1.xpose.msra.mxu0 0.0
  %2712 = vmatprep.subr.mxu0 0.0
  %2713 = vmatpush1.xpose.msra.mxu0 0.0
  %2714 = vmatprep.mubr.f32.mxu0 %v2227
  %2715 = vmatmul.mubr.f32.gmra.mrb[0].mxu0 %v2226
  %v2716 = vpop.f32.mrb[0].mxu0
  %v2717 = vadd.f32 %v2647, %v2716
  %v2718 = vpop.f32.mrb[0].mxu0
  %2719 = vdwg.mxu0
  %2720 = vmatprep.subr.mxu0 %v2067
  %2721 = vmatpush1.xpose.msra.mxu0 %v2066
  %2722 = vmatprep.subr.mxu0 %v2083
  %2723 = vmatpush1.xpose.msra.mxu0 %v2082
  %2724 = vmatprep.subr.mxu0 %v2099
  %2725 = vmatpush1.xpose.msra.mxu0 %v2098
  %2726 = vmatprep.subr.mxu0 %v2115
  %2727 = vmatpush1.xpose.msra.mxu0 %v2114
  %2728 = vmatprep.subr.mxu0 %v2131
  %2729 = vmatpush1.xpose.msra.mxu0 %v2130
  %2730 = vmatprep.subr.mxu0 %v2147
  %2731 = vmatpush1.xpose.msra.mxu0 %v2146
  %2732 = vmatprep.subr.mxu0 %v2163
  %2733 = vmatpush1.xpose.msra.mxu0 %v2162
  %2734 = vmatprep.subr.mxu0 %v2179
  %2735 = vmatpush1.xpose.msra.mxu0 %v2178
  %2736 = vmatprep.subr.mxu0 0.0
  %2737 = vmatpush1.xpose.msra.mxu0 0.0
  %2738 = vmatprep.subr.mxu0 0.0
  %2739 = vmatpush1.xpose.msra.mxu0 0.0
  %2740 = vmatprep.subr.mxu0 0.0
  %2741 = vmatpush1.xpose.msra.mxu0 0.0
  %2742 = vmatprep.subr.mxu0 0.0
  %2743 = vmatpush1.xpose.msra.mxu0 0.0
  %2744 = vmatprep.subr.mxu0 0.0
  %2745 = vmatpush1.xpose.msra.mxu0 0.0
  %2746 = vmatprep.subr.mxu0 0.0
  %2747 = vmatpush1.xpose.msra.mxu0 0.0
  %2748 = vmatprep.subr.mxu0 0.0
  %2749 = vmatpush1.xpose.msra.mxu0 0.0
  %2750 = vmatprep.subr.mxu0 0.0
  %2751 = vmatpush1.xpose.msra.mxu0 0.0
  %2752 = vmatprep.subr.mxu0 0.0
  %2753 = vmatpush1.xpose.msra.mxu0 0.0
  %2754 = vmatprep.subr.mxu0 0.0
  %2755 = vmatpush1.xpose.msra.mxu0 0.0
  %2756 = vmatprep.subr.mxu0 0.0
  %2757 = vmatpush1.xpose.msra.mxu0 0.0
  %2758 = vmatprep.subr.mxu0 0.0
  %2759 = vmatpush1.xpose.msra.mxu0 0.0
  %2760 = vmatprep.subr.mxu0 0.0
  %2761 = vmatpush1.xpose.msra.mxu0 0.0
  %2762 = vmatprep.subr.mxu0 0.0
  %2763 = vmatpush1.xpose.msra.mxu0 0.0
  %2764 = vmatprep.subr.mxu0 0.0
  %2765 = vmatpush1.xpose.msra.mxu0 0.0
  %2766 = vmatprep.subr.mxu0 0.0
  %2767 = vmatpush1.xpose.msra.mxu0 0.0
  %2768 = vmatprep.subr.mxu0 0.0
  %2769 = vmatpush1.xpose.msra.mxu0 0.0
  %2770 = vmatprep.subr.mxu0 0.0
  %2771 = vmatpush1.xpose.msra.mxu0 0.0
  %2772 = vmatprep.subr.mxu0 0.0
  %2773 = vmatpush1.xpose.msra.mxu0 0.0
  %2774 = vmatprep.subr.mxu0 0.0
  %2775 = vmatpush1.xpose.msra.mxu0 0.0
  %2776 = vmatprep.subr.mxu0 0.0
  %2777 = vmatpush1.xpose.msra.mxu0 0.0
  %2778 = vmatprep.subr.mxu0 0.0
  %2779 = vmatpush1.xpose.msra.mxu0 0.0
  %2780 = vmatprep.subr.mxu0 0.0
  %2781 = vmatpush1.xpose.msra.mxu0 0.0
  %2782 = vmatprep.subr.mxu0 0.0
  %2783 = vmatpush1.xpose.msra.mxu0 0.0
  %2784 = vmatprep.mubr.f32.mxu0 %v2229
  %2785 = vmatmul.mubr.f32.gmra.mrb[0].mxu0 %v2228
  %v2786 = vpop.f32.mrb[0].mxu0
  %v2787 = vadd.f32 %v2717, %v2786
  %v2788 = vpop.f32.mrb[0].mxu0
  %2789 = vdwg.mxu0
  %v2790 = vpack.c.bf16 %v2787, %v2787
  %v2791 = vld [vmem:[%s3] sm:$0xff]
  %v2792 = vld [vmem:[%s3 + $0x8] sm:$0xff]
  %v2793 = vld [vmem:[%s3 + $0x10] sm:$0xff]
  %v2794 = vld [vmem:[%s3 + $0x18] sm:$0xff]
  %v2795 = vld [vmem:[%s3 + $0x20] sm:$0xff]
  %v2796 = vld [vmem:[%s3 + $0x28] sm:$0xff]
  %v2797 = vld [vmem:[%s3 + $0x30] sm:$0xff]
  %v2798 = vld [vmem:[%s3 + $0x38] sm:$0xff]
  %v2799 = vld [vmem:[%s3 + $0x40] sm:$0xff]
  %v2800 = vld [vmem:[%s3 + $0x48] sm:$0xff]
  %v2801 = vld [vmem:[%s3 + $0x50] sm:$0xff]
  %v2802 = vld [vmem:[%s3 + $0x58] sm:$0xff]
  %v2803 = vld [vmem:[%s3 + $0x60] sm:$0xff]
  %v2804 = vld [vmem:[%s3 + $0x68] sm:$0xff]
  %v2805 = vld [vmem:[%s3 + $0x70] sm:$0xff]
  %v2806 = vld [vmem:[%s3 + $0x78] sm:$0xff]
  %v2807 = vld [vmem:[%s3 + $0x80] sm:$0xff]
  %v2808 = vld [vmem:[%s3 + $0x88] sm:$0xff]
  %v2809 = vld [vmem:[%s3 + $0x90] sm:$0xff]
  %v2810 = vld [vmem:[%s3 + $0x98] sm:$0xff]
  %v2811 = vld [vmem:[%s3 + $0xa0] sm:$0xff]
  %v2812 = vld [vmem:[%s3 + $0xa8] sm:$0xff]
  %v2813 = vld [vmem:[%s3 + $0xb0] sm:$0xff]
  %v2814 = vld [vmem:[%s3 + $0xb8] sm:$0xff]
  %v2815 = vld [vmem:[%s4] sm:$0x3f]
  %v2817 = vlaneseq
  %v2818 = vshrl.u32 %v2817, 7
  %v2819 = vsub.s32 0, %v2818
  %v2820 = vrot.slane %v2815, %v2819
  %v2821 = vlaneseq
  %v2822 = vshrl.u32 %v2821, 7
  %v2823 = vsub.s32 1, %v2822
  %v2824 = vrot.slane %v2815, %v2823
  %v2825 = vlaneseq
  %v2826 = vshrl.u32 %v2825, 7
  %v2827 = vsub.s32 2, %v2826
  %v2828 = vrot.slane %v2815, %v2827
  %v2829 = vlaneseq
  %v2830 = vshrl.u32 %v2829, 7
  %v2831 = vsub.s32 3, %v2830
  %v2832 = vrot.slane %v2815, %v2831
  %v2833 = vlaneseq
  %v2834 = vshrl.u32 %v2833, 7
  %v2835 = vsub.s32 4, %v2834
  %v2836 = vrot.slane %v2815, %v2835
  %v2837 = vlaneseq
  %v2838 = vshrl.u32 %v2837, 7
  %v2839 = vsub.s32 5, %v2838
  %v2840 = vrot.slane %v2815, %v2839
  %v2871 = vunpack.c.l.b16 %v2791
  %v2872 = vunpack.c.h.b16 %v2791
  %v2873 = vunpack.c.l.b16 %v2792
  %v2874 = vunpack.c.h.b16 %v2792
  %v2875 = vunpack.c.l.b16 %v2793
  %v2876 = vunpack.c.h.b16 %v2793
  %v2877 = vunpack.c.l.b16 %v2794
  %v2878 = vunpack.c.h.b16 %v2794
  %v2879 = vunpack.c.l.b16 %v2795
  %v2880 = vunpack.c.h.b16 %v2795
  %v2881 = vunpack.c.l.b16 %v2796
  %v2882 = vunpack.c.h.b16 %v2796
  %v2883 = vunpack.c.l.b16 %v2797
  %v2884 = vunpack.c.h.b16 %v2797
  %v2885 = vunpack.c.l.b16 %v2798
  %v2886 = vunpack.c.h.b16 %v2798
  %v2887 = vunpack.c.l.b16 %v2799
  %v2888 = vunpack.c.h.b16 %v2799
  %v2889 = vunpack.c.l.b16 %v2800
  %v2890 = vunpack.c.h.b16 %v2800
  %v2891 = vunpack.c.l.b16 %v2801
  %v2892 = vunpack.c.h.b16 %v2801
  %v2893 = vunpack.c.l.b16 %v2802
  %v2894 = vunpack.c.h.b16 %v2802
  %v2895 = vunpack.c.l.b16 %v2803
  %v2896 = vunpack.c.h.b16 %v2803
  %v2897 = vunpack.c.l.b16 %v2804
  %v2898 = vunpack.c.h.b16 %v2804
  %v2899 = vunpack.c.l.b16 %v2805
  %v2900 = vunpack.c.h.b16 %v2805
  %v2901 = vunpack.c.l.b16 %v2806
  %v2902 = vunpack.c.h.b16 %v2806
  %v2903 = vunpack.c.l.b16 %v2807
  %v2904 = vunpack.c.h.b16 %v2807
  %v2905 = vunpack.c.l.b16 %v2808
  %v2906 = vunpack.c.h.b16 %v2808
  %v2907 = vunpack.c.l.b16 %v2809
  %v2908 = vunpack.c.h.b16 %v2809
  %v2909 = vunpack.c.l.b16 %v2810
  %v2910 = vunpack.c.h.b16 %v2810
  %v2911 = vunpack.c.l.b16 %v2811
  %v2912 = vunpack.c.h.b16 %v2811
  %v2913 = vunpack.c.l.b16 %v2812
  %v2914 = vunpack.c.h.b16 %v2812
  %v2915 = vunpack.c.l.b16 %v2813
  %v2916 = vunpack.c.h.b16 %v2813
  %v2917 = vunpack.c.l.b16 %v2814
  %v2918 = vunpack.c.h.b16 %v2814
  %v2919 = vpack.c.b16 %v2877, %v2871
  %v2920 = vpack.c.b16 %v2878, %v2872
  %v2921 = vpack.c.b16 %v2879, %v2873
  %v2922 = vpack.c.b16 %v2880, %v2874
  %v2923 = vpack.c.b16 %v2881, %v2875
  %v2924 = vpack.c.b16 %v2882, %v2876
  %v2925 = vpack.c.b16 %v2889, %v2883
  %v2926 = vpack.c.b16 %v2890, %v2884
  %v2927 = vpack.c.b16 %v2891, %v2885
  %v2928 = vpack.c.b16 %v2892, %v2886
  %v2929 = vpack.c.b16 %v2893, %v2887
  %v2930 = vpack.c.b16 %v2894, %v2888
  %v2931 = vpack.c.b16 %v2901, %v2895
  %v2932 = vpack.c.b16 %v2902, %v2896
  %v2933 = vpack.c.b16 %v2903, %v2897
  %v2934 = vpack.c.b16 %v2904, %v2898
  %v2935 = vpack.c.b16 %v2905, %v2899
  %v2936 = vpack.c.b16 %v2906, %v2900
  %v2937 = vpack.c.b16 %v2913, %v2907
  %v2938 = vpack.c.b16 %v2914, %v2908
  %v2939 = vpack.c.b16 %v2915, %v2909
  %v2940 = vpack.c.b16 %v2916, %v2910
  %v2941 = vpack.c.b16 %v2917, %v2911
  %v2942 = vpack.c.b16 %v2918, %v2912
  %vm2967 = vcmask 523264
  %v2969 = vsel %vm2967, %v2790, 0
  %2971 = vmatprep.subr.bf16.mxu0 %v2920
  %2972 = vmatpush1.bf16.msra.mxu0 %v2919
  %2973 = vmatprep.subr.bf16.mxu0 %v2926
  %2974 = vmatpush1.bf16.msra.mxu0 %v2925
  %2975 = vmatprep.subr.bf16.mxu0 %v2932
  %2976 = vmatpush1.bf16.msra.mxu0 %v2931
  %2977 = vmatprep.subr.bf16.mxu0 %v2938
  %2978 = vmatpush1.bf16.msra.mxu0 %v2937
  %2979 = vmatprep.subr.bf16.mxu0 0
  %2980 = vmatpush1.bf16.msra.mxu0 0
  %2981 = vmatprep.subr.bf16.mxu0 0
  %2982 = vmatpush1.bf16.msra.mxu0 0
  %2983 = vmatprep.subr.bf16.mxu0 0
  %2984 = vmatpush1.bf16.msra.mxu0 0
  %2985 = vmatprep.subr.bf16.mxu0 0
  %2986 = vmatpush1.bf16.msra.mxu0 0
  %2987 = vmatprep.subr.bf16.mxu0 0
  %2988 = vmatpush1.bf16.msra.mxu0 0
  %2989 = vmatprep.subr.bf16.mxu0 0
  %2990 = vmatpush1.bf16.msra.mxu0 0
  %2991 = vmatprep.subr.bf16.mxu0 0
  %2992 = vmatpush1.bf16.msra.mxu0 0
  %2993 = vmatprep.subr.bf16.mxu0 0
  %2994 = vmatpush1.bf16.msra.mxu0 0
  %2995 = vmatprep.subr.bf16.mxu0 0
  %2996 = vmatpush1.bf16.msra.mxu0 0
  %2997 = vmatprep.subr.bf16.mxu0 0
  %2998 = vmatpush1.bf16.msra.mxu0 0
  %2999 = vmatprep.subr.bf16.mxu0 0
  %3000 = vmatpush1.bf16.msra.mxu0 0
  %3001 = vmatprep.subr.bf16.mxu0 0
  %3002 = vmatpush1.bf16.msra.mxu0 0
  %3003 = vmatprep.mubr.bf16.mxu0 0
  %3004 = vmatmul.mubr.bf16.gmra.mrb[0].mxu0 %v2969
  %v3005 = vpop.f32.mrb[0].mxu0
  %v3006 = vadd.f32 %v2820, %v3005
  %v3007 = vpop.f32.mrb[0].mxu0
  %v3008 = vadd.f32 %v2824, %v3007
  %v3009 = vpop.f32.mrb[0].mxu0
  %v3010 = vpop.f32.mrb[0].mxu0
  %3011 = vdwg.mxu0
  %3012 = vmatprep.subr.bf16.mxu0 %v2922
  %3013 = vmatpush1.bf16.msra.mxu0 %v2921
  %3014 = vmatprep.subr.bf16.mxu0 %v2928
  %3015 = vmatpush1.bf16.msra.mxu0 %v2927
  %3016 = vmatprep.subr.bf16.mxu0 %v2934
  %3017 = vmatpush1.bf16.msra.mxu0 %v2933
  %3018 = vmatprep.subr.bf16.mxu0 %v2940
  %3019 = vmatpush1.bf16.msra.mxu0 %v2939
  %3020 = vmatprep.subr.bf16.mxu0 0
  %3021 = vmatpush1.bf16.msra.mxu0 0
  %3022 = vmatprep.subr.bf16.mxu0 0
  %3023 = vmatpush1.bf16.msra.mxu0 0
  %3024 = vmatprep.subr.bf16.mxu0 0
  %3025 = vmatpush1.bf16.msra.mxu0 0
  %3026 = vmatprep.subr.bf16.mxu0 0
  %3027 = vmatpush1.bf16.msra.mxu0 0
  %3028 = vmatprep.subr.bf16.mxu0 0
  %3029 = vmatpush1.bf16.msra.mxu0 0
  %3030 = vmatprep.subr.bf16.mxu0 0
  %3031 = vmatpush1.bf16.msra.mxu0 0
  %3032 = vmatprep.subr.bf16.mxu0 0
  %3033 = vmatpush1.bf16.msra.mxu0 0
  %3034 = vmatprep.subr.bf16.mxu0 0
  %3035 = vmatpush1.bf16.msra.mxu0 0
  %3036 = vmatprep.subr.bf16.mxu0 0
  %3037 = vmatpush1.bf16.msra.mxu0 0
  %3038 = vmatprep.subr.bf16.mxu0 0
  %3039 = vmatpush1.bf16.msra.mxu0 0
  %3040 = vmatprep.subr.bf16.mxu0 0
  %3041 = vmatpush1.bf16.msra.mxu0 0
  %3042 = vmatprep.subr.bf16.mxu0 0
  %3043 = vmatpush1.bf16.msra.mxu0 0
  %3044 = vmatprep.mubr.bf16.mxu0 0
  %3045 = vmatmul.mubr.bf16.gmra.mrb[0].mxu0 %v2969
  %v3046 = vpop.f32.mrb[0].mxu0
  %v3047 = vadd.f32 %v2828, %v3046
  %v3048 = vpop.f32.mrb[0].mxu0
  %v3049 = vadd.f32 %v2832, %v3048
  %v3050 = vpop.f32.mrb[0].mxu0
  %v3051 = vpop.f32.mrb[0].mxu0
  %3052 = vdwg.mxu0
  %3053 = vmatprep.subr.bf16.mxu0 %v2924
  %3054 = vmatpush1.bf16.msra.mxu0 %v2923
  %3055 = vmatprep.subr.bf16.mxu0 %v2930
  %3056 = vmatpush1.bf16.msra.mxu0 %v2929
  %3057 = vmatprep.subr.bf16.mxu0 %v2936
  %3058 = vmatpush1.bf16.msra.mxu0 %v2935
  %3059 = vmatprep.subr.bf16.mxu0 %v2942
  %3060 = vmatpush1.bf16.msra.mxu0 %v2941
  %3061 = vmatprep.subr.bf16.mxu0 0
  %3062 = vmatpush1.bf16.msra.mxu0 0
  %3063 = vmatprep.subr.bf16.mxu0 0
  %3064 = vmatpush1.bf16.msra.mxu0 0
  %3065 = vmatprep.subr.bf16.mxu0 0
  %3066 = vmatpush1.bf16.msra.mxu0 0
  %3067 = vmatprep.subr.bf16.mxu0 0
  %3068 = vmatpush1.bf16.msra.mxu0 0
  %3069 = vmatprep.subr.bf16.mxu0 0
  %3070 = vmatpush1.bf16.msra.mxu0 0
  %3071 = vmatprep.subr.bf16.mxu0 0
  %3072 = vmatpush1.bf16.msra.mxu0 0
  %3073 = vmatprep.subr.bf16.mxu0 0
  %3074 = vmatpush1.bf16.msra.mxu0 0
  %3075 = vmatprep.subr.bf16.mxu0 0
  %3076 = vmatpush1.bf16.msra.mxu0 0
  %3077 = vmatprep.subr.bf16.mxu0 0
  %3078 = vmatpush1.bf16.msra.mxu0 0
  %3079 = vmatprep.subr.bf16.mxu0 0
  %3080 = vmatpush1.bf16.msra.mxu0 0
  %3081 = vmatprep.subr.bf16.mxu0 0
  %3082 = vmatpush1.bf16.msra.mxu0 0
  %3083 = vmatprep.subr.bf16.mxu0 0
  %3084 = vmatpush1.bf16.msra.mxu0 0
  %3085 = vmatprep.mubr.bf16.mxu0 0
  %3086 = vmatmul.mubr.bf16.gmra.mrb[0].mxu0 %v2969
  %v3087 = vpop.f32.mrb[0].mxu0
  %v3088 = vadd.f32 %v2836, %v3087
  %v3089 = vpop.f32.mrb[0].mxu0
  %v3090 = vadd.f32 %v2840, %v3089
  %v3091 = vpop.f32.mrb[0].mxu0
  %v3092 = vpop.f32.mrb[0].mxu0
  %3093 = vdwg.mxu0
  %v3094 = vmax.f32 %v3006, 0.0
  %v3095 = vmax.f32 %v3008, 0.0
  %v3096 = vmax.f32 %v3047, 0.0
  %v3097 = vmax.f32 %v3049, 0.0
  %v3098 = vmax.f32 %v3088, 0.0
  %v3099 = vmax.f32 %v3090, 0.0
  %v3100 = vld [vmem:[%s5] sm:$0x3]
  %v3102 = vlaneseq
  %v3103 = vshrl.u32 %v3102, 7
  %v3104 = vsub.s32 0, %v3103
  %v3105 = vrot.slane %v3100, %v3104
  %v3106 = vlaneseq
  %v3107 = vshrl.u32 %v3106, 7
  %v3108 = vsub.s32 1, %v3107
  %v3109 = vrot.slane %v3100, %v3108
  %v3112 = vmul.f32 %v3094, %v3105
  %v3113 = vmul.f32 %v3095, %v3109
  %v3114 = vadd.f32 %v3112, %v3113
  %3115 = vadd.xlane.f32.xlu0 %v3114
  %v3116 = vpop.xlane.xlu0 %3115
  %v3117 = vld [vmem:[#allocation2] sm:$0x1]
  %v3119 = vlaneseq
  %v3120 = vshrl.u32 %v3119, 7
  %v3121 = vsub.s32 0, %v3120
  %v3122 = vrot.slane %v3117, %v3121
  %v3124 = vadd.f32 %v3116, %v3122
  %v3125 = vpack.c.bf16 %v3096, %v3096
  %v3126 = vpack.c.bf16 %v3097, %v3097
  %v3127 = vpack.c.bf16 %v3098, %v3098
  %v3128 = vpack.c.bf16 %v3099, %v3099
  %v3129 = vld [vmem:[%s7] sm:$0xff]
  %v3130 = vld [vmem:[%s7 + $0x8] sm:$0xff]
  %v3131 = vld [vmem:[%s7 + $0x10] sm:$0xff]
  %v3132 = vld [vmem:[%s7 + $0x18] sm:$0xff]
  %v3133 = vld [vmem:[%s7 + $0x20] sm:$0xff]
  %v3134 = vld [vmem:[%s7 + $0x28] sm:$0xff]
  %v3135 = vld [vmem:[%s7 + $0x30] sm:$0xff]
  %v3136 = vld [vmem:[%s7 + $0x38] sm:$0xff]
  %v3137 = vld [vmem:[%s7 + $0x40] sm:$0xff]
  %v3138 = vld [vmem:[%s7 + $0x48] sm:$0xff]
  %v3139 = vld [vmem:[%s7 + $0x50] sm:$0xff]
  %v3140 = vld [vmem:[%s7 + $0x58] sm:$0xff]
  %v3141 = vld [vmem:[%s7 + $0x60] sm:$0xff]
  %v3142 = vld [vmem:[%s7 + $0x68] sm:$0xff]
  %v3143 = vld [vmem:[%s7 + $0x70] sm:$0xff]
  %v3144 = vld [vmem:[%s7 + $0x78] sm:$0xff]
  %v3145 = vld [vmem:[%s7 + $0x80] sm:$0xff]
  %v3146 = vld [vmem:[%s7 + $0x88] sm:$0xff]
  %v3147 = vld [vmem:[%s7 + $0x90] sm:$0xff]
  %v3148 = vld [vmem:[%s7 + $0x98] sm:$0xff]
  %v3149 = vld [vmem:[%s7 + $0xa0] sm:$0xff]
  %v3150 = vld [vmem:[%s7 + $0xa8] sm:$0xff]
  %v3151 = vld [vmem:[%s7 + $0xb0] sm:$0xff]
  %v3152 = vld [vmem:[%s7 + $0xb8] sm:$0xff]
  %v3153 = vld [vmem:[%s7 + $0xc0] sm:$0xff]
  %v3154 = vld [vmem:[%s7 + $0xc8] sm:$0xff]
  %v3155 = vld [vmem:[%s7 + $0xd0] sm:$0xff]
  %v3156 = vld [vmem:[%s7 + $0xd8] sm:$0xff]
  %v3157 = vld [vmem:[%s7 + $0xe0] sm:$0xff]
  %v3158 = vld [vmem:[%s7 + $0xe8] sm:$0xff]
  %v3159 = vld [vmem:[%s7 + $0xf0] sm:$0xff]
  %v3160 = vld [vmem:[%s7 + $0xf8] sm:$0xff]
  %v3161 = vld [vmem:[%s7 + $0x100] sm:$0xff]
  %v3162 = vld [vmem:[%s7 + $0x108] sm:$0xff]
  %v3163 = vld [vmem:[%s7 + $0x110] sm:$0xff]
  %v3164 = vld [vmem:[%s7 + $0x118] sm:$0xff]
  %v3165 = vld [vmem:[%s7 + $0x120] sm:$0xff]
  %v3166 = vld [vmem:[%s7 + $0x128] sm:$0xff]
  %v3167 = vld [vmem:[%s7 + $0x130] sm:$0xff]
  %v3168 = vld [vmem:[%s7 + $0x138] sm:$0xff]
  %v3169 = vld [vmem:[%s7 + $0x140] sm:$0xff]
  %v3170 = vld [vmem:[%s7 + $0x148] sm:$0xff]
  %v3171 = vld [vmem:[%s7 + $0x150] sm:$0xff]
  %v3172 = vld [vmem:[%s7 + $0x158] sm:$0xff]
  %v3173 = vld [vmem:[%s7 + $0x160] sm:$0xff]
  %v3174 = vld [vmem:[%s7 + $0x168] sm:$0xff]
  %v3175 = vld [vmem:[%s7 + $0x170] sm:$0xff]
  %v3176 = vld [vmem:[%s7 + $0x178] sm:$0xff]
  %v3177 = vld [vmem:[%s7 + $0x180] sm:$0xff]
  %v3178 = vld [vmem:[%s7 + $0x188] sm:$0xff]
  %v3179 = vld [vmem:[%s7 + $0x190] sm:$0xff]
  %v3180 = vld [vmem:[%s7 + $0x198] sm:$0xff]
  %v3181 = vld [vmem:[%s7 + $0x1a0] sm:$0xff]
  %v3182 = vld [vmem:[%s7 + $0x1a8] sm:$0xff]
  %v3183 = vld [vmem:[%s7 + $0x1b0] sm:$0xff]
  %v3184 = vld [vmem:[%s7 + $0x1b8] sm:$0xff]
  %v3185 = vld [vmem:[%s7 + $0x1c0] sm:$0xff]
  %v3186 = vld [vmem:[%s7 + $0x1c8] sm:$0xff]
  %v3187 = vld [vmem:[%s7 + $0x1d0] sm:$0xff]
  %v3188 = vld [vmem:[%s7 + $0x1d8] sm:$0xff]
  %v3189 = vld [vmem:[%s7 + $0x1e0] sm:$0xff]
  %v3190 = vld [vmem:[%s7 + $0x1e8] sm:$0xff]
  %v3191 = vld [vmem:[%s7 + $0x1f0] sm:$0xff]
  %v3192 = vld [vmem:[%s7 + $0x1f8] sm:$0xff]
  %v3193 = vld [vmem:[%s8] sm:$0x3]
  %v3195 = vlaneseq
  %v3196 = vshrl.u32 %v3195, 7
  %v3197 = vsub.s32 0, %v3196
  %v3198 = vrot.slane %v3193, %v3197
  %v3199 = vlaneseq
  %v3200 = vshrl.u32 %v3199, 7
  %v3201 = vsub.s32 1, %v3200
  %v3202 = vrot.slane %v3193, %v3201
  %v3269 = vunpack.c.l.b16 %v3129
  %v3270 = vunpack.c.h.b16 %v3129
  %v3271 = vunpack.c.l.b16 %v3130
  %v3272 = vunpack.c.h.b16 %v3130
  %v3273 = vunpack.c.l.b16 %v3131
  %v3274 = vunpack.c.h.b16 %v3131
  %v3275 = vunpack.c.l.b16 %v3132
  %v3276 = vunpack.c.h.b16 %v3132
  %v3277 = vunpack.c.l.b16 %v3133
  %v3278 = vunpack.c.h.b16 %v3133
  %v3279 = vunpack.c.l.b16 %v3134
  %v3280 = vunpack.c.h.b16 %v3134
  %v3281 = vunpack.c.l.b16 %v3135
  %v3282 = vunpack.c.h.b16 %v3135
  %v3283 = vunpack.c.l.b16 %v3136
  %v3284 = vunpack.c.h.b16 %v3136
  %v3285 = vunpack.c.l.b16 %v3137
  %v3286 = vunpack.c.h.b16 %v3137
  %v3287 = vunpack.c.l.b16 %v3138
  %v3288 = vunpack.c.h.b16 %v3138
  %v3289 = vunpack.c.l.b16 %v3139
  %v3290 = vunpack.c.h.b16 %v3139
  %v3291 = vunpack.c.l.b16 %v3140
  %v3292 = vunpack.c.h.b16 %v3140
  %v3293 = vunpack.c.l.b16 %v3141
  %v3294 = vunpack.c.h.b16 %v3141
  %v3295 = vunpack.c.l.b16 %v3142
  %v3296 = vunpack.c.h.b16 %v3142
  %v3297 = vunpack.c.l.b16 %v3143
  %v3298 = vunpack.c.h.b16 %v3143
  %v3299 = vunpack.c.l.b16 %v3144
  %v3300 = vunpack.c.h.b16 %v3144
  %v3301 = vunpack.c.l.b16 %v3145
  %v3302 = vunpack.c.h.b16 %v3145
  %v3303 = vunpack.c.l.b16 %v3146
  %v3304 = vunpack.c.h.b16 %v3146
  %v3305 = vunpack.c.l.b16 %v3147
  %v3306 = vunpack.c.h.b16 %v3147
  %v3307 = vunpack.c.l.b16 %v3148
  %v3308 = vunpack.c.h.b16 %v3148
  %v3309 = vunpack.c.l.b16 %v3149
  %v3310 = vunpack.c.h.b16 %v3149
  %v3311 = vunpack.c.l.b16 %v3150
  %v3312 = vunpack.c.h.b16 %v3150
  %v3313 = vunpack.c.l.b16 %v3151
  %v3314 = vunpack.c.h.b16 %v3151
  %v3315 = vunpack.c.l.b16 %v3152
  %v3316 = vunpack.c.h.b16 %v3152
  %v3317 = vunpack.c.l.b16 %v3153
  %v3318 = vunpack.c.h.b16 %v3153
  %v3319 = vunpack.c.l.b16 %v3154
  %v3320 = vunpack.c.h.b16 %v3154
  %v3321 = vunpack.c.l.b16 %v3155
  %v3322 = vunpack.c.h.b16 %v3155
  %v3323 = vunpack.c.l.b16 %v3156
  %v3324 = vunpack.c.h.b16 %v3156
  %v3325 = vunpack.c.l.b16 %v3157
  %v3326 = vunpack.c.h.b16 %v3157
  %v3327 = vunpack.c.l.b16 %v3158
  %v3328 = vunpack.c.h.b16 %v3158
  %v3329 = vunpack.c.l.b16 %v3159
  %v3330 = vunpack.c.h.b16 %v3159
  %v3331 = vunpack.c.l.b16 %v3160
  %v3332 = vunpack.c.h.b16 %v3160
  %v3333 = vunpack.c.l.b16 %v3161
  %v3334 = vunpack.c.h.b16 %v3161
  %v3335 = vunpack.c.l.b16 %v3162
  %v3336 = vunpack.c.h.b16 %v3162
  %v3337 = vunpack.c.l.b16 %v3163
  %v3338 = vunpack.c.h.b16 %v3163
  %v3339 = vunpack.c.l.b16 %v3164
  %v3340 = vunpack.c.h.b16 %v3164
  %v3341 = vunpack.c.l.b16 %v3165
  %v3342 = vunpack.c.h.b16 %v3165
  %v3343 = vunpack.c.l.b16 %v3166
  %v3344 = vunpack.c.h.b16 %v3166
  %v3345 = vunpack.c.l.b16 %v3167
  %v3346 = vunpack.c.h.b16 %v3167
  %v3347 = vunpack.c.l.b16 %v3168
  %v3348 = vunpack.c.h.b16 %v3168
  %v3349 = vunpack.c.l.b16 %v3169
  %v3350 = vunpack.c.h.b16 %v3169
  %v3351 = vunpack.c.l.b16 %v3170
  %v3352 = vunpack.c.h.b16 %v3170
  %v3353 = vunpack.c.l.b16 %v3171
  %v3354 = vunpack.c.h.b16 %v3171
  %v3355 = vunpack.c.l.b16 %v3172
  %v3356 = vunpack.c.h.b16 %v3172
  %v3357 = vunpack.c.l.b16 %v3173
  %v3358 = vunpack.c.h.b16 %v3173
  %v3359 = vunpack.c.l.b16 %v3174
  %v3360 = vunpack.c.h.b16 %v3174
  %v3361 = vunpack.c.l.b16 %v3175
  %v3362 = vunpack.c.h.b16 %v3175
  %v3363 = vunpack.c.l.b16 %v3176
  %v3364 = vunpack.c.h.b16 %v3176
  %v3365 = vunpack.c.l.b16 %v3177
  %v3366 = vunpack.c.h.b16 %v3177
  %v3367 = vunpack.c.l.b16 %v3178
  %v3368 = vunpack.c.h.b16 %v3178
  %v3369 = vunpack.c.l.b16 %v3179
  %v3370 = vunpack.c.h.b16 %v3179
  %v3371 = vunpack.c.l.b16 %v3180
  %v3372 = vunpack.c.h.b16 %v3180
  %v3373 = vunpack.c.l.b16 %v3181
  %v3374 = vunpack.c.h.b16 %v3181
  %v3375 = vunpack.c.l.b16 %v3182
  %v3376 = vunpack.c.h.b16 %v3182
  %v3377 = vunpack.c.l.b16 %v3183
  %v3378 = vunpack.c.h.b16 %v3183
  %v3379 = vunpack.c.l.b16 %v3184
  %v3380 = vunpack.c.h.b16 %v3184
  %v3381 = vunpack.c.l.b16 %v3185
  %v3382 = vunpack.c.h.b16 %v3185
  %v3383 = vunpack.c.l.b16 %v3186
  %v3384 = vunpack.c.h.b16 %v3186
  %v3385 = vunpack.c.l.b16 %v3187
  %v3386 = vunpack.c.h.b16 %v3187
  %v3387 = vunpack.c.l.b16 %v3188
  %v3388 = vunpack.c.h.b16 %v3188
  %v3389 = vunpack.c.l.b16 %v3189
  %v3390 = vunpack.c.h.b16 %v3189
  %v3391 = vunpack.c.l.b16 %v3190
  %v3392 = vunpack.c.h.b16 %v3190
  %v3393 = vunpack.c.l.b16 %v3191
  %v3394 = vunpack.c.h.b16 %v3191
  %v3395 = vunpack.c.l.b16 %v3192
  %v3396 = vunpack.c.h.b16 %v3192
  %v3397 = vpack.c.b16 %v3271, %v3269
  %v3398 = vpack.c.b16 %v3272, %v3270
  %v3399 = vpack.c.b16 %v3275, %v3273
  %v3400 = vpack.c.b16 %v3276, %v3274
  %v3401 = vpack.c.b16 %v3279, %v3277
  %v3402 = vpack.c.b16 %v3280, %v3278
  %v3403 = vpack.c.b16 %v3283, %v3281
  %v3404 = vpack.c.b16 %v3284, %v3282
  %v3405 = vpack.c.b16 %v3287, %v3285
  %v3406 = vpack.c.b16 %v3288, %v3286
  %v3407 = vpack.c.b16 %v3291, %v3289
  %v3408 = vpack.c.b16 %v3292, %v3290
  %v3409 = vpack.c.b16 %v3295, %v3293
  %v3410 = vpack.c.b16 %v3296, %v3294
  %v3411 = vpack.c.b16 %v3299, %v3297
  %v3412 = vpack.c.b16 %v3300, %v3298
  %v3413 = vpack.c.b16 %v3303, %v3301
  %v3414 = vpack.c.b16 %v3304, %v3302
  %v3415 = vpack.c.b16 %v3307, %v3305
  %v3416 = vpack.c.b16 %v3308, %v3306
  %v3417 = vpack.c.b16 %v3311, %v3309
  %v3418 = vpack.c.b16 %v3312, %v3310
  %v3419 = vpack.c.b16 %v3315, %v3313
  %v3420 = vpack.c.b16 %v3316, %v3314
  %v3421 = vpack.c.b16 %v3319, %v3317
  %v3422 = vpack.c.b16 %v3320, %v3318
  %v3423 = vpack.c.b16 %v3323, %v3321
  %v3424 = vpack.c.b16 %v3324, %v3322
  %v3425 = vpack.c.b16 %v3327, %v3325
  %v3426 = vpack.c.b16 %v3328, %v3326
  %v3427 = vpack.c.b16 %v3331, %v3329
  %v3428 = vpack.c.b16 %v3332, %v3330
  %v3429 = vpack.c.b16 %v3335, %v3333
  %v3430 = vpack.c.b16 %v3336, %v3334
  %v3431 = vpack.c.b16 %v3339, %v3337
  %v3432 = vpack.c.b16 %v3340, %v3338
  %v3433 = vpack.c.b16 %v3343, %v3341
  %v3434 = vpack.c.b16 %v3344, %v3342
  %v3435 = vpack.c.b16 %v3347, %v3345
  %v3436 = vpack.c.b16 %v3348, %v3346
  %v3437 = vpack.c.b16 %v3351, %v3349
  %v3438 = vpack.c.b16 %v3352, %v3350
  %v3439 = vpack.c.b16 %v3355, %v3353
  %v3440 = vpack.c.b16 %v3356, %v3354
  %v3441 = vpack.c.b16 %v3359, %v3357
  %v3442 = vpack.c.b16 %v3360, %v3358
  %v3443 = vpack.c.b16 %v3363, %v3361
  %v3444 = vpack.c.b16 %v3364, %v3362
  %v3445 = vpack.c.b16 %v3367, %v3365
  %v3446 = vpack.c.b16 %v3368, %v3366
  %v3447 = vpack.c.b16 %v3371, %v3369
  %v3448 = vpack.c.b16 %v3372, %v3370
  %v3449 = vpack.c.b16 %v3375, %v3373
  %v3450 = vpack.c.b16 %v3376, %v3374
  %v3451 = vpack.c.b16 %v3379, %v3377
  %v3452 = vpack.c.b16 %v3380, %v3378
  %v3453 = vpack.c.b16 %v3383, %v3381
  %v3454 = vpack.c.b16 %v3384, %v3382
  %v3455 = vpack.c.b16 %v3387, %v3385
  %v3456 = vpack.c.b16 %v3388, %v3386
  %v3457 = vpack.c.b16 %v3391, %v3389
  %v3458 = vpack.c.b16 %v3392, %v3390
  %v3459 = vpack.c.b16 %v3395, %v3393
  %v3460 = vpack.c.b16 %v3396, %v3394
  %3525 = vmatprep.subr.bf16.mxu0 %v3398
  %3526 = vmatpush1.bf16.msra.mxu0 %v3397
  %3527 = vmatprep.subr.bf16.mxu0 %v3400
  %3528 = vmatpush1.bf16.msra.mxu0 %v3399
  %3529 = vmatprep.subr.bf16.mxu0 %v3402
  %3530 = vmatpush1.bf16.msra.mxu0 %v3401
  %3531 = vmatprep.subr.bf16.mxu0 %v3404
  %3532 = vmatpush1.bf16.msra.mxu0 %v3403
  %3533 = vmatprep.subr.bf16.mxu0 %v3406
  %3534 = vmatpush1.bf16.msra.mxu0 %v3405
  %3535 = vmatprep.subr.bf16.mxu0 %v3408
  %3536 = vmatpush1.bf16.msra.mxu0 %v3407
  %3537 = vmatprep.subr.bf16.mxu0 %v3410
  %3538 = vmatpush1.bf16.msra.mxu0 %v3409
  %3539 = vmatprep.subr.bf16.mxu0 %v3412
  %3540 = vmatpush1.bf16.msra.mxu0 %v3411
  %3541 = vmatprep.subr.bf16.mxu0 %v3414
  %3542 = vmatpush1.bf16.msra.mxu0 %v3413
  %3543 = vmatprep.subr.bf16.mxu0 %v3416
  %3544 = vmatpush1.bf16.msra.mxu0 %v3415
  %3545 = vmatprep.subr.bf16.mxu0 %v3418
  %3546 = vmatpush1.bf16.msra.mxu0 %v3417
  %3547 = vmatprep.subr.bf16.mxu0 %v3420
  %3548 = vmatpush1.bf16.msra.mxu0 %v3419
  %3549 = vmatprep.subr.bf16.mxu0 %v3422
  %3550 = vmatpush1.bf16.msra.mxu0 %v3421
  %3551 = vmatprep.subr.bf16.mxu0 %v3424
  %3552 = vmatpush1.bf16.msra.mxu0 %v3423
  %3553 = vmatprep.subr.bf16.mxu0 %v3426
  %3554 = vmatpush1.bf16.msra.mxu0 %v3425
  %3555 = vmatprep.subr.bf16.mxu0 %v3428
  %3556 = vmatpush1.bf16.msra.mxu0 %v3427
  %3557 = vmatprep.mubr.bf16.mxu0 %v3126
  %3558 = vmatmul.mubr.bf16.gmra.mrb[0].mxu0 %v3125
  %v3559 = vpop.f32.mrb[0].mxu0
  %v3560 = vadd.f32 %v3198, %v3559
  %v3561 = vpop.f32.mrb[0].mxu0
  %v3562 = vadd.f32 %v3202, %v3561
  %v3563 = vpop.f32.mrb[0].mxu0
  %v3564 = vpop.f32.mrb[0].mxu0
  %3565 = vdwg.mxu0
  %3566 = vmatprep.subr.bf16.mxu0 %v3430
  %3567 = vmatpush1.bf16.msra.mxu0 %v3429
  %3568 = vmatprep.subr.bf16.mxu0 %v3432
  %3569 = vmatpush1.bf16.msra.mxu0 %v3431
  %3570 = vmatprep.subr.bf16.mxu0 %v3434
  %3571 = vmatpush1.bf16.msra.mxu0 %v3433
  %3572 = vmatprep.subr.bf16.mxu0 %v3436
  %3573 = vmatpush1.bf16.msra.mxu0 %v3435
  %3574 = vmatprep.subr.bf16.mxu0 %v3438
  %3575 = vmatpush1.bf16.msra.mxu0 %v3437
  %3576 = vmatprep.subr.bf16.mxu0 %v3440
  %3577 = vmatpush1.bf16.msra.mxu0 %v3439
  %3578 = vmatprep.subr.bf16.mxu0 %v3442
  %3579 = vmatpush1.bf16.msra.mxu0 %v3441
  %3580 = vmatprep.subr.bf16.mxu0 %v3444
  %3581 = vmatpush1.bf16.msra.mxu0 %v3443
  %3582 = vmatprep.subr.bf16.mxu0 %v3446
  %3583 = vmatpush1.bf16.msra.mxu0 %v3445
  %3584 = vmatprep.subr.bf16.mxu0 %v3448
  %3585 = vmatpush1.bf16.msra.mxu0 %v3447
  %3586 = vmatprep.subr.bf16.mxu0 %v3450
  %3587 = vmatpush1.bf16.msra.mxu0 %v3449
  %3588 = vmatprep.subr.bf16.mxu0 %v3452
  %3589 = vmatpush1.bf16.msra.mxu0 %v3451
  %3590 = vmatprep.subr.bf16.mxu0 %v3454
  %3591 = vmatpush1.bf16.msra.mxu0 %v3453
  %3592 = vmatprep.subr.bf16.mxu0 %v3456
  %3593 = vmatpush1.bf16.msra.mxu0 %v3455
  %3594 = vmatprep.subr.bf16.mxu0 %v3458
  %3595 = vmatpush1.bf16.msra.mxu0 %v3457
  %3596 = vmatprep.subr.bf16.mxu0 %v3460
  %3597 = vmatpush1.bf16.msra.mxu0 %v3459
  %3598 = vmatprep.mubr.bf16.mxu0 %v3128
  %3599 = vmatmul.mubr.bf16.gmra.mrb[0].mxu0 %v3127
  %v3600 = vpop.f32.mrb[0].mxu0
  %v3601 = vadd.f32 %v3560, %v3600
  %v3602 = vpop.f32.mrb[0].mxu0
  %v3603 = vadd.f32 %v3562, %v3602
  %v3604 = vpop.f32.mrb[0].mxu0
  %v3605 = vpop.f32.mrb[0].mxu0
  %3606 = vdwg.mxu0
  %v3607 = vmax.f32 %v3601, 0.0
  %v3608 = vmax.f32 %v3603, 0.0
  %v3609 = vpack.c.bf16 %v3607, %v3607
  %v3610 = vpack.c.bf16 %v3608, %v3608
  %v3611 = vld [vmem:[%s9] sm:$0xf]
  %v3612 = vld [vmem:[%s9 + $0x4] sm:$0xf]
  %v3613 = vld [vmem:[%s9 + $0x8] sm:$0xf]
  %v3614 = vld [vmem:[%s9 + $0xc] sm:$0xf]
  %v3615 = vld [vmem:[%s9 + $0x10] sm:$0xf]
  %v3616 = vld [vmem:[%s9 + $0x14] sm:$0xf]
  %v3617 = vld [vmem:[%s9 + $0x18] sm:$0xf]
  %v3618 = vld [vmem:[%s9 + $0x1c] sm:$0xf]
  %v3619 = vld [vmem:[%s9 + $0x20] sm:$0xf]
  %v3620 = vld [vmem:[%s9 + $0x24] sm:$0xf]
  %v3621 = vld [vmem:[%s9 + $0x28] sm:$0xf]
  %v3622 = vld [vmem:[%s9 + $0x2c] sm:$0xf]
  %v3623 = vld [vmem:[%s9 + $0x30] sm:$0xf]
  %v3624 = vld [vmem:[%s9 + $0x34] sm:$0xf]
  %v3625 = vld [vmem:[%s9 + $0x38] sm:$0xf]
  %v3626 = vld [vmem:[%s9 + $0x3c] sm:$0xf]
  %v3627 = vld [vmem:[%s9 + $0x40] sm:$0xf]
  %v3628 = vld [vmem:[%s9 + $0x44] sm:$0xf]
  %v3629 = vld [vmem:[%s9 + $0x48] sm:$0xf]
  %v3630 = vld [vmem:[%s9 + $0x4c] sm:$0xf]
  %v3631 = vld [vmem:[%s9 + $0x50] sm:$0xf]
  %v3632 = vld [vmem:[%s9 + $0x54] sm:$0xf]
  %v3633 = vld [vmem:[%s9 + $0x58] sm:$0xf]
  %v3634 = vld [vmem:[%s9 + $0x5c] sm:$0xf]
  %v3635 = vld [vmem:[%s9 + $0x60] sm:$0xf]
  %v3636 = vld [vmem:[%s9 + $0x64] sm:$0xf]
  %v3637 = vld [vmem:[%s9 + $0x68] sm:$0xf]
  %v3638 = vld [vmem:[%s9 + $0x6c] sm:$0xf]
  %v3639 = vld [vmem:[%s9 + $0x70] sm:$0xf]
  %v3640 = vld [vmem:[%s9 + $0x74] sm:$0xf]
  %v3641 = vld [vmem:[%s9 + $0x78] sm:$0xf]
  %v3642 = vld [vmem:[%s9 + $0x7c] sm:$0xf]
  %v3643 = vld [vmem:[%s10] sm:$0x1]
  %v3645 = vlaneseq
  %v3646 = vshrl.u32 %v3645, 7
  %v3647 = vsub.s32 0, %v3646
  %v3648 = vrot.slane %v3643, %v3647
  %v3682 = vunpack.c.l.b16 %v3611
  %v3683 = vunpack.c.l.b16 %v3612
  %v3684 = vunpack.c.l.b16 %v3613
  %v3685 = vunpack.c.l.b16 %v3614
  %v3686 = vunpack.c.l.b16 %v3615
  %v3687 = vunpack.c.l.b16 %v3616
  %v3688 = vunpack.c.l.b16 %v3617
  %v3689 = vunpack.c.l.b16 %v3618
  %v3690 = vunpack.c.l.b16 %v3619
  %v3691 = vunpack.c.l.b16 %v3620
  %v3692 = vunpack.c.l.b16 %v3621
  %v3693 = vunpack.c.l.b16 %v3622
  %v3694 = vunpack.c.l.b16 %v3623
  %v3695 = vunpack.c.l.b16 %v3624
  %v3696 = vunpack.c.l.b16 %v3625
  %v3697 = vunpack.c.l.b16 %v3626
  %v3698 = vunpack.c.l.b16 %v3627
  %v3699 = vunpack.c.l.b16 %v3628
  %v3700 = vunpack.c.l.b16 %v3629
  %v3701 = vunpack.c.l.b16 %v3630
  %v3702 = vunpack.c.l.b16 %v3631
  %v3703 = vunpack.c.l.b16 %v3632
  %v3704 = vunpack.c.l.b16 %v3633
  %v3705 = vunpack.c.l.b16 %v3634
  %v3706 = vunpack.c.l.b16 %v3635
  %v3707 = vunpack.c.l.b16 %v3636
  %v3708 = vunpack.c.l.b16 %v3637
  %v3709 = vunpack.c.l.b16 %v3638
  %v3710 = vunpack.c.l.b16 %v3639
  %v3711 = vunpack.c.l.b16 %v3640
  %v3712 = vunpack.c.l.b16 %v3641
  %v3713 = vunpack.c.l.b16 %v3642
  %v3714 = vpack.c.b16 %v3683, %v3682
  %v3715 = vpack.c.b16 %v3685, %v3684
  %v3716 = vpack.c.b16 %v3687, %v3686
  %v3717 = vpack.c.b16 %v3689, %v3688
  %v3718 = vpack.c.b16 %v3691, %v3690
  %v3719 = vpack.c.b16 %v3693, %v3692
  %v3720 = vpack.c.b16 %v3695, %v3694
  %v3721 = vpack.c.b16 %v3697, %v3696
  %v3722 = vpack.c.b16 %v3699, %v3698
  %v3723 = vpack.c.b16 %v3701, %v3700
  %v3724 = vpack.c.b16 %v3703, %v3702
  %v3725 = vpack.c.b16 %v3705, %v3704
  %v3726 = vpack.c.b16 %v3707, %v3706
  %v3727 = vpack.c.b16 %v3709, %v3708
  %v3728 = vpack.c.b16 %v3711, %v3710
  %v3729 = vpack.c.b16 %v3713, %v3712
  %3746 = vmatprep.subr.bf16.mxu0 0
  %3747 = vmatpush1.bf16.msra.mxu0 %v3714
  %3748 = vmatprep.subr.bf16.mxu0 0
  %3749 = vmatpush1.bf16.msra.mxu0 %v3715
  %3750 = vmatprep.subr.bf16.mxu0 0
  %3751 = vmatpush1.bf16.msra.mxu0 %v3716
  %3752 = vmatprep.subr.bf16.mxu0 0
  %3753 = vmatpush1.bf16.msra.mxu0 %v3717
  %3754 = vmatprep.subr.bf16.mxu0 0
  %3755 = vmatpush1.bf16.msra.mxu0 %v3718
  %3756 = vmatprep.subr.bf16.mxu0 0
  %3757 = vmatpush1.bf16.msra.mxu0 %v3719
  %3758 = vmatprep.subr.bf16.mxu0 0
  %3759 = vmatpush1.bf16.msra.mxu0 %v3720
  %3760 = vmatprep.subr.bf16.mxu0 0
  %3761 = vmatpush1.bf16.msra.mxu0 %v3721
  %3762 = vmatprep.subr.bf16.mxu0 0
  %3763 = vmatpush1.bf16.msra.mxu0 %v3722
  %3764 = vmatprep.subr.bf16.mxu0 0
  %3765 = vmatpush1.bf16.msra.mxu0 %v3723
  %3766 = vmatprep.subr.bf16.mxu0 0
  %3767 = vmatpush1.bf16.msra.mxu0 %v3724
  %3768 = vmatprep.subr.bf16.mxu0 0
  %3769 = vmatpush1.bf16.msra.mxu0 %v3725
  %3770 = vmatprep.subr.bf16.mxu0 0
  %3771 = vmatpush1.bf16.msra.mxu0 %v3726
  %3772 = vmatprep.subr.bf16.mxu0 0
  %3773 = vmatpush1.bf16.msra.mxu0 %v3727
  %3774 = vmatprep.subr.bf16.mxu0 0
  %3775 = vmatpush1.bf16.msra.mxu0 %v3728
  %3776 = vmatprep.subr.bf16.mxu0 0
  %3777 = vmatpush1.bf16.msra.mxu0 %v3729
  %3778 = vmatprep.mubr.bf16.mxu0 %v3610
  %3779 = vmatmul.mubr.bf16.gmra.mrb[0].mxu0 %v3609
  %v3780 = vpop.f32.mrb[0].mxu0
  %v3781 = vadd.f32 %v3648, %v3780
  %v3782 = vpop.f32.mrb[0].mxu0
  %v3783 = vpop.f32.mrb[0].mxu0
  %v3784 = vpop.f32.mrb[0].mxu0
  %3785 = vdwg.mxu0
  %v3786 = vmul.f32 %v3781, %v3781
  %3787 = vadd.xlane.f32.xlu0 %v3786
  %v3788 = vpop.xlane.xlu0 %3787
  %v3789 = vmax.f32 %v3788, 1e-24
  %v3790 = vrsqrt.pop %v3789
  %v3791 = vmul.f32 %v3781, %v3790
  %3793 = vset.pattern.permute.xlu0 0
  %3794 = vperm.xlu0 %3793, %v3124
  %v3795 = vpop.permute.xlu0 %3794
  %3797 = vst [vmem:[%s11] sm:$0xff] %v3791
  %3798 = vst [vmem:[%s11 + $0x8] sm:$0xff] %v3795
  // Predicated region
  $region46: #{embedding_model_forward.1} parent=0 // pred_check
    _
  $region47: #{embedding_model_forward.1} parent=0 // pred_check_branch
    %3800 = sbr.rel (0) target = $region49
  $region48: #{embedding_model_forward.1} parent=0 // pred_region
    _
  $region49: #{embedding_model_forward.1} parent=0 // pred_fallthru
    _
  // Predicated region
  $region50: #{embedding_model_forward.1} parent=0 // pred_check
    _
  $region51: #{embedding_model_forward.1} parent=0 // pred_check_branch
    %3802 = sbr.rel (0) target = $region53
  $region52: #{embedding_model_forward.1} parent=0 // pred_region
    _
  $region53: #{embedding_model_forward.1} parent=0 // pred_fallthru
    _

</llo_original>
